<compile_context>
chip_gen: v5e
topology: v5e:2x2
jax: 0.10.0
libtpu: 0.0.40
codegen_flags: <defaults>
</compile_context>

<pallas_src>
import functools

import jax
import jax.numpy as jnp
from jax import lax
from jax.experimental import pallas as pl
from jax.experimental.pallas import tpu as pltpu

DILATIONS = (4, 8, 12)          # atrous_block4 / atrous_block8 / atrous_block12
_MAX_PAD = max(DILATIONS)       # SAME halo needed by the widest dilation


def _round_up(v, m):
    return (v + m - 1) // m * m


def _aspp_fused_kernel(x_ref, w_ref, b_ref, o_ref, xpad_ref, *,
                       dilations, pad, compute_dtype):
    """One batch element of the fully-fused ASPP.

    x_ref    : (1, H, W, Cin)        input tile (VMEM)
    w_ref    : (29*Cin, Cout)        folded weights (VMEM)
    b_ref    : (1, Cout)             folded bias, float32 (VMEM)
    o_ref    : (1, H, W, Cout)       output tile (VMEM)
    xpad_ref : (H+2p, W+2p, Cin)     zero-padded scratch (VMEM)
    """
    H, W, Cin = x_ref.shape[1], x_ref.shape[2], x_ref.shape[3]

    x = x_ref[0]                                            # (H, W, Cin)

    # In-kernel SAME padding shared by every dilated branch: zero the halo once,
    # write the interior (sublane-aligned since `pad` is rounded up to 8).
    xpad_ref[...] = jnp.zeros_like(xpad_ref)
    xpad_ref[pad:pad + H, pad:pad + W, :] = x.astype(xpad_ref.dtype)

    # Global-average-pool branch. Bilinear upsample of a 1x1 map with
    # align_corners=True is a pure broadcast, so the branch becomes one extra
    # "tap" in the big matmul: spatial SUM broadcast to every pixel (the 1/(H*W)
    # factor is folded into its weight rows on the host).
    gap = jnp.sum(x.astype(jnp.float32), axis=0, keepdims=True)
    gap = jnp.sum(gap, axis=1, keepdims=True)               # (1, 1, Cin)

    # im2col slab along the lane axis:
    #   [1x1 tap | 9 taps @ d=4 | 9 taps @ d=8 | 9 taps @ d=12 | gap]  -> K = 29*Cin
    patches = [x.astype(compute_dtype)]
    for d in dilations:
        for kh in range(3):
            for kw in range(3):
                r0 = pad + (kh - 1) * d
                c0 = pad + (kw - 1) * d
                patches.append(
                    xpad_ref[r0:r0 + H, c0:c0 + W, :].astype(compute_dtype))
    patches.append(jnp.broadcast_to(gap, (H, W, Cin)).astype(compute_dtype))
    slab = jnp.concatenate(patches, axis=-1)                # (H, W, 29*Cin)

    # Single MXU contraction for the whole module (branch convs + final 1x1 conv
    # all folded into w_ref). f32 accumulator, f32 epilogue.
    y = lax.dot_general(slab, w_ref[...],
                        dimension_numbers=(((2,), (0,)), ((), ())),
                        preferred_element_type=jnp.float32)  # (H, W, Cout)
    y = y + b_ref[0, :]
    o_ref[0] = y.astype(o_ref.dtype)


def _fold_params(params, hw):
    """Fold the final 1x1 conv and every branch bias into per-tap weights.

    Returns
      w_all : (29*Cin, Cout)  row blocks ordered exactly like the kernel's slab
      b_eff : (1, Cout)       total effective bias
    """
    Cout = params["b_out"].shape[0]
    hp = lax.Precision.HIGHEST
    mm = functools.partial(jnp.dot, precision=hp)

    w_out = params["w_out"]                                  # (5*Cout, Cout)
    # concat order in the PyTorch forward: [img, b1, b4, b8, b12]
    wo = [w_out[i * Cout:(i + 1) * Cout] for i in range(5)]

    rows = [mm(params["w_b1"], wo[1])]                       # 1x1 branch tap
    for name, w_o in (("w_b4", wo[2]), ("w_b8", wo[3]), ("w_b12", wo[4])):
        w = params[name]                                     # (3, 3, Cin, Cout)
        for kh in range(3):
            for kw in range(3):
                rows.append(mm(w[kh, kw], w_o))
    rows.append(mm(params["w_mean"], wo[0]) / hw)            # GAP tap (sum * 1/HW)
    w_all = jnp.concatenate(rows, axis=0)                    # (29*Cin, Cout)

    b_eff = (params["b_out"]
             + mm(params["b_mean"], wo[0]) + mm(params["b_b1"], wo[1])
             + mm(params["b_b4"], wo[2]) + mm(params["b_b8"], wo[3])
             + mm(params["b_b12"], wo[4]))
    return w_all, b_eff.reshape(1, Cout)


def aspp_forward(x_nchw, params, *, compute_dtype=jnp.float32):
    """ASPP forward. NCHW in / NCHW out, matching the PyTorch module."""
    x = jnp.transpose(x_nchw, (0, 2, 3, 1))                  # NCHW -> NHWC
    N, H, W, Cin = x.shape
    Cout = params["b_out"].shape[0]

    w_all, b_eff = _fold_params(params, float(H * W))
    K = w_all.shape[0]

    pad = _round_up(_MAX_PAD, 8)     # sublane-aligned interior write
    kernel = functools.partial(_aspp_fused_kernel, dilations=DILATIONS,
                               pad=pad, compute_dtype=compute_dtype)

    # TODO(synk): for large H/W, tile H with a +/-12-row halo (overlapping
    # index_map or manual make_async_copy) and add that axis as a second
    # "parallel" grid dim so v7x's 2 TensorCores stay busy and per-step VMEM
    # stays bounded; a full-image block is fine at these test sizes.
    out_nhwc = pl.pallas_call(
        kernel,
        out_shape=jax.ShapeDtypeStruct((N, H, W, Cout), x.dtype),
        grid_spec=pltpu.PrefetchScalarGridSpec(
            num_scalar_prefetch=0,
            grid=(N,),
            in_specs=[
                pl.BlockSpec((1, H, W, Cin), lambda n: (n, 0, 0, 0)),
                pl.BlockSpec((K, Cout), lambda n: (0, 0)),
                pl.BlockSpec((1, Cout), lambda n: (0, 0)),
            ],
            out_specs=pl.BlockSpec((1, H, W, Cout), lambda n: (n, 0, 0, 0)),
            scratch_shapes=[
                pltpu.VMEM((H + 2 * pad, W + 2 * pad, Cin), compute_dtype),
            ],
        ),
        compiler_params=pltpu.CompilerParams(
            dimension_semantics=("parallel",),
        ),
    )(x, w_all.astype(compute_dtype), b_eff.astype(jnp.float32))
    return jnp.transpose(out_nhwc, (0, 3, 1, 2))             # NHWC -> NCHW


def _reference_forward(x_nchw, params):
    """Literal pure-JAX ASPP (lax conv) for correctness checking."""
    hp = lax.Precision.HIGHEST
    x = jnp.transpose(x_nchw, (0, 2, 3, 1))
    N, H, W, _ = x.shape

    def conv1x1(inp, w, b):
        return jnp.einsum("nhwc,co->nhwo", inp, w, precision=hp) + b

    def atrous(inp, w, b, d):
        y = lax.conv_general_dilated(
            inp, w, window_strides=(1, 1), padding=((d, d), (d, d)),
            rhs_dilation=(d, d),
            dimension_numbers=("NHWC", "HWIO", "NHWC"), precision=hp)
        return y + b

    gap = jnp.mean(x, axis=(1, 2), keepdims=True)
    img = conv1x1(gap, params["w_mean"], params["b_mean"])
    img = jnp.broadcast_to(img, (N, H, W, img.shape[-1]))    # bilinear from 1x1 == broadcast
    b1 = conv1x1(x, params["w_b1"], params["b_b1"])
    b4 = atrous(x, params["w_b4"], params["b_b4"], 4)
    b8 = atrous(x, params["w_b8"], params["b_b8"], 8)
    b12 = atrous(x, params["w_b12"], params["b_b12"], 12)
    cat = jnp.concatenate([img, b1, b4, b8, b12], axis=-1)
    out = conv1x1(cat, params["w_out"], params["b_out"])
    return jnp.transpose(out, (0, 3, 1, 2))


def init_params(key, in_ch, out_ch):
    """Deterministic synthetic weights (Conv2d-style fan-in init), HWIO layout."""
    ks = jax.random.split(key, 12)

    def u(k, shape, fan_in):
        s = 1.0 / jnp.sqrt(float(fan_in))
        return jax.random.uniform(k, shape, jnp.float32, -s, s)

    return {
        "w_mean": u(ks[0], (in_ch, out_ch), in_ch),
        "b_mean": u(ks[1], (out_ch,), in_ch),
        "w_b1":   u(ks[2], (in_ch, out_ch), in_ch),
        "b_b1":   u(ks[3], (out_ch,), in_ch),
        "w_b4":   u(ks[4], (3, 3, in_ch, out_ch), in_ch * 9),
        "b_b4":   u(ks[5], (out_ch,), in_ch * 9),
        "w_b8":   u(ks[6], (3, 3, in_ch, out_ch), in_ch * 9),
        "b_b8":   u(ks[7], (out_ch,), in_ch * 9),
        "w_b12":  u(ks[8], (3, 3, in_ch, out_ch), in_ch * 9),
        "b_b12":  u(ks[9], (out_ch,), in_ch * 9),
        "w_out":  u(ks[10], (5 * out_ch, out_ch), 5 * out_ch),
        "b_out":  u(ks[11], (out_ch,), 5 * out_ch),
    }


if __name__ == "__main__":
    key = jax.random.PRNGKey(0)
    k_x, k_p = jax.random.split(key)

    N, Cin, Cout, H, W = 2, 4, 8, 16, 16
    x = jax.random.normal(k_x, (N, Cin, H, W), jnp.float32)   # NCHW like PyTorch
    params = init_params(k_p, Cin, Cout)

    # compute_dtype=jnp.bfloat16 is the recommended setting for v6e/v7x with
    # production channel counts; float32 here keeps the self-check tight.
    out = jax.block_until_ready(jax.jit(aspp_forward)(x, params))
    ref = jax.block_until_ready(_reference_forward(x, params))

    assert out.shape == (N, Cout, H, W), out.shape
    err = float(jnp.max(jnp.abs(out - ref)))
    assert jnp.allclose(out, ref, atol=1e-3, rtol=1e-3), f"mismatch vs reference, max abs err={err}"
    print("KERNEL_OK")
</pallas_src>

<mosaic_0001>
module attributes {stable_mosaic.version = 11 : i64} {
  func.func @_aspp_fused_kernel(%arg0: i32, %arg1: memref<1x16x16x4xf32, #tpu.memory_space<vmem>>, %arg2: memref<116x8xf32, #tpu.memory_space<vmem>>, %arg3: memref<1x8xf32, #tpu.memory_space<vmem>>, %arg4: memref<1x16x16x8xf32, #tpu.memory_space<vmem>>, %arg5: memref<48x48x4xf32, #tpu.memory_space<vmem>>) attributes {dimension_semantics = [#tpu.dimension_semantics<parallel>], iteration_bounds = array<i64: 2>, scalar_prefetch = 0 : i64, scratch_operands = 1 : i64, tpu.core_type = #tpu.core_type<tc>, window_params = [{transform_indices = @transform_0, window_bounds = array<i64: 1, 16, 16, 4>}, {pipeline_mode = #tpu.pipeline_mode<synchronous>, transform_indices = @transform_1, window_bounds = array<i64: 116, 8>}, {pipeline_mode = #tpu.pipeline_mode<synchronous>, transform_indices = @transform_2, window_bounds = array<i64: 1, 8>}, {transform_indices = @transform_3, window_bounds = array<i64: 1, 16, 16, 8>}]} {
    %c0 = arith.constant 0 : index
    %c0_0 = arith.constant 0 : index
    %c0_1 = arith.constant 0 : index
    %c0_2 = arith.constant 0 : index
    %0 = vector.load %arg1[%c0, %c0_0, %c0_1, %c0_2] : memref<1x16x16x4xf32, #tpu.memory_space<vmem>>, vector<1x16x16x4xf32>
    %1 = vector.shape_cast %0 : vector<1x16x16x4xf32> to vector<16x16x4xf32>
    %cst = arith.constant 0.000000e+00 : f32
    %2 = vector.broadcast %cst : f32 to vector<48x48x4xf32>
    %c0_3 = arith.constant 0 : index
    %c0_4 = arith.constant 0 : index
    %c0_5 = arith.constant 0 : index
    %3 = vector.load %arg5[%c0_3, %c0_4, %c0_5] : memref<48x48x4xf32, #tpu.memory_space<vmem>>, vector<48x48x4xf32>
    tpu.vector_store %arg5[%c0_3, %c0_4, %c0_5], %2 {strides = array<i32>} : memref<48x48x4xf32, #tpu.memory_space<vmem>>, vector<48x48x4xf32>,
    %c16 = arith.constant 16 : index
    %c16_6 = arith.constant 16 : index
    %c0_7 = arith.constant 0 : index
    %4 = vector.load %arg5[%c16, %c16_6, %c0_7] : memref<48x48x4xf32, #tpu.memory_space<vmem>>, vector<16x16x4xf32>
    tpu.vector_store %arg5[%c16, %c16_6, %c0_7], %1 {strides = array<i32>} : memref<48x48x4xf32, #tpu.memory_space<vmem>>, vector<16x16x4xf32>,
    %cst_8 = arith.constant dense<0.000000e+00> : vector<16x4xf32>
    %5 = vector.multi_reduction <add>, %1, %cst_8 [0] : vector<16x16x4xf32> to vector<16x4xf32>
    %6 = vector.shape_cast %5 : vector<16x4xf32> to vector<1x16x4xf32>
    %cst_9 = arith.constant dense<0.000000e+00> : vector<1x4xf32>
    %7 = vector.multi_reduction <add>, %6, %cst_9 [1] : vector<1x16x4xf32> to vector<1x4xf32>
    %8 = vector.shape_cast %7 : vector<1x4xf32> to vector<1x1x4xf32>
    %c12 = arith.constant 12 : index
    %c12_10 = arith.constant 12 : index
    %c0_11 = arith.constant 0 : index
    %9 = vector.load %arg5[%c12, %c12_10, %c0_11] : memref<48x48x4xf32, #tpu.memory_space<vmem>>, vector<16x16x4xf32>
    %c12_12 = arith.constant 12 : index
    %c16_13 = arith.constant 16 : index
    %c0_14 = arith.constant 0 : index
    %10 = vector.load %arg5[%c12_12, %c16_13, %c0_14] : memref<48x48x4xf32, #tpu.memory_space<vmem>>, vector<16x16x4xf32>
    %c12_15 = arith.constant 12 : index
    %c20 = arith.constant 20 : index
    %c0_16 = arith.constant 0 : index
    %11 = vector.load %arg5[%c12_15, %c20, %c0_16] : memref<48x48x4xf32, #tpu.memory_space<vmem>>, vector<16x16x4xf32>
    %c16_17 = arith.constant 16 : index
    %c12_18 = arith.constant 12 : index
    %c0_19 = arith.constant 0 : index
    %12 = vector.load %arg5[%c16_17, %c12_18, %c0_19] : memref<48x48x4xf32, #tpu.memory_space<vmem>>, vector<16x16x4xf32>
    %c16_20 = arith.constant 16 : index
    %c16_21 = arith.constant 16 : index
    %c0_22 = arith.constant 0 : index
    %13 = vector.load %arg5[%c16_20, %c16_21, %c0_22] : memref<48x48x4xf32, #tpu.memory_space<vmem>>, vector<16x16x4xf32>
    %c16_23 = arith.constant 16 : index
    %c20_24 = arith.constant 20 : index
    %c0_25 = arith.constant 0 : index
    %14 = vector.load %arg5[%c16_23, %c20_24, %c0_25] : memref<48x48x4xf32, #tpu.memory_space<vmem>>, vector<16x16x4xf32>
    %c20_26 = arith.constant 20 : index
    %c12_27 = arith.constant 12 : index
    %c0_28 = arith.constant 0 : index
    %15 = vector.load %arg5[%c20_26, %c12_27, %c0_28] : memref<48x48x4xf32, #tpu.memory_space<vmem>>, vector<16x16x4xf32>
    %c20_29 = arith.constant 20 : index
    %c16_30 = arith.constant 16 : index
    %c0_31 = arith.constant 0 : index
    %16 = vector.load %arg5[%c20_29, %c16_30, %c0_31] : memref<48x48x4xf32, #tpu.memory_space<vmem>>, vector<16x16x4xf32>
    %c20_32 = arith.constant 20 : index
    %c20_33 = arith.constant 20 : index
    %c0_34 = arith.constant 0 : index
    %17 = vector.load %arg5[%c20_32, %c20_33, %c0_34] : memref<48x48x4xf32, #tpu.memory_space<vmem>>, vector<16x16x4xf32>
    %c8 = arith.constant 8 : index
    %c8_35 = arith.constant 8 : index
    %c0_36 = arith.constant 0 : index
    %18 = vector.load %arg5[%c8, %c8_35, %c0_36] : memref<48x48x4xf32, #tpu.memory_space<vmem>>, vector<16x16x4xf32>
    %c8_37 = arith.constant 8 : index
    %c16_38 = arith.constant 16 : index
    %c0_39 = arith.constant 0 : index
    %19 = vector.load %arg5[%c8_37, %c16_38, %c0_39] : memref<48x48x4xf32, #tpu.memory_space<vmem>>, vector<16x16x4xf32>
    %c8_40 = arith.constant 8 : index
    %c24 = arith.constant 24 : index
    %c0_41 = arith.constant 0 : index
    %20 = vector.load %arg5[%c8_40, %c24, %c0_41] : memref<48x48x4xf32, #tpu.memory_space<vmem>>, vector<16x16x4xf32>
    %c16_42 = arith.constant 16 : index
    %c8_43 = arith.constant 8 : index
    %c0_44 = arith.constant 0 : index
    %21 = vector.load %arg5[%c16_42, %c8_43, %c0_44] : memref<48x48x4xf32, #tpu.memory_space<vmem>>, vector<16x16x4xf32>
    %c16_45 = arith.constant 16 : index
    %c16_46 = arith.constant 16 : index
    %c0_47 = arith.constant 0 : index
    %22 = vector.load %arg5[%c16_45, %c16_46, %c0_47] : memref<48x48x4xf32, #tpu.memory_space<vmem>>, vector<16x16x4xf32>
    %c16_48 = arith.constant 16 : index
    %c24_49 = arith.constant 24 : index
    %c0_50 = arith.constant 0 : index
    %23 = vector.load %arg5[%c16_48, %c24_49, %c0_50] : memref<48x48x4xf32, #tpu.memory_space<vmem>>, vector<16x16x4xf32>
    %c24_51 = arith.constant 24 : index
    %c8_52 = arith.constant 8 : index
    %c0_53 = arith.constant 0 : index
    %24 = vector.load %arg5[%c24_51, %c8_52, %c0_53] : memref<48x48x4xf32, #tpu.memory_space<vmem>>, vector<16x16x4xf32>
    %c24_54 = arith.constant 24 : index
    %c16_55 = arith.constant 16 : index
    %c0_56 = arith.constant 0 : index
    %25 = vector.load %arg5[%c24_54, %c16_55, %c0_56] : memref<48x48x4xf32, #tpu.memory_space<vmem>>, vector<16x16x4xf32>
    %c24_57 = arith.constant 24 : index
    %c24_58 = arith.constant 24 : index
    %c0_59 = arith.constant 0 : index
    %26 = vector.load %arg5[%c24_57, %c24_58, %c0_59] : memref<48x48x4xf32, #tpu.memory_space<vmem>>, vector<16x16x4xf32>
    %c4 = arith.constant 4 : index
    %c4_60 = arith.constant 4 : index
    %c0_61 = arith.constant 0 : index
    %27 = vector.load %arg5[%c4, %c4_60, %c0_61] : memref<48x48x4xf32, #tpu.memory_space<vmem>>, vector<16x16x4xf32>
    %c4_62 = arith.constant 4 : index
    %c16_63 = arith.constant 16 : index
    %c0_64 = arith.constant 0 : index
    %28 = vector.load %arg5[%c4_62, %c16_63, %c0_64] : memref<48x48x4xf32, #tpu.memory_space<vmem>>, vector<16x16x4xf32>
    %c4_65 = arith.constant 4 : index
    %c28 = arith.constant 28 : index
    %c0_66 = arith.constant 0 : index
    %29 = vector.load %arg5[%c4_65, %c28, %c0_66] : memref<48x48x4xf32, #tpu.memory_space<vmem>>, vector<16x16x4xf32>
    %c16_67 = arith.constant 16 : index
    %c4_68 = arith.constant 4 : index
    %c0_69 = arith.constant 0 : index
    %30 = vector.load %arg5[%c16_67, %c4_68, %c0_69] : memref<48x48x4xf32, #tpu.memory_space<vmem>>, vector<16x16x4xf32>
    %c16_70 = arith.constant 16 : index
    %c16_71 = arith.constant 16 : index
    %c0_72 = arith.constant 0 : index
    %31 = vector.load %arg5[%c16_70, %c16_71, %c0_72] : memref<48x48x4xf32, #tpu.memory_space<vmem>>, vector<16x16x4xf32>
    %c16_73 = arith.constant 16 : index
    %c28_74 = arith.constant 28 : index
    %c0_75 = arith.constant 0 : index
    %32 = vector.load %arg5[%c16_73, %c28_74, %c0_75] : memref<48x48x4xf32, #tpu.memory_space<vmem>>, vector<16x16x4xf32>
    %c28_76 = arith.constant 28 : index
    %c4_77 = arith.constant 4 : index
    %c0_78 = arith.constant 0 : index
    %33 = vector.load %arg5[%c28_76, %c4_77, %c0_78] : memref<48x48x4xf32, #tpu.memory_space<vmem>>, vector<16x16x4xf32>
    %c28_79 = arith.constant 28 : index
    %c16_80 = arith.constant 16 : index
    %c0_81 = arith.constant 0 : index
    %34 = vector.load %arg5[%c28_79, %c16_80, %c0_81] : memref<48x48x4xf32, #tpu.memory_space<vmem>>, vector<16x16x4xf32>
    %c28_82 = arith.constant 28 : index
    %c28_83 = arith.constant 28 : index
    %c0_84 = arith.constant 0 : index
    %35 = vector.load %arg5[%c28_82, %c28_83, %c0_84] : memref<48x48x4xf32, #tpu.memory_space<vmem>>, vector<16x16x4xf32>
    %36 = vector.shape_cast %8 : vector<1x1x4xf32> to vector<1x1x4xf32>
    %37 = vector.broadcast %36 : vector<1x1x4xf32> to vector<16x16x4xf32>
    %38 = tpu.concatenate %1, %9, %10, %11, %12, %13, %14, %15, %16, %17, %18, %19, %20, %21, %22, %23 in 2 : vector<16x16x4xf32>, vector<16x16x4xf32>, vector<16x16x4xf32>, vector<16x16x4xf32>, vector<16x16x4xf32>, vector<16x16x4xf32>, vector<16x16x4xf32>, vector<16x16x4xf32>, vector<16x16x4xf32>, vector<16x16x4xf32>, vector<16x16x4xf32>, vector<16x16x4xf32>, vector<16x16x4xf32>, vector<16x16x4xf32>, vector<16x16x4xf32>, vector<16x16x4xf32> -> vector<16x16x64xf32>
    %39 = tpu.concatenate %24, %25, %26, %27, %28, %29, %30, %31, %32, %33, %34, %35, %37 in 2 : vector<16x16x4xf32>, vector<16x16x4xf32>, vector<16x16x4xf32>, vector<16x16x4xf32>, vector<16x16x4xf32>, vector<16x16x4xf32>, vector<16x16x4xf32>, vector<16x16x4xf32>, vector<16x16x4xf32>, vector<16x16x4xf32>, vector<16x16x4xf32>, vector<16x16x4xf32>, vector<16x16x4xf32> -> vector<16x16x52xf32>
    %40 = tpu.concatenate %38, %39 in 2 : vector<16x16x64xf32>, vector<16x16x52xf32> -> vector<16x16x116xf32>
    %c0_85 = arith.constant 0 : index
    %c0_86 = arith.constant 0 : index
    %41 = vector.load %arg2[%c0_85, %c0_86] : memref<116x8xf32, #tpu.memory_space<vmem>>, vector<116x8xf32>
    %cst_87 = arith.constant dense<0.000000e+00> : vector<16x16x8xf32>
    %42 = tpu.matmul %40, %41, %cst_87 {dimension_numbers = #tpu.dot_dimension_numbers<[2], [0], [0, 1], [1], [0, 0, 0, 1, 1, 1], [], []>} : vector<16x16x116xf32>, vector<116x8xf32>, vector<16x16x8xf32> -> vector<16x16x8xf32>
    %c0_88 = arith.constant 0 : index
    %c0_89 = arith.constant 0 : index
    %43 = vector.load %arg3[%c0_88, %c0_89] : memref<1x8xf32, #tpu.memory_space<vmem>>, vector<1x8xf32>
    %44 = vector.shape_cast %43 : vector<1x8xf32> to vector<8xf32>
    %45 = vector.shape_cast %44 : vector<8xf32> to vector<1x1x8xf32>
    %46 = vector.broadcast %45 : vector<1x1x8xf32> to vector<16x16x8xf32>
    %47 = arith.addf %42, %46 : vector<16x16x8xf32>
    %c0_90 = arith.constant 0 : index
    %c0_91 = arith.constant 0 : index
    %c0_92 = arith.constant 0 : index
    %c0_93 = arith.constant 0 : index
    %48 = vector.load %arg4[%c0_90, %c0_91, %c0_92, %c0_93] : memref<1x16x16x8xf32, #tpu.memory_space<vmem>>, vector<1x16x16x8xf32>
    %49 = vector.shape_cast %48 : vector<1x16x16x8xf32> to vector<16x16x8xf32>
    %50 = vector.shape_cast %47 : vector<16x16x8xf32> to vector<1x16x16x8xf32>
    tpu.vector_store %arg4[%c0_90, %c0_91, %c0_92, %c0_93], %50 {strides = array<i32>} : memref<1x16x16x8xf32, #tpu.memory_space<vmem>>, vector<1x16x16x8xf32>,
    return
  }
  func.func @transform_0(%arg0: i32) -> (i32, i32, i32, i32) {
    %c0_i32 = arith.constant 0 : i32
    %c0_i32_0 = arith.constant 0 : i32
    %c0_i32_1 = arith.constant 0 : i32
    %c0_i32_2 = arith.constant 0 : i32
    return %arg0, %c0_i32, %c0_i32_0, %c0_i32_1 : i32, i32, i32, i32
  }
  func.func @transform_1(%arg0: i32) -> (i32, i32) {
    %c0_i32 = arith.constant 0 : i32
    %c0_i32_0 = arith.constant 0 : i32
    %c0_i32_1 = arith.constant 0 : i32
    return %c0_i32, %c0_i32_0 : i32, i32
  }
  func.func @transform_2(%arg0: i32) -> (i32, i32) {
    %c0_i32 = arith.constant 0 : i32
    %c0_i32_0 = arith.constant 0 : i32
    %c0_i32_1 = arith.constant 0 : i32
    return %c0_i32, %c0_i32_0 : i32, i32
  }
  func.func @transform_3(%arg0: i32) -> (i32, i32, i32, i32) {
    %c0_i32 = arith.constant 0 : i32
    %c0_i32_0 = arith.constant 0 : i32
    %c0_i32_1 = arith.constant 0 : i32
    %c0_i32_2 = arith.constant 0 : i32
    return %arg0, %c0_i32, %c0_i32_0, %c0_i32_1 : i32, i32, i32, i32
  }
}

</mosaic_0001>

<llo_original>
// kernel: aspp_forward.1
$region0: #{aspp_forward.1}
  #allocation0 [shape = 'u32[]', space=smem, size = 0x4, offset = 0x4, fixed_abs, tag = 'smem constant byte address 0x4 - core index']
  #allocation1 [shape = 'u32[72,128]{1,0:T(1,128)}', space=vmem, size = 0x9000, scoped, tag = 'internal scratch']
  #allocation2 [shape = 'f32[48,48,4]{2,1,0:T(8,128)}', space=vmem, size = 0x120000, scoped, tag = 'scratch operand']
  %s0 = inlined_call_operand.vmem [shape: f32[2,16,16,4], index: 0, kind: input, shape index: {}]
  %s1 = inlined_call_operand.vmem [shape: f32[116,8], index: 1, kind: input, shape index: {}]
  %s2 = inlined_call_operand.vmem [shape: f32[1,8], index: 2, kind: input, shape index: {}]
  %s3 = inlined_call_operand.vmem [shape: f32[2,16,16,8], index: 3, kind: output, shape index: {}]
  %s4 = sld [smem:[#allocation0]]
  $region45: #{aspp_forward.1} parent=0
    _
  %s6 = ssub.s32 1, %s4
  %s7 = scalar_select 0, %s6, %s4
  loop: start=0, step=1, limit=4
  $region2: #{aspp_forward.1} parent=0 // loop_pre_header
    _
  $region3: #{aspp_forward.1} parent=0 // loop_header
    %s9 = sphi 0, %s13
    %p10 = scmp.ge.s32.totalorder %s9, 4
    %s19 = sphi 0, %s21
    %s22 = sphi 0, %s19
    %s23 = sphi 0, %s22
    %s39 = sphi 0, %s23
    %s43 = sphi 0, %s43
    %s45 = sphi 0, %s43
    %s46 = sphi 0, %s45
    %s60 = sphi 0, %s46
    %s64 = sphi 0, %s64
    %s66 = sphi 0, %s64
    %s67 = sphi 0, %s66
    %s81 = sphi 0, %s67
    %s87 = sphi 0, %s89
    %s90 = sphi 0, %s87
    %s91 = sphi 0, %s90
    %s107 = sphi 0, %s91
  $region4: #{aspp_forward.1} parent=0 // loop_header_branch
    %12 = sbr.rel (%p10) target = $region8
  $region5: #{aspp_forward.1} parent=0 // loop_body
    %s14 = ssub.s32 %s9, 1
    %s15 = ssub.s32 %s9, 2
    %s16 = sadd.s32 %s9, 1
    %s17 = ssub.s32 %s9, %s16
    %p18 = scmp.eq.s32.totalorder %s17, 0
    %s20 = sadd.s32 %s19, 1
    %s21 = scalar_select %p18, %s19, %s20
    %p24 = pneg %p18
    %p25 = scmp.eq.s32.totalorder %s9, 1
    %p26 = por %p24, %p25
    %p27 = scmp.ne.s32.totalorder %s19, %s22
    %p28 = scmp.eq.s32.totalorder %s9, 0
    %p29 = por %p27, %p28
    %p30 = scmp.ne.s32.totalorder %s19, %s22
    %p31 = scmp.eq.s32.totalorder %s14, 1
    %p32 = por %p30, %p31
    %p33 = scmp.ne.s32.totalorder %s22, %s23
    %p34 = scmp.eq.s32.totalorder %s14, 0
    %p35 = por %p33, %p34
    %p36 = scmp.ne.s32.totalorder %s22, %s23
    %p37 = scmp.eq.s32.totalorder %s15, 1
    %p38 = por %p36, %p37
    %p40 = scmp.ne.s32.totalorder %s23, %s39
    %p41 = scmp.eq.s32.totalorder %s15, 0
    %p42 = por %p40, %p41
    %s44 = sadd.s32 %s43, 1
    %p47 = scmp.eq.s32.totalorder %s9, 1
    %p48 = scmp.ne.s32.totalorder %s43, %s45
    %p49 = scmp.eq.s32.totalorder %s9, 0
    %p50 = por %p48, %p49
    %p51 = scmp.ne.s32.totalorder %s43, %s45
    %p52 = scmp.eq.s32.totalorder %s14, 1
    %p53 = por %p51, %p52
    %p54 = scmp.ne.s32.totalorder %s45, %s46
    %p55 = scmp.eq.s32.totalorder %s14, 0
    %p56 = por %p54, %p55
    %p57 = scmp.ne.s32.totalorder %s45, %s46
    %p58 = scmp.eq.s32.totalorder %s15, 1
    %p59 = por %p57, %p58
    %p61 = scmp.ne.s32.totalorder %s46, %s60
    %p62 = scmp.eq.s32.totalorder %s15, 0
    %p63 = por %p61, %p62
    %s65 = sadd.s32 %s64, 1
    %p68 = scmp.eq.s32.totalorder %s9, 1
    %p69 = scmp.ne.s32.totalorder %s64, %s66
    %p70 = scmp.eq.s32.totalorder %s9, 0
    %p71 = por %p69, %p70
    %p72 = scmp.ne.s32.totalorder %s64, %s66
    %p73 = scmp.eq.s32.totalorder %s14, 1
    %p74 = por %p72, %p73
    %p75 = scmp.ne.s32.totalorder %s66, %s67
    %p76 = scmp.eq.s32.totalorder %s14, 0
    %p77 = por %p75, %p76
    %p78 = scmp.ne.s32.totalorder %s66, %s67
    %p79 = scmp.eq.s32.totalorder %s15, 1
    %p80 = por %p78, %p79
    %p82 = scmp.ne.s32.totalorder %s67, %s81
    %p83 = scmp.eq.s32.totalorder %s15, 0
    %p84 = por %p82, %p83
    %s85 = ssub.s32 %s9, %s16
    %p86 = scmp.eq.s32.totalorder %s85, 0
    %s88 = sadd.s32 %s87, 1
    %s89 = scalar_select %p86, %s87, %s88
    %p92 = pneg %p86
    %p93 = scmp.eq.s32.totalorder %s9, 1
    %p94 = por %p92, %p93
    %p95 = scmp.ne.s32.totalorder %s87, %s90
    %p96 = scmp.eq.s32.totalorder %s9, 0
    %p97 = por %p95, %p96
    %p98 = scmp.ne.s32.totalorder %s87, %s90
    %p99 = scmp.eq.s32.totalorder %s14, 1
    %p100 = por %p98, %p99
    %p101 = scmp.ne.s32.totalorder %s90, %s91
    %p102 = scmp.eq.s32.totalorder %s14, 0
    %p103 = por %p101, %p102
    %p104 = scmp.ne.s32.totalorder %s90, %s91
    %p105 = scmp.eq.s32.totalorder %s15, 1
    %p106 = por %p104, %p105
    %p108 = scmp.ne.s32.totalorder %s91, %s107
    %p109 = scmp.eq.s32.totalorder %s15, 0
    %p110 = por %p108, %p109
    %p111 = scmp.le.s32.totalorder 1, %s9
    %p112 = scmp.lt.s32.totalorder %s9, 3
    %p113 = pnand %p111, %p112
    %p114 = pneg %p113
    // Predicated region
    $region9: #{aspp_forward.1} parent=5 // pred_check
      _
    $region10: #{aspp_forward.1} parent=5 // pred_check_branch
      %116 = sbr.rel (%p113) target = $region12
    $region11: #{aspp_forward.1} parent=5 // pred_region
      %s117 = ssub.s32 %s9, 1
      // Predicated region
      $region13: #{aspp_forward.1} parent=11 // pred_check
        %p118 = pneg %p56
      $region14: #{aspp_forward.1} parent=11 // pred_check_branch
        %120 = sbr.rel (%p118) target = $region16
      $region15: #{aspp_forward.1} parent=11 // pred_region
        _
      $region16: #{aspp_forward.1} parent=11 // pred_fallthru
        _
      // Predicated region
      $region17: #{aspp_forward.1} parent=11 // pred_check
        %p121 = pneg %p77
      $region18: #{aspp_forward.1} parent=11 // pred_check_branch
        %123 = sbr.rel (%p121) target = $region20
      $region19: #{aspp_forward.1} parent=11 // pred_region
        _
      $region20: #{aspp_forward.1} parent=11 // pred_fallthru
        _
    $region12: #{aspp_forward.1} parent=5 // pred_fallthru
      _
    %p124 = scmp.lt.s32.totalorder %s9, 2
    // Predicated region
    $region21: #{aspp_forward.1} parent=5 // pred_check
      %p125 = pneg %p124
    $region22: #{aspp_forward.1} parent=5 // pred_check_branch
      %127 = sbr.rel (%p125) target = $region24
    $region23: #{aspp_forward.1} parent=5 // pred_region
      // Predicated region
      $region25: #{aspp_forward.1} parent=23 // pred_check
        %p128 = pneg %p29
      $region26: #{aspp_forward.1} parent=23 // pred_check_branch
        %130 = sbr.rel (%p128) target = $region28
      $region27: #{aspp_forward.1} parent=23 // pred_region
        %p131 = scmp.lt.s32.totalorder %s9, 1
        %s132 = scalar_select %p131, %s9, 1
        %s133 = smul.addr %s132, 32
        %s134 = smul.addr %s133, 8
        %s135 = scalar_lea.vmem %s0, %s134
      $region28: #{aspp_forward.1} parent=23 // pred_fallthru
        _
    $region24: #{aspp_forward.1} parent=5 // pred_fallthru
      _
    %p136 = scmp.le.s32.totalorder 1, %s9
    %p137 = scmp.lt.s32.totalorder %s9, 3
    %p138 = pnand %p136, %p137
    %p139 = pneg %p138
    // Predicated region
    $region29: #{aspp_forward.1} parent=5 // pred_check
      _
    $region30: #{aspp_forward.1} parent=5 // pred_check_branch
      %141 = sbr.rel (%p138) target = $region32
    $region31: #{aspp_forward.1} parent=5 // pred_region
      %s142 = ssub.s32 %s9, 1
      %p143 = scmp.lt.s32.totalorder %s14, 1
      %s144 = scalar_select %p143, %s14, 1
      %s145 = smul.addr %s144, 32
      %s146 = smul.addr %s145, 8
      %s147 = scalar_lea.vmem %s0, %s146
      %p148 = pneg %p35
      %p149 = pneg %p32
      %p150 = pneg %p56
      %p151 = pneg %p53
      %p152 = pneg %p77
      %p153 = pneg %p74
      %p154 = pneg %p103
      %p155 = pneg %p100
      %p156 = scmp.lt.s32.totalorder %s14, 1
      %s157 = scalar_select %p156, %s14, 1
      %s158 = smul.addr %s157, 32
      %s159 = smul.addr %s158, 8
      %s160 = scalar_lea.vmem %s3, %s159
      %p161 = scmp.lt.s32.totalorder %s14, 1
      %s162 = scalar_select %p161, %s14, 1
      %s163 = smul.addr %s162, 32
      %s164 = smul.addr %s163, 8
      %s165 = scalar_lea.vmem %s0, %s164
      %p166 = scmp.lt.s32.totalorder %s14, 1
      %s167 = scalar_select %p166, %s14, 1
      %s168 = smul.addr %s167, 32
      %s169 = smul.addr %s168, 8
      %s170 = scalar_lea.vmem %s3, %s169
      %v171 = vld [vmem:[%s165] sm:$0xff]
      %v172 = vld [vmem:[%s165 + $0x8] sm:$0xff]
      %v173 = vld [vmem:[%s165 + $0x10] sm:$0xff]
      %v174 = vld [vmem:[%s165 + $0x18] sm:$0xff]
      %v175 = vld [vmem:[%s165 + $0x20] sm:$0xff]
      %v176 = vld [vmem:[%s165 + $0x28] sm:$0xff]
      %v177 = vld [vmem:[%s165 + $0x30] sm:$0xff]
      %v178 = vld [vmem:[%s165 + $0x38] sm:$0xff]
      %v179 = vld [vmem:[%s165 + $0x40] sm:$0xff]
      %v180 = vld [vmem:[%s165 + $0x48] sm:$0xff]
      %v181 = vld [vmem:[%s165 + $0x50] sm:$0xff]
      %v182 = vld [vmem:[%s165 + $0x58] sm:$0xff]
      %v183 = vld [vmem:[%s165 + $0x60] sm:$0xff]
      %v184 = vld [vmem:[%s165 + $0x68] sm:$0xff]
      %v185 = vld [vmem:[%s165 + $0x70] sm:$0xff]
      %v186 = vld [vmem:[%s165 + $0x78] sm:$0xff]
      %v187 = vld [vmem:[%s165 + $0x80] sm:$0xff]
      %v188 = vld [vmem:[%s165 + $0x88] sm:$0xff]
      %v189 = vld [vmem:[%s165 + $0x90] sm:$0xff]
      %v190 = vld [vmem:[%s165 + $0x98] sm:$0xff]
      %v191 = vld [vmem:[%s165 + $0xa0] sm:$0xff]
      %v192 = vld [vmem:[%s165 + $0xa8] sm:$0xff]
      %v193 = vld [vmem:[%s165 + $0xb0] sm:$0xff]
      %v194 = vld [vmem:[%s165 + $0xb8] sm:$0xff]
      %v195 = vld [vmem:[%s165 + $0xc0] sm:$0xff]
      %v196 = vld [vmem:[%s165 + $0xc8] sm:$0xff]
      %v197 = vld [vmem:[%s165 + $0xd0] sm:$0xff]
      %v198 = vld [vmem:[%s165 + $0xd8] sm:$0xff]
      %v199 = vld [vmem:[%s165 + $0xe0] sm:$0xff]
      %v200 = vld [vmem:[%s165 + $0xe8] sm:$0xff]
      %v201 = vld [vmem:[%s165 + $0xf0] sm:$0xff]
      %v202 = vld [vmem:[%s165 + $0xf8] sm:$0xff]
      %vm203 = vcmask 31744
      %204 = vst.msk [vmem:[#allocation2] sm:$0xff] %vm203, 0.0
      %205 = vst.msk [vmem:[#allocation2 + $0x8] sm:$0xff] %vm203, 0.0
      %206 = vst.msk [vmem:[#allocation2 + $0x10] sm:$0xff] %vm203, 0.0
      %207 = vst.msk [vmem:[#allocation2 + $0x18] sm:$0xff] %vm203, 0.0
      %208 = vst.msk [vmem:[#allocation2 + $0x20] sm:$0xff] %vm203, 0.0
      %209 = vst.msk [vmem:[#allocation2 + $0x28] sm:$0xff] %vm203, 0.0
      %210 = vst.msk [vmem:[#allocation2 + $0x30] sm:$0xff] %vm203, 0.0
      %211 = vst.msk [vmem:[#allocation2 + $0x38] sm:$0xff] %vm203, 0.0
      %212 = vst.msk [vmem:[#allocation2 + $0x40] sm:$0xff] %vm203, 0.0
      %213 = vst.msk [vmem:[#allocation2 + $0x48] sm:$0xff] %vm203, 0.0
      %214 = vst.msk [vmem:[#allocation2 + $0x50] sm:$0xff] %vm203, 0.0
      %215 = vst.msk [vmem:[#allocation2 + $0x58] sm:$0xff] %vm203, 0.0
      %216 = vst.msk [vmem:[#allocation2 + $0x60] sm:$0xff] %vm203, 0.0
      %217 = vst.msk [vmem:[#allocation2 + $0x68] sm:$0xff] %vm203, 0.0
      %218 = vst.msk [vmem:[#allocation2 + $0x70] sm:$0xff] %vm203, 0.0
      %219 = vst.msk [vmem:[#allocation2 + $0x78] sm:$0xff] %vm203, 0.0
      %220 = vst.msk [vmem:[#allocation2 + $0x80] sm:$0xff] %vm203, 0.0
      %221 = vst.msk [vmem:[#allocation2 + $0x88] sm:$0xff] %vm203, 0.0
      %222 = vst.msk [vmem:[#allocation2 + $0x90] sm:$0xff] %vm203, 0.0
      %223 = vst.msk [vmem:[#allocation2 + $0x98] sm:$0xff] %vm203, 0.0
      %224 = vst.msk [vmem:[#allocation2 + $0xa0] sm:$0xff] %vm203, 0.0
      %225 = vst.msk [vmem:[#allocation2 + $0xa8] sm:$0xff] %vm203, 0.0
      %226 = vst.msk [vmem:[#allocation2 + $0xb0] sm:$0xff] %vm203, 0.0
      %227 = vst.msk [vmem:[#allocation2 + $0xb8] sm:$0xff] %vm203, 0.0
      %228 = vst.msk [vmem:[#allocation2 + $0xc0] sm:$0xff] %vm203, 0.0
      %229 = vst.msk [vmem:[#allocation2 + $0xc8] sm:$0xff] %vm203, 0.0
      %230 = vst.msk [vmem:[#allocation2 + $0xd0] sm:$0xff] %vm203, 0.0
      %231 = vst.msk [vmem:[#allocation2 + $0xd8] sm:$0xff] %vm203, 0.0
      %232 = vst.msk [vmem:[#allocation2 + $0xe0] sm:$0xff] %vm203, 0.0
      %233 = vst.msk [vmem:[#allocation2 + $0xe8] sm:$0xff] %vm203, 0.0
      %234 = vst.msk [vmem:[#allocation2 + $0xf0] sm:$0xff] %vm203, 0.0
      %235 = vst.msk [vmem:[#allocation2 + $0xf8] sm:$0xff] %vm203, 0.0
      %236 = vst.msk [vmem:[#allocation2 + $0x100] sm:$0xff] %vm203, 0.0
      %237 = vst.msk [vmem:[#allocation2 + $0x108] sm:$0xff] %vm203, 0.0
      %238 = vst.msk [vmem:[#allocation2 + $0x110] sm:$0xff] %vm203, 0.0
      %239 = vst.msk [vmem:[#allocation2 + $0x118] sm:$0xff] %vm203, 0.0
      %240 = vst.msk [vmem:[#allocation2 + $0x120] sm:$0xff] %vm203, 0.0
      %241 = vst.msk [vmem:[#allocation2 + $0x128] sm:$0xff] %vm203, 0.0
      %242 = vst.msk [vmem:[#allocation2 + $0x130] sm:$0xff] %vm203, 0.0
      %243 = vst.msk [vmem:[#allocation2 + $0x138] sm:$0xff] %vm203, 0.0
      %244 = vst.msk [vmem:[#allocation2 + $0x140] sm:$0xff] %vm203, 0.0
      %245 = vst.msk [vmem:[#allocation2 + $0x148] sm:$0xff] %vm203, 0.0
      %246 = vst.msk [vmem:[#allocation2 + $0x150] sm:$0xff] %vm203, 0.0
      %247 = vst.msk [vmem:[#allocation2 + $0x158] sm:$0xff] %vm203, 0.0
      %248 = vst.msk [vmem:[#allocation2 + $0x160] sm:$0xff] %vm203, 0.0
      %249 = vst.msk [vmem:[#allocation2 + $0x168] sm:$0xff] %vm203, 0.0
      %250 = vst.msk [vmem:[#allocation2 + $0x170] sm:$0xff] %vm203, 0.0
      %251 = vst.msk [vmem:[#allocation2 + $0x178] sm:$0xff] %vm203, 0.0
      %252 = vst.msk [vmem:[#allocation2 + $0x180] sm:$0xff] %vm203, 0.0
      %253 = vst.msk [vmem:[#allocation2 + $0x188] sm:$0xff] %vm203, 0.0
      %254 = vst.msk [vmem:[#allocation2 + $0x190] sm:$0xff] %vm203, 0.0
      %255 = vst.msk [vmem:[#allocation2 + $0x198] sm:$0xff] %vm203, 0.0
      %256 = vst.msk [vmem:[#allocation2 + $0x1a0] sm:$0xff] %vm203, 0.0
      %257 = vst.msk [vmem:[#allocation2 + $0x1a8] sm:$0xff] %vm203, 0.0
      %258 = vst.msk [vmem:[#allocation2 + $0x1b0] sm:$0xff] %vm203, 0.0
      %259 = vst.msk [vmem:[#allocation2 + $0x1b8] sm:$0xff] %vm203, 0.0
      %260 = vst.msk [vmem:[#allocation2 + $0x1c0] sm:$0xff] %vm203, 0.0
      %261 = vst.msk [vmem:[#allocation2 + $0x1c8] sm:$0xff] %vm203, 0.0
      %262 = vst.msk [vmem:[#allocation2 + $0x1d0] sm:$0xff] %vm203, 0.0
      %263 = vst.msk [vmem:[#allocation2 + $0x1d8] sm:$0xff] %vm203, 0.0
      %264 = vst.msk [vmem:[#allocation2 + $0x1e0] sm:$0xff] %vm203, 0.0
      %265 = vst.msk [vmem:[#allocation2 + $0x1e8] sm:$0xff] %vm203, 0.0
      %266 = vst.msk [vmem:[#allocation2 + $0x1f0] sm:$0xff] %vm203, 0.0
      %267 = vst.msk [vmem:[#allocation2 + $0x1f8] sm:$0xff] %vm203, 0.0
      %268 = vst.msk [vmem:[#allocation2 + $0x200] sm:$0xff] %vm203, 0.0
      %269 = vst.msk [vmem:[#allocation2 + $0x208] sm:$0xff] %vm203, 0.0
      %270 = vst.msk [vmem:[#allocation2 + $0x210] sm:$0xff] %vm203, 0.0
      %271 = vst.msk [vmem:[#allocation2 + $0x218] sm:$0xff] %vm203, 0.0
      %272 = vst.msk [vmem:[#allocation2 + $0x220] sm:$0xff] %vm203, 0.0
      %273 = vst.msk [vmem:[#allocation2 + $0x228] sm:$0xff] %vm203, 0.0
      %274 = vst.msk [vmem:[#allocation2 + $0x230] sm:$0xff] %vm203, 0.0
      %275 = vst.msk [vmem:[#allocation2 + $0x238] sm:$0xff] %vm203, 0.0
      %276 = vst.msk [vmem:[#allocation2 + $0x240] sm:$0xff] %vm203, 0.0
      %277 = vst.msk [vmem:[#allocation2 + $0x248] sm:$0xff] %vm203, 0.0
      %278 = vst.msk [vmem:[#allocation2 + $0x250] sm:$0xff] %vm203, 0.0
      %279 = vst.msk [vmem:[#allocation2 + $0x258] sm:$0xff] %vm203, 0.0
      %280 = vst.msk [vmem:[#allocation2 + $0x260] sm:$0xff] %vm203, 0.0
      %281 = vst.msk [vmem:[#allocation2 + $0x268] sm:$0xff] %vm203, 0.0
      %282 = vst.msk [vmem:[#allocation2 + $0x270] sm:$0xff] %vm203, 0.0
      %283 = vst.msk [vmem:[#allocation2 + $0x278] sm:$0xff] %vm203, 0.0
      %284 = vst.msk [vmem:[#allocation2 + $0x280] sm:$0xff] %vm203, 0.0
      %285 = vst.msk [vmem:[#allocation2 + $0x288] sm:$0xff] %vm203, 0.0
      %286 = vst.msk [vmem:[#allocation2 + $0x290] sm:$0xff] %vm203, 0.0
      %287 = vst.msk [vmem:[#allocation2 + $0x298] sm:$0xff] %vm203, 0.0
      %288 = vst.msk [vmem:[#allocation2 + $0x2a0] sm:$0xff] %vm203, 0.0
      %289 = vst.msk [vmem:[#allocation2 + $0x2a8] sm:$0xff] %vm203, 0.0
      %290 = vst.msk [vmem:[#allocation2 + $0x2b0] sm:$0xff] %vm203, 0.0
      %291 = vst.msk [vmem:[#allocation2 + $0x2b8] sm:$0xff] %vm203, 0.0
      %292 = vst.msk [vmem:[#allocation2 + $0x2c0] sm:$0xff] %vm203, 0.0
      %293 = vst.msk [vmem:[#allocation2 + $0x2c8] sm:$0xff] %vm203, 0.0
      %294 = vst.msk [vmem:[#allocation2 + $0x2d0] sm:$0xff] %vm203, 0.0
      %295 = vst.msk [vmem:[#allocation2 + $0x2d8] sm:$0xff] %vm203, 0.0
      %296 = vst.msk [vmem:[#allocation2 + $0x2e0] sm:$0xff] %vm203, 0.0
      %297 = vst.msk [vmem:[#allocation2 + $0x2e8] sm:$0xff] %vm203, 0.0
      %298 = vst.msk [vmem:[#allocation2 + $0x2f0] sm:$0xff] %vm203, 0.0
      %299 = vst.msk [vmem:[#allocation2 + $0x2f8] sm:$0xff] %vm203, 0.0
      %300 = vst.msk [vmem:[#allocation2 + $0x300] sm:$0xff] %vm203, 0.0
      %301 = vst.msk [vmem:[#allocation2 + $0x308] sm:$0xff] %vm203, 0.0
      %302 = vst.msk [vmem:[#allocation2 + $0x310] sm:$0xff] %vm203, 0.0
      %303 = vst.msk [vmem:[#allocation2 + $0x318] sm:$0xff] %vm203, 0.0
      %304 = vst.msk [vmem:[#allocation2 + $0x320] sm:$0xff] %vm203, 0.0
      %305 = vst.msk [vmem:[#allocation2 + $0x328] sm:$0xff] %vm203, 0.0
      %306 = vst.msk [vmem:[#allocation2 + $0x330] sm:$0xff] %vm203, 0.0
      %307 = vst.msk [vmem:[#allocation2 + $0x338] sm:$0xff] %vm203, 0.0
      %308 = vst.msk [vmem:[#allocation2 + $0x340] sm:$0xff] %vm203, 0.0
      %309 = vst.msk [vmem:[#allocation2 + $0x348] sm:$0xff] %vm203, 0.0
      %310 = vst.msk [vmem:[#allocation2 + $0x350] sm:$0xff] %vm203, 0.0
      %311 = vst.msk [vmem:[#allocation2 + $0x358] sm:$0xff] %vm203, 0.0
      %312 = vst.msk [vmem:[#allocation2 + $0x360] sm:$0xff] %vm203, 0.0
      %313 = vst.msk [vmem:[#allocation2 + $0x368] sm:$0xff] %vm203, 0.0
      %314 = vst.msk [vmem:[#allocation2 + $0x370] sm:$0xff] %vm203, 0.0
      %315 = vst.msk [vmem:[#allocation2 + $0x378] sm:$0xff] %vm203, 0.0
      %316 = vst.msk [vmem:[#allocation2 + $0x380] sm:$0xff] %vm203, 0.0
      %317 = vst.msk [vmem:[#allocation2 + $0x388] sm:$0xff] %vm203, 0.0
      %318 = vst.msk [vmem:[#allocation2 + $0x390] sm:$0xff] %vm203, 0.0
      %319 = vst.msk [vmem:[#allocation2 + $0x398] sm:$0xff] %vm203, 0.0
      %320 = vst.msk [vmem:[#allocation2 + $0x3a0] sm:$0xff] %vm203, 0.0
      %321 = vst.msk [vmem:[#allocation2 + $0x3a8] sm:$0xff] %vm203, 0.0
      %322 = vst.msk [vmem:[#allocation2 + $0x3b0] sm:$0xff] %vm203, 0.0
      %323 = vst.msk [vmem:[#allocation2 + $0x3b8] sm:$0xff] %vm203, 0.0
      %324 = vst.msk [vmem:[#allocation2 + $0x3c0] sm:$0xff] %vm203, 0.0
      %325 = vst.msk [vmem:[#allocation2 + $0x3c8] sm:$0xff] %vm203, 0.0
      %326 = vst.msk [vmem:[#allocation2 + $0x3d0] sm:$0xff] %vm203, 0.0
      %327 = vst.msk [vmem:[#allocation2 + $0x3d8] sm:$0xff] %vm203, 0.0
      %328 = vst.msk [vmem:[#allocation2 + $0x3e0] sm:$0xff] %vm203, 0.0
      %329 = vst.msk [vmem:[#allocation2 + $0x3e8] sm:$0xff] %vm203, 0.0
      %330 = vst.msk [vmem:[#allocation2 + $0x3f0] sm:$0xff] %vm203, 0.0
      %331 = vst.msk [vmem:[#allocation2 + $0x3f8] sm:$0xff] %vm203, 0.0
      %332 = vst.msk [vmem:[#allocation2 + $0x400] sm:$0xff] %vm203, 0.0
      %333 = vst.msk [vmem:[#allocation2 + $0x408] sm:$0xff] %vm203, 0.0
      %334 = vst.msk [vmem:[#allocation2 + $0x410] sm:$0xff] %vm203, 0.0
      %335 = vst.msk [vmem:[#allocation2 + $0x418] sm:$0xff] %vm203, 0.0
      %336 = vst.msk [vmem:[#allocation2 + $0x420] sm:$0xff] %vm203, 0.0
      %337 = vst.msk [vmem:[#allocation2 + $0x428] sm:$0xff] %vm203, 0.0
      %338 = vst.msk [vmem:[#allocation2 + $0x430] sm:$0xff] %vm203, 0.0
      %339 = vst.msk [vmem:[#allocation2 + $0x438] sm:$0xff] %vm203, 0.0
      %340 = vst.msk [vmem:[#allocation2 + $0x440] sm:$0xff] %vm203, 0.0
      %341 = vst.msk [vmem:[#allocation2 + $0x448] sm:$0xff] %vm203, 0.0
      %342 = vst.msk [vmem:[#allocation2 + $0x450] sm:$0xff] %vm203, 0.0
      %343 = vst.msk [vmem:[#allocation2 + $0x458] sm:$0xff] %vm203, 0.0
      %344 = vst.msk [vmem:[#allocation2 + $0x460] sm:$0xff] %vm203, 0.0
      %345 = vst.msk [vmem:[#allocation2 + $0x468] sm:$0xff] %vm203, 0.0
      %346 = vst.msk [vmem:[#allocation2 + $0x470] sm:$0xff] %vm203, 0.0
      %347 = vst.msk [vmem:[#allocation2 + $0x478] sm:$0xff] %vm203, 0.0
      %348 = vst.msk [vmem:[#allocation2 + $0x480] sm:$0xff] %vm203, 0.0
      %349 = vst.msk [vmem:[#allocation2 + $0x488] sm:$0xff] %vm203, 0.0
      %350 = vst.msk [vmem:[#allocation2 + $0x490] sm:$0xff] %vm203, 0.0
      %351 = vst.msk [vmem:[#allocation2 + $0x498] sm:$0xff] %vm203, 0.0
      %352 = vst.msk [vmem:[#allocation2 + $0x4a0] sm:$0xff] %vm203, 0.0
      %353 = vst.msk [vmem:[#allocation2 + $0x4a8] sm:$0xff] %vm203, 0.0
      %354 = vst.msk [vmem:[#allocation2 + $0x4b0] sm:$0xff] %vm203, 0.0
      %355 = vst.msk [vmem:[#allocation2 + $0x4b8] sm:$0xff] %vm203, 0.0
      %356 = vst.msk [vmem:[#allocation2 + $0x4c0] sm:$0xff] %vm203, 0.0
      %357 = vst.msk [vmem:[#allocation2 + $0x4c8] sm:$0xff] %vm203, 0.0
      %358 = vst.msk [vmem:[#allocation2 + $0x4d0] sm:$0xff] %vm203, 0.0
      %359 = vst.msk [vmem:[#allocation2 + $0x4d8] sm:$0xff] %vm203, 0.0
      %360 = vst.msk [vmem:[#allocation2 + $0x4e0] sm:$0xff] %vm203, 0.0
      %361 = vst.msk [vmem:[#allocation2 + $0x4e8] sm:$0xff] %vm203, 0.0
      %362 = vst.msk [vmem:[#allocation2 + $0x4f0] sm:$0xff] %vm203, 0.0
      %363 = vst.msk [vmem:[#allocation2 + $0x4f8] sm:$0xff] %vm203, 0.0
      %364 = vst.msk [vmem:[#allocation2 + $0x500] sm:$0xff] %vm203, 0.0
      %365 = vst.msk [vmem:[#allocation2 + $0x508] sm:$0xff] %vm203, 0.0
      %366 = vst.msk [vmem:[#allocation2 + $0x510] sm:$0xff] %vm203, 0.0
      %367 = vst.msk [vmem:[#allocation2 + $0x518] sm:$0xff] %vm203, 0.0
      %368 = vst.msk [vmem:[#allocation2 + $0x520] sm:$0xff] %vm203, 0.0
      %369 = vst.msk [vmem:[#allocation2 + $0x528] sm:$0xff] %vm203, 0.0
      %370 = vst.msk [vmem:[#allocation2 + $0x530] sm:$0xff] %vm203, 0.0
      %371 = vst.msk [vmem:[#allocation2 + $0x538] sm:$0xff] %vm203, 0.0
      %372 = vst.msk [vmem:[#allocation2 + $0x540] sm:$0xff] %vm203, 0.0
      %373 = vst.msk [vmem:[#allocation2 + $0x548] sm:$0xff] %vm203, 0.0
      %374 = vst.msk [vmem:[#allocation2 + $0x550] sm:$0xff] %vm203, 0.0
      %375 = vst.msk [vmem:[#allocation2 + $0x558] sm:$0xff] %vm203, 0.0
      %376 = vst.msk [vmem:[#allocation2 + $0x560] sm:$0xff] %vm203, 0.0
      %377 = vst.msk [vmem:[#allocation2 + $0x568] sm:$0xff] %vm203, 0.0
      %378 = vst.msk [vmem:[#allocation2 + $0x570] sm:$0xff] %vm203, 0.0
      %379 = vst.msk [vmem:[#allocation2 + $0x578] sm:$0xff] %vm203, 0.0
      %380 = vst.msk [vmem:[#allocation2 + $0x580] sm:$0xff] %vm203, 0.0
      %381 = vst.msk [vmem:[#allocation2 + $0x588] sm:$0xff] %vm203, 0.0
      %382 = vst.msk [vmem:[#allocation2 + $0x590] sm:$0xff] %vm203, 0.0
      %383 = vst.msk [vmem:[#allocation2 + $0x598] sm:$0xff] %vm203, 0.0
      %384 = vst.msk [vmem:[#allocation2 + $0x5a0] sm:$0xff] %vm203, 0.0
      %385 = vst.msk [vmem:[#allocation2 + $0x5a8] sm:$0xff] %vm203, 0.0
      %386 = vst.msk [vmem:[#allocation2 + $0x5b0] sm:$0xff] %vm203, 0.0
      %387 = vst.msk [vmem:[#allocation2 + $0x5b8] sm:$0xff] %vm203, 0.0
      %388 = vst.msk [vmem:[#allocation2 + $0x5c0] sm:$0xff] %vm203, 0.0
      %389 = vst.msk [vmem:[#allocation2 + $0x5c8] sm:$0xff] %vm203, 0.0
      %390 = vst.msk [vmem:[#allocation2 + $0x5d0] sm:$0xff] %vm203, 0.0
      %391 = vst.msk [vmem:[#allocation2 + $0x5d8] sm:$0xff] %vm203, 0.0
      %392 = vst.msk [vmem:[#allocation2 + $0x5e0] sm:$0xff] %vm203, 0.0
      %393 = vst.msk [vmem:[#allocation2 + $0x5e8] sm:$0xff] %vm203, 0.0
      %394 = vst.msk [vmem:[#allocation2 + $0x5f0] sm:$0xff] %vm203, 0.0
      %395 = vst.msk [vmem:[#allocation2 + $0x5f8] sm:$0xff] %vm203, 0.0
      %396 = vst.msk [vmem:[#allocation2 + $0x600] sm:$0xff] %vm203, 0.0
      %397 = vst.msk [vmem:[#allocation2 + $0x608] sm:$0xff] %vm203, 0.0
      %398 = vst.msk [vmem:[#allocation2 + $0x610] sm:$0xff] %vm203, 0.0
      %399 = vst.msk [vmem:[#allocation2 + $0x618] sm:$0xff] %vm203, 0.0
      %400 = vst.msk [vmem:[#allocation2 + $0x620] sm:$0xff] %vm203, 0.0
      %401 = vst.msk [vmem:[#allocation2 + $0x628] sm:$0xff] %vm203, 0.0
      %402 = vst.msk [vmem:[#allocation2 + $0x630] sm:$0xff] %vm203, 0.0
      %403 = vst.msk [vmem:[#allocation2 + $0x638] sm:$0xff] %vm203, 0.0
      %404 = vst.msk [vmem:[#allocation2 + $0x640] sm:$0xff] %vm203, 0.0
      %405 = vst.msk [vmem:[#allocation2 + $0x648] sm:$0xff] %vm203, 0.0
      %406 = vst.msk [vmem:[#allocation2 + $0x650] sm:$0xff] %vm203, 0.0
      %407 = vst.msk [vmem:[#allocation2 + $0x658] sm:$0xff] %vm203, 0.0
      %408 = vst.msk [vmem:[#allocation2 + $0x660] sm:$0xff] %vm203, 0.0
      %409 = vst.msk [vmem:[#allocation2 + $0x668] sm:$0xff] %vm203, 0.0
      %410 = vst.msk [vmem:[#allocation2 + $0x670] sm:$0xff] %vm203, 0.0
      %411 = vst.msk [vmem:[#allocation2 + $0x678] sm:$0xff] %vm203, 0.0
      %412 = vst.msk [vmem:[#allocation2 + $0x680] sm:$0xff] %vm203, 0.0
      %413 = vst.msk [vmem:[#allocation2 + $0x688] sm:$0xff] %vm203, 0.0
      %414 = vst.msk [vmem:[#allocation2 + $0x690] sm:$0xff] %vm203, 0.0
      %415 = vst.msk [vmem:[#allocation2 + $0x698] sm:$0xff] %vm203, 0.0
      %416 = vst.msk [vmem:[#allocation2 + $0x6a0] sm:$0xff] %vm203, 0.0
      %417 = vst.msk [vmem:[#allocation2 + $0x6a8] sm:$0xff] %vm203, 0.0
      %418 = vst.msk [vmem:[#allocation2 + $0x6b0] sm:$0xff] %vm203, 0.0
      %419 = vst.msk [vmem:[#allocation2 + $0x6b8] sm:$0xff] %vm203, 0.0
      %420 = vst.msk [vmem:[#allocation2 + $0x6c0] sm:$0xff] %vm203, 0.0
      %421 = vst.msk [vmem:[#allocation2 + $0x6c8] sm:$0xff] %vm203, 0.0
      %422 = vst.msk [vmem:[#allocation2 + $0x6d0] sm:$0xff] %vm203, 0.0
      %423 = vst.msk [vmem:[#allocation2 + $0x6d8] sm:$0xff] %vm203, 0.0
      %424 = vst.msk [vmem:[#allocation2 + $0x6e0] sm:$0xff] %vm203, 0.0
      %425 = vst.msk [vmem:[#allocation2 + $0x6e8] sm:$0xff] %vm203, 0.0
      %426 = vst.msk [vmem:[#allocation2 + $0x6f0] sm:$0xff] %vm203, 0.0
      %427 = vst.msk [vmem:[#allocation2 + $0x6f8] sm:$0xff] %vm203, 0.0
      %428 = vst.msk [vmem:[#allocation2 + $0x700] sm:$0xff] %vm203, 0.0
      %429 = vst.msk [vmem:[#allocation2 + $0x708] sm:$0xff] %vm203, 0.0
      %430 = vst.msk [vmem:[#allocation2 + $0x710] sm:$0xff] %vm203, 0.0
      %431 = vst.msk [vmem:[#allocation2 + $0x718] sm:$0xff] %vm203, 0.0
      %432 = vst.msk [vmem:[#allocation2 + $0x720] sm:$0xff] %vm203, 0.0
      %433 = vst.msk [vmem:[#allocation2 + $0x728] sm:$0xff] %vm203, 0.0
      %434 = vst.msk [vmem:[#allocation2 + $0x730] sm:$0xff] %vm203, 0.0
      %435 = vst.msk [vmem:[#allocation2 + $0x738] sm:$0xff] %vm203, 0.0
      %436 = vst.msk [vmem:[#allocation2 + $0x740] sm:$0xff] %vm203, 0.0
      %437 = vst.msk [vmem:[#allocation2 + $0x748] sm:$0xff] %vm203, 0.0
      %438 = vst.msk [vmem:[#allocation2 + $0x750] sm:$0xff] %vm203, 0.0
      %439 = vst.msk [vmem:[#allocation2 + $0x758] sm:$0xff] %vm203, 0.0
      %440 = vst.msk [vmem:[#allocation2 + $0x760] sm:$0xff] %vm203, 0.0
      %441 = vst.msk [vmem:[#allocation2 + $0x768] sm:$0xff] %vm203, 0.0
      %442 = vst.msk [vmem:[#allocation2 + $0x770] sm:$0xff] %vm203, 0.0
      %443 = vst.msk [vmem:[#allocation2 + $0x778] sm:$0xff] %vm203, 0.0
      %444 = vst.msk [vmem:[#allocation2 + $0x780] sm:$0xff] %vm203, 0.0
      %445 = vst.msk [vmem:[#allocation2 + $0x788] sm:$0xff] %vm203, 0.0
      %446 = vst.msk [vmem:[#allocation2 + $0x790] sm:$0xff] %vm203, 0.0
      %447 = vst.msk [vmem:[#allocation2 + $0x798] sm:$0xff] %vm203, 0.0
      %448 = vst.msk [vmem:[#allocation2 + $0x7a0] sm:$0xff] %vm203, 0.0
      %449 = vst.msk [vmem:[#allocation2 + $0x7a8] sm:$0xff] %vm203, 0.0
      %450 = vst.msk [vmem:[#allocation2 + $0x7b0] sm:$0xff] %vm203, 0.0
      %451 = vst.msk [vmem:[#allocation2 + $0x7b8] sm:$0xff] %vm203, 0.0
      %452 = vst.msk [vmem:[#allocation2 + $0x7c0] sm:$0xff] %vm203, 0.0
      %453 = vst.msk [vmem:[#allocation2 + $0x7c8] sm:$0xff] %vm203, 0.0
      %454 = vst.msk [vmem:[#allocation2 + $0x7d0] sm:$0xff] %vm203, 0.0
      %455 = vst.msk [vmem:[#allocation2 + $0x7d8] sm:$0xff] %vm203, 0.0
      %456 = vst.msk [vmem:[#allocation2 + $0x7e0] sm:$0xff] %vm203, 0.0
      %457 = vst.msk [vmem:[#allocation2 + $0x7e8] sm:$0xff] %vm203, 0.0
      %458 = vst.msk [vmem:[#allocation2 + $0x7f0] sm:$0xff] %vm203, 0.0
      %459 = vst.msk [vmem:[#allocation2 + $0x7f8] sm:$0xff] %vm203, 0.0
      %460 = vst.msk [vmem:[#allocation2 + $0x800] sm:$0xff] %vm203, 0.0
      %461 = vst.msk [vmem:[#allocation2 + $0x808] sm:$0xff] %vm203, 0.0
      %462 = vst.msk [vmem:[#allocation2 + $0x810] sm:$0xff] %vm203, 0.0
      %463 = vst.msk [vmem:[#allocation2 + $0x818] sm:$0xff] %vm203, 0.0
      %464 = vst.msk [vmem:[#allocation2 + $0x820] sm:$0xff] %vm203, 0.0
      %465 = vst.msk [vmem:[#allocation2 + $0x828] sm:$0xff] %vm203, 0.0
      %466 = vst.msk [vmem:[#allocation2 + $0x830] sm:$0xff] %vm203, 0.0
      %467 = vst.msk [vmem:[#allocation2 + $0x838] sm:$0xff] %vm203, 0.0
      %468 = vst.msk [vmem:[#allocation2 + $0x840] sm:$0xff] %vm203, 0.0
      %469 = vst.msk [vmem:[#allocation2 + $0x848] sm:$0xff] %vm203, 0.0
      %470 = vst.msk [vmem:[#allocation2 + $0x850] sm:$0xff] %vm203, 0.0
      %471 = vst.msk [vmem:[#allocation2 + $0x858] sm:$0xff] %vm203, 0.0
      %472 = vst.msk [vmem:[#allocation2 + $0x860] sm:$0xff] %vm203, 0.0
      %473 = vst.msk [vmem:[#allocation2 + $0x868] sm:$0xff] %vm203, 0.0
      %474 = vst.msk [vmem:[#allocation2 + $0x870] sm:$0xff] %vm203, 0.0
      %475 = vst.msk [vmem:[#allocation2 + $0x878] sm:$0xff] %vm203, 0.0
      %476 = vst.msk [vmem:[#allocation2 + $0x880] sm:$0xff] %vm203, 0.0
      %477 = vst.msk [vmem:[#allocation2 + $0x888] sm:$0xff] %vm203, 0.0
      %478 = vst.msk [vmem:[#allocation2 + $0x890] sm:$0xff] %vm203, 0.0
      %479 = vst.msk [vmem:[#allocation2 + $0x898] sm:$0xff] %vm203, 0.0
      %480 = vst.msk [vmem:[#allocation2 + $0x8a0] sm:$0xff] %vm203, 0.0
      %481 = vst.msk [vmem:[#allocation2 + $0x8a8] sm:$0xff] %vm203, 0.0
      %482 = vst.msk [vmem:[#allocation2 + $0x8b0] sm:$0xff] %vm203, 0.0
      %483 = vst.msk [vmem:[#allocation2 + $0x8b8] sm:$0xff] %vm203, 0.0
      %484 = vst.msk [vmem:[#allocation2 + $0x8c0] sm:$0xff] %vm203, 0.0
      %485 = vst.msk [vmem:[#allocation2 + $0x8c8] sm:$0xff] %vm203, 0.0
      %486 = vst.msk [vmem:[#allocation2 + $0x8d0] sm:$0xff] %vm203, 0.0
      %487 = vst.msk [vmem:[#allocation2 + $0x8d8] sm:$0xff] %vm203, 0.0
      %488 = vst.msk [vmem:[#allocation2 + $0x8e0] sm:$0xff] %vm203, 0.0
      %489 = vst.msk [vmem:[#allocation2 + $0x8e8] sm:$0xff] %vm203, 0.0
      %490 = vst.msk [vmem:[#allocation2 + $0x8f0] sm:$0xff] %vm203, 0.0
      %491 = vst.msk [vmem:[#allocation2 + $0x8f8] sm:$0xff] %vm203, 0.0
      %s492 = scalar_lea.vmem [#allocation2], 768
      %493 = vst.msk [vmem:[%s492 + $0x10] sm:$0xff] %vm203, %v171
      %494 = vst.msk [vmem:[%s492 + $0x18] sm:$0xff] %vm203, %v172
      %495 = vst.msk [vmem:[%s492 + $0x40] sm:$0xff] %vm203, %v173
      %496 = vst.msk [vmem:[%s492 + $0x48] sm:$0xff] %vm203, %v174
      %497 = vst.msk [vmem:[%s492 + $0x70] sm:$0xff] %vm203, %v175
      %498 = vst.msk [vmem:[%s492 + $0x78] sm:$0xff] %vm203, %v176
      %499 = vst.msk [vmem:[%s492 + $0xa0] sm:$0xff] %vm203, %v177
      %500 = vst.msk [vmem:[%s492 + $0xa8] sm:$0xff] %vm203, %v178
      %501 = vst.msk [vmem:[%s492 + $0xd0] sm:$0xff] %vm203, %v179
      %502 = vst.msk [vmem:[%s492 + $0xd8] sm:$0xff] %vm203, %v180
      %503 = vst.msk [vmem:[%s492 + $0x100] sm:$0xff] %vm203, %v181
      %504 = vst.msk [vmem:[%s492 + $0x108] sm:$0xff] %vm203, %v182
      %505 = vst.msk [vmem:[%s492 + $0x130] sm:$0xff] %vm203, %v183
      %506 = vst.msk [vmem:[%s492 + $0x138] sm:$0xff] %vm203, %v184
      %507 = vst.msk [vmem:[%s492 + $0x160] sm:$0xff] %vm203, %v185
      %508 = vst.msk [vmem:[%s492 + $0x168] sm:$0xff] %vm203, %v186
      %509 = vst.msk [vmem:[%s492 + $0x190] sm:$0xff] %vm203, %v187
      %510 = vst.msk [vmem:[%s492 + $0x198] sm:$0xff] %vm203, %v188
      %511 = vst.msk [vmem:[%s492 + $0x1c0] sm:$0xff] %vm203, %v189
      %512 = vst.msk [vmem:[%s492 + $0x1c8] sm:$0xff] %vm203, %v190
      %513 = vst.msk [vmem:[%s492 + $0x1f0] sm:$0xff] %vm203, %v191
      %514 = vst.msk [vmem:[%s492 + $0x1f8] sm:$0xff] %vm203, %v192
      %515 = vst.msk [vmem:[%s492 + $0x220] sm:$0xff] %vm203, %v193
      %516 = vst.msk [vmem:[%s492 + $0x228] sm:$0xff] %vm203, %v194
      %517 = vst.msk [vmem:[%s492 + $0x250] sm:$0xff] %vm203, %v195
      %518 = vst.msk [vmem:[%s492 + $0x258] sm:$0xff] %vm203, %v196
      %519 = vst.msk [vmem:[%s492 + $0x280] sm:$0xff] %vm203, %v197
      %520 = vst.msk [vmem:[%s492 + $0x288] sm:$0xff] %vm203, %v198
      %521 = vst.msk [vmem:[%s492 + $0x2b0] sm:$0xff] %vm203, %v199
      %522 = vst.msk [vmem:[%s492 + $0x2b8] sm:$0xff] %vm203, %v200
      %523 = vst.msk [vmem:[%s492 + $0x2e0] sm:$0xff] %vm203, %v201
      %524 = vst.msk [vmem:[%s492 + $0x2e8] sm:$0xff] %vm203, %v202
      %v525 = vsel %vm203, %v171, 0.0
      %v526 = vsel %vm203, %v173, 0.0
      %v527 = vadd.f32 %v525, %v526
      %v528 = vsel %vm203, %v175, 0.0
      %v529 = vadd.f32 %v527, %v528
      %v530 = vsel %vm203, %v177, 0.0
      %v531 = vadd.f32 %v529, %v530
      %v532 = vsel %vm203, %v179, 0.0
      %v533 = vadd.f32 %v531, %v532
      %v534 = vsel %vm203, %v181, 0.0
      %v535 = vadd.f32 %v533, %v534
      %v536 = vsel %vm203, %v183, 0.0
      %v537 = vadd.f32 %v535, %v536
      %v538 = vsel %vm203, %v185, 0.0
      %v539 = vadd.f32 %v537, %v538
      %v540 = vsel %vm203, %v187, 0.0
      %v541 = vadd.f32 %v539, %v540
      %v542 = vsel %vm203, %v189, 0.0
      %v543 = vadd.f32 %v541, %v542
      %v544 = vsel %vm203, %v191, 0.0
      %v545 = vadd.f32 %v543, %v544
      %v546 = vsel %vm203, %v193, 0.0
      %v547 = vadd.f32 %v545, %v546
      %v548 = vsel %vm203, %v195, 0.0
      %v549 = vadd.f32 %v547, %v548
      %v550 = vsel %vm203, %v197, 0.0
      %v551 = vadd.f32 %v549, %v550
      %v552 = vsel %vm203, %v199, 0.0
      %v553 = vadd.f32 %v551, %v552
      %v554 = vsel %vm203, %v201, 0.0
      %v555 = vadd.f32 %v553, %v554
      %v556 = vsel %vm203, %v172, 0.0
      %v557 = vsel %vm203, %v174, 0.0
      %v558 = vadd.f32 %v556, %v557
      %v559 = vsel %vm203, %v176, 0.0
      %v560 = vadd.f32 %v558, %v559
      %v561 = vsel %vm203, %v178, 0.0
      %v562 = vadd.f32 %v560, %v561
      %v563 = vsel %vm203, %v180, 0.0
      %v564 = vadd.f32 %v562, %v563
      %v565 = vsel %vm203, %v182, 0.0
      %v566 = vadd.f32 %v564, %v565
      %v567 = vsel %vm203, %v184, 0.0
      %v568 = vadd.f32 %v566, %v567
      %v569 = vsel %vm203, %v186, 0.0
      %v570 = vadd.f32 %v568, %v569
      %v571 = vsel %vm203, %v188, 0.0
      %v572 = vadd.f32 %v570, %v571
      %v573 = vsel %vm203, %v190, 0.0
      %v574 = vadd.f32 %v572, %v573
      %v575 = vsel %vm203, %v192, 0.0
      %v576 = vadd.f32 %v574, %v575
      %v577 = vsel %vm203, %v194, 0.0
      %v578 = vadd.f32 %v576, %v577
      %v579 = vsel %vm203, %v196, 0.0
      %v580 = vadd.f32 %v578, %v579
      %v581 = vsel %vm203, %v198, 0.0
      %v582 = vadd.f32 %v580, %v581
      %v583 = vsel %vm203, %v200, 0.0
      %v584 = vadd.f32 %v582, %v583
      %v585 = vsel %vm203, %v202, 0.0
      %v586 = vadd.f32 %v584, %v585
      %v587 = vsel %vm203, %v555, 0.0
      %v588 = vsel %vm203, %v586, 0.0
      %v589 = vadd.f32 %v587, %v588
      %v590 = vrot.slane %v589, 4
      %v591 = vadd.f32 %v589, %v590
      %v592 = vrot.slane %v591, 2
      %v593 = vadd.f32 %v591, %v592
      %v594 = vrot.slane %v593, 1
      %v595 = vadd.f32 %v593, %v594
      %s596 = scalar_lea.vmem [#allocation2], 576
      %v597 = vld [vmem:[%s596 + $0xc] sm:$0xff]
      %v598 = vld [vmem:[%s596 + $0x14] sm:$0xff]
      %v599 = vld [vmem:[%s596 + $0x3c] sm:$0xff]
      %v600 = vld [vmem:[%s596 + $0x44] sm:$0xff]
      %v601 = vld [vmem:[%s596 + $0x6c] sm:$0xff]
      %v602 = vld [vmem:[%s596 + $0x74] sm:$0xff]
      %v603 = vld [vmem:[%s596 + $0x9c] sm:$0xff]
      %v604 = vld [vmem:[%s596 + $0xa4] sm:$0xff]
      %v605 = vld [vmem:[%s596 + $0xcc] sm:$0xff]
      %v606 = vld [vmem:[%s596 + $0xd4] sm:$0xff]
      %v607 = vld [vmem:[%s596 + $0xfc] sm:$0xff]
      %v608 = vld [vmem:[%s596 + $0x104] sm:$0xff]
      %v609 = vld [vmem:[%s596 + $0x12c] sm:$0xff]
      %v610 = vld [vmem:[%s596 + $0x134] sm:$0xff]
      %v611 = vld [vmem:[%s596 + $0x15c] sm:$0xff]
      %v612 = vld [vmem:[%s596 + $0x164] sm:$0xff]
      %v613 = vld [vmem:[%s596 + $0x18c] sm:$0xff]
      %v614 = vld [vmem:[%s596 + $0x194] sm:$0xff]
      %v615 = vld [vmem:[%s596 + $0x1bc] sm:$0xff]
      %v616 = vld [vmem:[%s596 + $0x1c4] sm:$0xff]
      %v617 = vld [vmem:[%s596 + $0x1ec] sm:$0xff]
      %v618 = vld [vmem:[%s596 + $0x1f4] sm:$0xff]
      %v619 = vld [vmem:[%s596 + $0x21c] sm:$0xff]
      %v620 = vld [vmem:[%s596 + $0x224] sm:$0xff]
      %v621 = vld [vmem:[%s596 + $0x24c] sm:$0xff]
      %v622 = vld [vmem:[%s596 + $0x254] sm:$0xff]
      %v623 = vld [vmem:[%s596 + $0x27c] sm:$0xff]
      %v624 = vld [vmem:[%s596 + $0x284] sm:$0xff]
      %v625 = vld [vmem:[%s596 + $0x2ac] sm:$0xff]
      %v626 = vld [vmem:[%s596 + $0x2b4] sm:$0xff]
      %v627 = vld [vmem:[%s596 + $0x2dc] sm:$0xff]
      %v628 = vld [vmem:[%s596 + $0x2e4] sm:$0xff]
      %v629 = vld [vmem:[%s596 + $0x10] sm:$0xff]
      %v630 = vld [vmem:[%s596 + $0x18] sm:$0xff]
      %v631 = vld [vmem:[%s596 + $0x40] sm:$0xff]
      %v632 = vld [vmem:[%s596 + $0x48] sm:$0xff]
      %v633 = vld [vmem:[%s596 + $0x70] sm:$0xff]
      %v634 = vld [vmem:[%s596 + $0x78] sm:$0xff]
      %v635 = vld [vmem:[%s596 + $0xa0] sm:$0xff]
      %v636 = vld [vmem:[%s596 + $0xa8] sm:$0xff]
      %v637 = vld [vmem:[%s596 + $0xd0] sm:$0xff]
      %v638 = vld [vmem:[%s596 + $0xd8] sm:$0xff]
      %v639 = vld [vmem:[%s596 + $0x100] sm:$0xff]
      %v640 = vld [vmem:[%s596 + $0x108] sm:$0xff]
      %v641 = vld [vmem:[%s596 + $0x130] sm:$0xff]
      %v642 = vld [vmem:[%s596 + $0x138] sm:$0xff]
      %v643 = vld [vmem:[%s596 + $0x160] sm:$0xff]
      %v644 = vld [vmem:[%s596 + $0x168] sm:$0xff]
      %v645 = vld [vmem:[%s596 + $0x190] sm:$0xff]
      %v646 = vld [vmem:[%s596 + $0x198] sm:$0xff]
      %v647 = vld [vmem:[%s596 + $0x1c0] sm:$0xff]
      %v648 = vld [vmem:[%s596 + $0x1c8] sm:$0xff]
      %v649 = vld [vmem:[%s596 + $0x1f0] sm:$0xff]
      %v650 = vld [vmem:[%s596 + $0x1f8] sm:$0xff]
      %v651 = vld [vmem:[%s596 + $0x220] sm:$0xff]
      %v652 = vld [vmem:[%s596 + $0x228] sm:$0xff]
      %v653 = vld [vmem:[%s596 + $0x250] sm:$0xff]
      %v654 = vld [vmem:[%s596 + $0x258] sm:$0xff]
      %v655 = vld [vmem:[%s596 + $0x280] sm:$0xff]
      %v656 = vld [vmem:[%s596 + $0x288] sm:$0xff]
      %v657 = vld [vmem:[%s596 + $0x2b0] sm:$0xff]
      %v658 = vld [vmem:[%s596 + $0x2b8] sm:$0xff]
      %v659 = vld [vmem:[%s596 + $0x2e0] sm:$0xff]
      %v660 = vld [vmem:[%s596 + $0x2e8] sm:$0xff]
      %v661 = vld [vmem:[%s596 + $0x1c] sm:$0xff]
      %v662 = vld [vmem:[%s596 + $0x4c] sm:$0xff]
      %v663 = vld [vmem:[%s596 + $0x7c] sm:$0xff]
      %v664 = vld [vmem:[%s596 + $0xac] sm:$0xff]
      %v665 = vld [vmem:[%s596 + $0xdc] sm:$0xff]
      %v666 = vld [vmem:[%s596 + $0x10c] sm:$0xff]
      %v667 = vld [vmem:[%s596 + $0x13c] sm:$0xff]
      %v668 = vld [vmem:[%s596 + $0x16c] sm:$0xff]
      %v669 = vld [vmem:[%s596 + $0x19c] sm:$0xff]
      %v670 = vld [vmem:[%s596 + $0x1cc] sm:$0xff]
      %v671 = vld [vmem:[%s596 + $0x1fc] sm:$0xff]
      %v672 = vld [vmem:[%s596 + $0x22c] sm:$0xff]
      %v673 = vld [vmem:[%s596 + $0x25c] sm:$0xff]
      %v674 = vld [vmem:[%s596 + $0x28c] sm:$0xff]
      %v675 = vld [vmem:[%s596 + $0x2bc] sm:$0xff]
      %v676 = vld [vmem:[%s596 + $0x2ec] sm:$0xff]
      %v677 = vld [vmem:[%s492 + $0xc] sm:$0xff]
      %v678 = vld [vmem:[%s492 + $0x14] sm:$0xff]
      %v679 = vld [vmem:[%s492 + $0x3c] sm:$0xff]
      %v680 = vld [vmem:[%s492 + $0x44] sm:$0xff]
      %v681 = vld [vmem:[%s492 + $0x6c] sm:$0xff]
      %v682 = vld [vmem:[%s492 + $0x74] sm:$0xff]
      %v683 = vld [vmem:[%s492 + $0x9c] sm:$0xff]
      %v684 = vld [vmem:[%s492 + $0xa4] sm:$0xff]
      %v685 = vld [vmem:[%s492 + $0xcc] sm:$0xff]
      %v686 = vld [vmem:[%s492 + $0xd4] sm:$0xff]
      %v687 = vld [vmem:[%s492 + $0xfc] sm:$0xff]
      %v688 = vld [vmem:[%s492 + $0x104] sm:$0xff]
      %v689 = vld [vmem:[%s492 + $0x12c] sm:$0xff]
      %v690 = vld [vmem:[%s492 + $0x134] sm:$0xff]
      %v691 = vld [vmem:[%s492 + $0x15c] sm:$0xff]
      %v692 = vld [vmem:[%s492 + $0x164] sm:$0xff]
      %v693 = vld [vmem:[%s492 + $0x18c] sm:$0xff]
      %v694 = vld [vmem:[%s492 + $0x194] sm:$0xff]
      %v695 = vld [vmem:[%s492 + $0x1bc] sm:$0xff]
      %v696 = vld [vmem:[%s492 + $0x1c4] sm:$0xff]
      %v697 = vld [vmem:[%s492 + $0x1ec] sm:$0xff]
      %v698 = vld [vmem:[%s492 + $0x1f4] sm:$0xff]
      %v699 = vld [vmem:[%s492 + $0x21c] sm:$0xff]
      %v700 = vld [vmem:[%s492 + $0x224] sm:$0xff]
      %v701 = vld [vmem:[%s492 + $0x24c] sm:$0xff]
      %v702 = vld [vmem:[%s492 + $0x254] sm:$0xff]
      %v703 = vld [vmem:[%s492 + $0x27c] sm:$0xff]
      %v704 = vld [vmem:[%s492 + $0x284] sm:$0xff]
      %v705 = vld [vmem:[%s492 + $0x2ac] sm:$0xff]
      %v706 = vld [vmem:[%s492 + $0x2b4] sm:$0xff]
      %v707 = vld [vmem:[%s492 + $0x2dc] sm:$0xff]
      %v708 = vld [vmem:[%s492 + $0x2e4] sm:$0xff]
      %v709 = vld [vmem:[%s492 + $0x10] sm:$0xff]
      %v710 = vld [vmem:[%s492 + $0x18] sm:$0xff]
      %v711 = vld [vmem:[%s492 + $0x40] sm:$0xff]
      %v712 = vld [vmem:[%s492 + $0x48] sm:$0xff]
      %v713 = vld [vmem:[%s492 + $0x70] sm:$0xff]
      %v714 = vld [vmem:[%s492 + $0x78] sm:$0xff]
      %v715 = vld [vmem:[%s492 + $0xa0] sm:$0xff]
      %v716 = vld [vmem:[%s492 + $0xa8] sm:$0xff]
      %v717 = vld [vmem:[%s492 + $0xd0] sm:$0xff]
      %v718 = vld [vmem:[%s492 + $0xd8] sm:$0xff]
      %v719 = vld [vmem:[%s492 + $0x100] sm:$0xff]
      %v720 = vld [vmem:[%s492 + $0x108] sm:$0xff]
      %v721 = vld [vmem:[%s492 + $0x130] sm:$0xff]
      %v722 = vld [vmem:[%s492 + $0x138] sm:$0xff]
      %v723 = vld [vmem:[%s492 + $0x160] sm:$0xff]
      %v724 = vld [vmem:[%s492 + $0x168] sm:$0xff]
      %v725 = vld [vmem:[%s492 + $0x190] sm:$0xff]
      %v726 = vld [vmem:[%s492 + $0x198] sm:$0xff]
      %v727 = vld [vmem:[%s492 + $0x1c0] sm:$0xff]
      %v728 = vld [vmem:[%s492 + $0x1c8] sm:$0xff]
      %v729 = vld [vmem:[%s492 + $0x1f0] sm:$0xff]
      %v730 = vld [vmem:[%s492 + $0x1f8] sm:$0xff]
      %v731 = vld [vmem:[%s492 + $0x220] sm:$0xff]
      %v732 = vld [vmem:[%s492 + $0x228] sm:$0xff]
      %v733 = vld [vmem:[%s492 + $0x250] sm:$0xff]
      %v734 = vld [vmem:[%s492 + $0x258] sm:$0xff]
      %v735 = vld [vmem:[%s492 + $0x280] sm:$0xff]
      %v736 = vld [vmem:[%s492 + $0x288] sm:$0xff]
      %v737 = vld [vmem:[%s492 + $0x2b0] sm:$0xff]
      %v738 = vld [vmem:[%s492 + $0x2b8] sm:$0xff]
      %v739 = vld [vmem:[%s492 + $0x2e0] sm:$0xff]
      %v740 = vld [vmem:[%s492 + $0x2e8] sm:$0xff]
      %v741 = vld [vmem:[%s492 + $0x1c] sm:$0xff]
      %v742 = vld [vmem:[%s492 + $0x4c] sm:$0xff]
      %v743 = vld [vmem:[%s492 + $0x7c] sm:$0xff]
      %v744 = vld [vmem:[%s492 + $0xac] sm:$0xff]
      %v745 = vld [vmem:[%s492 + $0xdc] sm:$0xff]
      %v746 = vld [vmem:[%s492 + $0x10c] sm:$0xff]
      %v747 = vld [vmem:[%s492 + $0x13c] sm:$0xff]
      %v748 = vld [vmem:[%s492 + $0x16c] sm:$0xff]
      %v749 = vld [vmem:[%s492 + $0x19c] sm:$0xff]
      %v750 = vld [vmem:[%s492 + $0x1cc] sm:$0xff]
      %v751 = vld [vmem:[%s492 + $0x1fc] sm:$0xff]
      %v752 = vld [vmem:[%s492 + $0x22c] sm:$0xff]
      %v753 = vld [vmem:[%s492 + $0x25c] sm:$0xff]
      %v754 = vld [vmem:[%s492 + $0x28c] sm:$0xff]
      %v755 = vld [vmem:[%s492 + $0x2bc] sm:$0xff]
      %v756 = vld [vmem:[%s492 + $0x2ec] sm:$0xff]
      %s757 = scalar_lea.vmem [#allocation2], 960
      %v758 = vld [vmem:[%s757 + $0xc] sm:$0xff]
      %v759 = vld [vmem:[%s757 + $0x14] sm:$0xff]
      %v760 = vld [vmem:[%s757 + $0x3c] sm:$0xff]
      %v761 = vld [vmem:[%s757 + $0x44] sm:$0xff]
      %v762 = vld [vmem:[%s757 + $0x6c] sm:$0xff]
      %v763 = vld [vmem:[%s757 + $0x74] sm:$0xff]
      %v764 = vld [vmem:[%s757 + $0x9c] sm:$0xff]
      %v765 = vld [vmem:[%s757 + $0xa4] sm:$0xff]
      %v766 = vld [vmem:[%s757 + $0xcc] sm:$0xff]
      %v767 = vld [vmem:[%s757 + $0xd4] sm:$0xff]
      %v768 = vld [vmem:[%s757 + $0xfc] sm:$0xff]
      %v769 = vld [vmem:[%s757 + $0x104] sm:$0xff]
      %v770 = vld [vmem:[%s757 + $0x12c] sm:$0xff]
      %v771 = vld [vmem:[%s757 + $0x134] sm:$0xff]
      %v772 = vld [vmem:[%s757 + $0x15c] sm:$0xff]
      %v773 = vld [vmem:[%s757 + $0x164] sm:$0xff]
      %v774 = vld [vmem:[%s757 + $0x18c] sm:$0xff]
      %v775 = vld [vmem:[%s757 + $0x194] sm:$0xff]
      %v776 = vld [vmem:[%s757 + $0x1bc] sm:$0xff]
      %v777 = vld [vmem:[%s757 + $0x1c4] sm:$0xff]
      %v778 = vld [vmem:[%s757 + $0x1ec] sm:$0xff]
      %v779 = vld [vmem:[%s757 + $0x1f4] sm:$0xff]
      %v780 = vld [vmem:[%s757 + $0x21c] sm:$0xff]
      %v781 = vld [vmem:[%s757 + $0x224] sm:$0xff]
      %v782 = vld [vmem:[%s757 + $0x24c] sm:$0xff]
      %v783 = vld [vmem:[%s757 + $0x254] sm:$0xff]
      %v784 = vld [vmem:[%s757 + $0x27c] sm:$0xff]
      %v785 = vld [vmem:[%s757 + $0x284] sm:$0xff]
      %v786 = vld [vmem:[%s757 + $0x2ac] sm:$0xff]
      %v787 = vld [vmem:[%s757 + $0x2b4] sm:$0xff]
      %v788 = vld [vmem:[%s757 + $0x2dc] sm:$0xff]
      %v789 = vld [vmem:[%s757 + $0x2e4] sm:$0xff]
      %v790 = vld [vmem:[%s757 + $0x10] sm:$0xff]
      %v791 = vld [vmem:[%s757 + $0x18] sm:$0xff]
      %v792 = vld [vmem:[%s757 + $0x40] sm:$0xff]
      %v793 = vld [vmem:[%s757 + $0x48] sm:$0xff]
      %v794 = vld [vmem:[%s757 + $0x70] sm:$0xff]
      %v795 = vld [vmem:[%s757 + $0x78] sm:$0xff]
      %v796 = vld [vmem:[%s757 + $0xa0] sm:$0xff]
      %v797 = vld [vmem:[%s757 + $0xa8] sm:$0xff]
      %v798 = vld [vmem:[%s757 + $0xd0] sm:$0xff]
      %v799 = vld [vmem:[%s757 + $0xd8] sm:$0xff]
      %v800 = vld [vmem:[%s757 + $0x100] sm:$0xff]
      %v801 = vld [vmem:[%s757 + $0x108] sm:$0xff]
      %v802 = vld [vmem:[%s757 + $0x130] sm:$0xff]
      %v803 = vld [vmem:[%s757 + $0x138] sm:$0xff]
      %v804 = vld [vmem:[%s757 + $0x160] sm:$0xff]
      %v805 = vld [vmem:[%s757 + $0x168] sm:$0xff]
      %v806 = vld [vmem:[%s757 + $0x190] sm:$0xff]
      %v807 = vld [vmem:[%s757 + $0x198] sm:$0xff]
      %v808 = vld [vmem:[%s757 + $0x1c0] sm:$0xff]
      %v809 = vld [vmem:[%s757 + $0x1c8] sm:$0xff]
      %v810 = vld [vmem:[%s757 + $0x1f0] sm:$0xff]
      %v811 = vld [vmem:[%s757 + $0x1f8] sm:$0xff]
      %v812 = vld [vmem:[%s757 + $0x220] sm:$0xff]
      %v813 = vld [vmem:[%s757 + $0x228] sm:$0xff]
      %v814 = vld [vmem:[%s757 + $0x250] sm:$0xff]
      %v815 = vld [vmem:[%s757 + $0x258] sm:$0xff]
      %v816 = vld [vmem:[%s757 + $0x280] sm:$0xff]
      %v817 = vld [vmem:[%s757 + $0x288] sm:$0xff]
      %v818 = vld [vmem:[%s757 + $0x2b0] sm:$0xff]
      %v819 = vld [vmem:[%s757 + $0x2b8] sm:$0xff]
      %v820 = vld [vmem:[%s757 + $0x2e0] sm:$0xff]
      %v821 = vld [vmem:[%s757 + $0x2e8] sm:$0xff]
      %v822 = vld [vmem:[%s757 + $0x1c] sm:$0xff]
      %v823 = vld [vmem:[%s757 + $0x4c] sm:$0xff]
      %v824 = vld [vmem:[%s757 + $0x7c] sm:$0xff]
      %v825 = vld [vmem:[%s757 + $0xac] sm:$0xff]
      %v826 = vld [vmem:[%s757 + $0xdc] sm:$0xff]
      %v827 = vld [vmem:[%s757 + $0x10c] sm:$0xff]
      %v828 = vld [vmem:[%s757 + $0x13c] sm:$0xff]
      %v829 = vld [vmem:[%s757 + $0x16c] sm:$0xff]
      %v830 = vld [vmem:[%s757 + $0x19c] sm:$0xff]
      %v831 = vld [vmem:[%s757 + $0x1cc] sm:$0xff]
      %v832 = vld [vmem:[%s757 + $0x1fc] sm:$0xff]
      %v833 = vld [vmem:[%s757 + $0x22c] sm:$0xff]
      %v834 = vld [vmem:[%s757 + $0x25c] sm:$0xff]
      %v835 = vld [vmem:[%s757 + $0x28c] sm:$0xff]
      %v836 = vld [vmem:[%s757 + $0x2bc] sm:$0xff]
      %v837 = vld [vmem:[%s757 + $0x2ec] sm:$0xff]
      %s838 = scalar_lea.vmem [#allocation2], 384
      %v839 = vld [vmem:[%s838 + $0x8] sm:$0xff]
      %v840 = vld [vmem:[%s838 + $0x10] sm:$0xff]
      %v841 = vld [vmem:[%s838 + $0x38] sm:$0xff]
      %v842 = vld [vmem:[%s838 + $0x40] sm:$0xff]
      %v843 = vld [vmem:[%s838 + $0x68] sm:$0xff]
      %v844 = vld [vmem:[%s838 + $0x70] sm:$0xff]
      %v845 = vld [vmem:[%s838 + $0x98] sm:$0xff]
      %v846 = vld [vmem:[%s838 + $0xa0] sm:$0xff]
      %v847 = vld [vmem:[%s838 + $0xc8] sm:$0xff]
      %v848 = vld [vmem:[%s838 + $0xd0] sm:$0xff]
      %v849 = vld [vmem:[%s838 + $0xf8] sm:$0xff]
      %v850 = vld [vmem:[%s838 + $0x100] sm:$0xff]
      %v851 = vld [vmem:[%s838 + $0x128] sm:$0xff]
      %v852 = vld [vmem:[%s838 + $0x130] sm:$0xff]
      %v853 = vld [vmem:[%s838 + $0x158] sm:$0xff]
      %v854 = vld [vmem:[%s838 + $0x160] sm:$0xff]
      %v855 = vld [vmem:[%s838 + $0x188] sm:$0xff]
      %v856 = vld [vmem:[%s838 + $0x190] sm:$0xff]
      %v857 = vld [vmem:[%s838 + $0x1b8] sm:$0xff]
      %v858 = vld [vmem:[%s838 + $0x1c0] sm:$0xff]
      %v859 = vld [vmem:[%s838 + $0x1e8] sm:$0xff]
      %v860 = vld [vmem:[%s838 + $0x1f0] sm:$0xff]
      %v861 = vld [vmem:[%s838 + $0x218] sm:$0xff]
      %v862 = vld [vmem:[%s838 + $0x220] sm:$0xff]
      %v863 = vld [vmem:[%s838 + $0x248] sm:$0xff]
      %v864 = vld [vmem:[%s838 + $0x250] sm:$0xff]
      %v865 = vld [vmem:[%s838 + $0x278] sm:$0xff]
      %v866 = vld [vmem:[%s838 + $0x280] sm:$0xff]
      %v867 = vld [vmem:[%s838 + $0x2a8] sm:$0xff]
      %v868 = vld [vmem:[%s838 + $0x2b0] sm:$0xff]
      %v869 = vld [vmem:[%s838 + $0x2d8] sm:$0xff]
      %v870 = vld [vmem:[%s838 + $0x2e0] sm:$0xff]
      %v871 = vld [vmem:[%s838 + $0x18] sm:$0xff]
      %v872 = vld [vmem:[%s838 + $0x48] sm:$0xff]
      %v873 = vld [vmem:[%s838 + $0x78] sm:$0xff]
      %v874 = vld [vmem:[%s838 + $0xa8] sm:$0xff]
      %v875 = vld [vmem:[%s838 + $0xd8] sm:$0xff]
      %v876 = vld [vmem:[%s838 + $0x108] sm:$0xff]
      %v877 = vld [vmem:[%s838 + $0x138] sm:$0xff]
      %v878 = vld [vmem:[%s838 + $0x168] sm:$0xff]
      %v879 = vld [vmem:[%s838 + $0x198] sm:$0xff]
      %v880 = vld [vmem:[%s838 + $0x1c8] sm:$0xff]
      %v881 = vld [vmem:[%s838 + $0x1f8] sm:$0xff]
      %v882 = vld [vmem:[%s838 + $0x228] sm:$0xff]
      %v883 = vld [vmem:[%s838 + $0x258] sm:$0xff]
      %v884 = vld [vmem:[%s838 + $0x288] sm:$0xff]
      %v885 = vld [vmem:[%s838 + $0x2b8] sm:$0xff]
      %v886 = vld [vmem:[%s838 + $0x2e8] sm:$0xff]
      %v887 = vld [vmem:[%s838 + $0x20] sm:$0xff]
      %v888 = vld [vmem:[%s838 + $0x50] sm:$0xff]
      %v889 = vld [vmem:[%s838 + $0x80] sm:$0xff]
      %v890 = vld [vmem:[%s838 + $0xb0] sm:$0xff]
      %v891 = vld [vmem:[%s838 + $0xe0] sm:$0xff]
      %v892 = vld [vmem:[%s838 + $0x110] sm:$0xff]
      %v893 = vld [vmem:[%s838 + $0x140] sm:$0xff]
      %v894 = vld [vmem:[%s838 + $0x170] sm:$0xff]
      %v895 = vld [vmem:[%s838 + $0x1a0] sm:$0xff]
      %v896 = vld [vmem:[%s838 + $0x1d0] sm:$0xff]
      %v897 = vld [vmem:[%s838 + $0x200] sm:$0xff]
      %v898 = vld [vmem:[%s838 + $0x230] sm:$0xff]
      %v899 = vld [vmem:[%s838 + $0x260] sm:$0xff]
      %v900 = vld [vmem:[%s838 + $0x290] sm:$0xff]
      %v901 = vld [vmem:[%s838 + $0x2c0] sm:$0xff]
      %v902 = vld [vmem:[%s838 + $0x2f0] sm:$0xff]
      %v903 = vld [vmem:[%s492 + $0x8] sm:$0xff]
      %v904 = vld [vmem:[%s492 + $0x38] sm:$0xff]
      %v905 = vld [vmem:[%s492 + $0x68] sm:$0xff]
      %v906 = vld [vmem:[%s492 + $0x98] sm:$0xff]
      %v907 = vld [vmem:[%s492 + $0xc8] sm:$0xff]
      %v908 = vld [vmem:[%s492 + $0xf8] sm:$0xff]
      %v909 = vld [vmem:[%s492 + $0x128] sm:$0xff]
      %v910 = vld [vmem:[%s492 + $0x158] sm:$0xff]
      %v911 = vld [vmem:[%s492 + $0x188] sm:$0xff]
      %v912 = vld [vmem:[%s492 + $0x1b8] sm:$0xff]
      %v913 = vld [vmem:[%s492 + $0x1e8] sm:$0xff]
      %v914 = vld [vmem:[%s492 + $0x218] sm:$0xff]
      %v915 = vld [vmem:[%s492 + $0x248] sm:$0xff]
      %v916 = vld [vmem:[%s492 + $0x278] sm:$0xff]
      %v917 = vld [vmem:[%s492 + $0x2a8] sm:$0xff]
      %v918 = vld [vmem:[%s492 + $0x2d8] sm:$0xff]
      %v919 = vld [vmem:[%s492 + $0x20] sm:$0xff]
      %v920 = vld [vmem:[%s492 + $0x50] sm:$0xff]
      %v921 = vld [vmem:[%s492 + $0x80] sm:$0xff]
      %v922 = vld [vmem:[%s492 + $0xb0] sm:$0xff]
      %v923 = vld [vmem:[%s492 + $0xe0] sm:$0xff]
      %v924 = vld [vmem:[%s492 + $0x110] sm:$0xff]
      %v925 = vld [vmem:[%s492 + $0x140] sm:$0xff]
      %v926 = vld [vmem:[%s492 + $0x170] sm:$0xff]
      %v927 = vld [vmem:[%s492 + $0x1a0] sm:$0xff]
      %v928 = vld [vmem:[%s492 + $0x1d0] sm:$0xff]
      %v929 = vld [vmem:[%s492 + $0x200] sm:$0xff]
      %v930 = vld [vmem:[%s492 + $0x230] sm:$0xff]
      %v931 = vld [vmem:[%s492 + $0x260] sm:$0xff]
      %v932 = vld [vmem:[%s492 + $0x290] sm:$0xff]
      %v933 = vld [vmem:[%s492 + $0x2c0] sm:$0xff]
      %v934 = vld [vmem:[%s492 + $0x2f0] sm:$0xff]
      %s935 = scalar_lea.vmem [#allocation2], 1152
      %v936 = vld [vmem:[%s935 + $0x8] sm:$0xff]
      %v937 = vld [vmem:[%s935 + $0x10] sm:$0xff]
      %v938 = vld [vmem:[%s935 + $0x38] sm:$0xff]
      %v939 = vld [vmem:[%s935 + $0x40] sm:$0xff]
      %v940 = vld [vmem:[%s935 + $0x68] sm:$0xff]
      %v941 = vld [vmem:[%s935 + $0x70] sm:$0xff]
      %v942 = vld [vmem:[%s935 + $0x98] sm:$0xff]
      %v943 = vld [vmem:[%s935 + $0xa0] sm:$0xff]
      %v944 = vld [vmem:[%s935 + $0xc8] sm:$0xff]
      %v945 = vld [vmem:[%s935 + $0xd0] sm:$0xff]
      %v946 = vld [vmem:[%s935 + $0xf8] sm:$0xff]
      %v947 = vld [vmem:[%s935 + $0x100] sm:$0xff]
      %v948 = vld [vmem:[%s935 + $0x128] sm:$0xff]
      %v949 = vld [vmem:[%s935 + $0x130] sm:$0xff]
      %v950 = vld [vmem:[%s935 + $0x158] sm:$0xff]
      %v951 = vld [vmem:[%s935 + $0x160] sm:$0xff]
      %v952 = vld [vmem:[%s935 + $0x188] sm:$0xff]
      %v953 = vld [vmem:[%s935 + $0x190] sm:$0xff]
      %v954 = vld [vmem:[%s935 + $0x1b8] sm:$0xff]
      %v955 = vld [vmem:[%s935 + $0x1c0] sm:$0xff]
      %v956 = vld [vmem:[%s935 + $0x1e8] sm:$0xff]
      %v957 = vld [vmem:[%s935 + $0x1f0] sm:$0xff]
      %v958 = vld [vmem:[%s935 + $0x218] sm:$0xff]
      %v959 = vld [vmem:[%s935 + $0x220] sm:$0xff]
      %v960 = vld [vmem:[%s935 + $0x248] sm:$0xff]
      %v961 = vld [vmem:[%s935 + $0x250] sm:$0xff]
      %v962 = vld [vmem:[%s935 + $0x278] sm:$0xff]
      %v963 = vld [vmem:[%s935 + $0x280] sm:$0xff]
      %v964 = vld [vmem:[%s935 + $0x2a8] sm:$0xff]
      %v965 = vld [vmem:[%s935 + $0x2b0] sm:$0xff]
      %v966 = vld [vmem:[%s935 + $0x2d8] sm:$0xff]
      %v967 = vld [vmem:[%s935 + $0x2e0] sm:$0xff]
      %v968 = vld [vmem:[%s935 + $0x18] sm:$0xff]
      %v969 = vld [vmem:[%s935 + $0x48] sm:$0xff]
      %v970 = vld [vmem:[%s935 + $0x78] sm:$0xff]
      %v971 = vld [vmem:[%s935 + $0xa8] sm:$0xff]
      %v972 = vld [vmem:[%s935 + $0xd8] sm:$0xff]
      %v973 = vld [vmem:[%s935 + $0x108] sm:$0xff]
      %v974 = vld [vmem:[%s935 + $0x138] sm:$0xff]
      %v975 = vld [vmem:[%s935 + $0x168] sm:$0xff]
      %v976 = vld [vmem:[%s935 + $0x198] sm:$0xff]
      %v977 = vld [vmem:[%s935 + $0x1c8] sm:$0xff]
      %v978 = vld [vmem:[%s935 + $0x1f8] sm:$0xff]
      %v979 = vld [vmem:[%s935 + $0x228] sm:$0xff]
      %v980 = vld [vmem:[%s935 + $0x258] sm:$0xff]
      %v981 = vld [vmem:[%s935 + $0x288] sm:$0xff]
      %v982 = vld [vmem:[%s935 + $0x2b8] sm:$0xff]
      %v983 = vld [vmem:[%s935 + $0x2e8] sm:$0xff]
      %v984 = vld [vmem:[%s935 + $0x20] sm:$0xff]
      %v985 = vld [vmem:[%s935 + $0x50] sm:$0xff]
      %v986 = vld [vmem:[%s935 + $0x80] sm:$0xff]
      %v987 = vld [vmem:[%s935 + $0xb0] sm:$0xff]
      %v988 = vld [vmem:[%s935 + $0xe0] sm:$0xff]
      %v989 = vld [vmem:[%s935 + $0x110] sm:$0xff]
      %v990 = vld [vmem:[%s935 + $0x140] sm:$0xff]
      %v991 = vld [vmem:[%s935 + $0x170] sm:$0xff]
      %v992 = vld [vmem:[%s935 + $0x1a0] sm:$0xff]
      %v993 = vld [vmem:[%s935 + $0x1d0] sm:$0xff]
      %v994 = vld [vmem:[%s935 + $0x200] sm:$0xff]
      %v995 = vld [vmem:[%s935 + $0x230] sm:$0xff]
      %v996 = vld [vmem:[%s935 + $0x260] sm:$0xff]
      %v997 = vld [vmem:[%s935 + $0x290] sm:$0xff]
      %v998 = vld [vmem:[%s935 + $0x2c0] sm:$0xff]
      %v999 = vld [vmem:[%s935 + $0x2f0] sm:$0xff]
      %s1000 = scalar_lea.vmem [#allocation2], 192
      %v1001 = vld [vmem:[%s1000 + $0x4] sm:$0xff]
      %v1002 = vld [vmem:[%s1000 + $0xc] sm:$0xff]
      %v1003 = vld [vmem:[%s1000 + $0x34] sm:$0xff]
      %v1004 = vld [vmem:[%s1000 + $0x3c] sm:$0xff]
      %v1005 = vld [vmem:[%s1000 + $0x64] sm:$0xff]
      %v1006 = vld [vmem:[%s1000 + $0x6c] sm:$0xff]
      %v1007 = vld [vmem:[%s1000 + $0x94] sm:$0xff]
      %v1008 = vld [vmem:[%s1000 + $0x9c] sm:$0xff]
      %v1009 = vld [vmem:[%s1000 + $0xc4] sm:$0xff]
      %v1010 = vld [vmem:[%s1000 + $0xcc] sm:$0xff]
      %v1011 = vld [vmem:[%s1000 + $0xf4] sm:$0xff]
      %v1012 = vld [vmem:[%s1000 + $0xfc] sm:$0xff]
      %v1013 = vld [vmem:[%s1000 + $0x124] sm:$0xff]
      %v1014 = vld [vmem:[%s1000 + $0x12c] sm:$0xff]
      %v1015 = vld [vmem:[%s1000 + $0x154] sm:$0xff]
      %v1016 = vld [vmem:[%s1000 + $0x15c] sm:$0xff]
      %v1017 = vld [vmem:[%s1000 + $0x184] sm:$0xff]
      %v1018 = vld [vmem:[%s1000 + $0x18c] sm:$0xff]
      %v1019 = vld [vmem:[%s1000 + $0x1b4] sm:$0xff]
      %v1020 = vld [vmem:[%s1000 + $0x1bc] sm:$0xff]
      %v1021 = vld [vmem:[%s1000 + $0x1e4] sm:$0xff]
      %v1022 = vld [vmem:[%s1000 + $0x1ec] sm:$0xff]
      %v1023 = vld [vmem:[%s1000 + $0x214] sm:$0xff]
      %v1024 = vld [vmem:[%s1000 + $0x21c] sm:$0xff]
      %v1025 = vld [vmem:[%s1000 + $0x244] sm:$0xff]
      %v1026 = vld [vmem:[%s1000 + $0x24c] sm:$0xff]
      %v1027 = vld [vmem:[%s1000 + $0x274] sm:$0xff]
      %v1028 = vld [vmem:[%s1000 + $0x27c] sm:$0xff]
      %v1029 = vld [vmem:[%s1000 + $0x2a4] sm:$0xff]
      %v1030 = vld [vmem:[%s1000 + $0x2ac] sm:$0xff]
      %v1031 = vld [vmem:[%s1000 + $0x2d4] sm:$0xff]
      %v1032 = vld [vmem:[%s1000 + $0x2dc] sm:$0xff]
      %v1033 = vld [vmem:[%s1000 + $0x10] sm:$0xff]
      %v1034 = vld [vmem:[%s1000 + $0x18] sm:$0xff]
      %v1035 = vld [vmem:[%s1000 + $0x40] sm:$0xff]
      %v1036 = vld [vmem:[%s1000 + $0x48] sm:$0xff]
      %v1037 = vld [vmem:[%s1000 + $0x70] sm:$0xff]
      %v1038 = vld [vmem:[%s1000 + $0x78] sm:$0xff]
      %v1039 = vld [vmem:[%s1000 + $0xa0] sm:$0xff]
      %v1040 = vld [vmem:[%s1000 + $0xa8] sm:$0xff]
      %v1041 = vld [vmem:[%s1000 + $0xd0] sm:$0xff]
      %v1042 = vld [vmem:[%s1000 + $0xd8] sm:$0xff]
      %v1043 = vld [vmem:[%s1000 + $0x100] sm:$0xff]
      %v1044 = vld [vmem:[%s1000 + $0x108] sm:$0xff]
      %v1045 = vld [vmem:[%s1000 + $0x130] sm:$0xff]
      %v1046 = vld [vmem:[%s1000 + $0x138] sm:$0xff]
      %v1047 = vld [vmem:[%s1000 + $0x160] sm:$0xff]
      %v1048 = vld [vmem:[%s1000 + $0x168] sm:$0xff]
      %v1049 = vld [vmem:[%s1000 + $0x190] sm:$0xff]
      %v1050 = vld [vmem:[%s1000 + $0x198] sm:$0xff]
      %v1051 = vld [vmem:[%s1000 + $0x1c0] sm:$0xff]
      %v1052 = vld [vmem:[%s1000 + $0x1c8] sm:$0xff]
      %v1053 = vld [vmem:[%s1000 + $0x1f0] sm:$0xff]
      %v1054 = vld [vmem:[%s1000 + $0x1f8] sm:$0xff]
      %v1055 = vld [vmem:[%s1000 + $0x220] sm:$0xff]
      %v1056 = vld [vmem:[%s1000 + $0x228] sm:$0xff]
      %v1057 = vld [vmem:[%s1000 + $0x250] sm:$0xff]
      %v1058 = vld [vmem:[%s1000 + $0x258] sm:$0xff]
      %v1059 = vld [vmem:[%s1000 + $0x280] sm:$0xff]
      %v1060 = vld [vmem:[%s1000 + $0x288] sm:$0xff]
      %v1061 = vld [vmem:[%s1000 + $0x2b0] sm:$0xff]
      %v1062 = vld [vmem:[%s1000 + $0x2b8] sm:$0xff]
      %v1063 = vld [vmem:[%s1000 + $0x2e0] sm:$0xff]
      %v1064 = vld [vmem:[%s1000 + $0x2e8] sm:$0xff]
      %v1065 = vld [vmem:[%s1000 + $0x1c] sm:$0xff]
      %v1066 = vld [vmem:[%s1000 + $0x24] sm:$0xff]
      %v1067 = vld [vmem:[%s1000 + $0x4c] sm:$0xff]
      %v1068 = vld [vmem:[%s1000 + $0x54] sm:$0xff]
      %v1069 = vld [vmem:[%s1000 + $0x7c] sm:$0xff]
      %v1070 = vld [vmem:[%s1000 + $0x84] sm:$0xff]
      %v1071 = vld [vmem:[%s1000 + $0xac] sm:$0xff]
      %v1072 = vld [vmem:[%s1000 + $0xb4] sm:$0xff]
      %v1073 = vld [vmem:[%s1000 + $0xdc] sm:$0xff]
      %v1074 = vld [vmem:[%s1000 + $0xe4] sm:$0xff]
      %v1075 = vld [vmem:[%s1000 + $0x10c] sm:$0xff]
      %v1076 = vld [vmem:[%s1000 + $0x114] sm:$0xff]
      %v1077 = vld [vmem:[%s1000 + $0x13c] sm:$0xff]
      %v1078 = vld [vmem:[%s1000 + $0x144] sm:$0xff]
      %v1079 = vld [vmem:[%s1000 + $0x16c] sm:$0xff]
      %v1080 = vld [vmem:[%s1000 + $0x174] sm:$0xff]
      %v1081 = vld [vmem:[%s1000 + $0x19c] sm:$0xff]
      %v1082 = vld [vmem:[%s1000 + $0x1a4] sm:$0xff]
      %v1083 = vld [vmem:[%s1000 + $0x1cc] sm:$0xff]
      %v1084 = vld [vmem:[%s1000 + $0x1d4] sm:$0xff]
      %v1085 = vld [vmem:[%s1000 + $0x1fc] sm:$0xff]
      %v1086 = vld [vmem:[%s1000 + $0x204] sm:$0xff]
      %v1087 = vld [vmem:[%s1000 + $0x22c] sm:$0xff]
      %v1088 = vld [vmem:[%s1000 + $0x234] sm:$0xff]
      %v1089 = vld [vmem:[%s1000 + $0x25c] sm:$0xff]
      %v1090 = vld [vmem:[%s1000 + $0x264] sm:$0xff]
      %v1091 = vld [vmem:[%s1000 + $0x28c] sm:$0xff]
      %v1092 = vld [vmem:[%s1000 + $0x294] sm:$0xff]
      %v1093 = vld [vmem:[%s1000 + $0x2bc] sm:$0xff]
      %v1094 = vld [vmem:[%s1000 + $0x2c4] sm:$0xff]
      %v1095 = vld [vmem:[%s1000 + $0x2ec] sm:$0xff]
      %v1096 = vld [vmem:[%s1000 + $0x2f4] sm:$0xff]
      %v1097 = vld [vmem:[%s492 + $0x4] sm:$0xff]
      %v1098 = vld [vmem:[%s492 + $0x34] sm:$0xff]
      %v1099 = vld [vmem:[%s492 + $0x64] sm:$0xff]
      %v1100 = vld [vmem:[%s492 + $0x94] sm:$0xff]
      %v1101 = vld [vmem:[%s492 + $0xc4] sm:$0xff]
      %v1102 = vld [vmem:[%s492 + $0xf4] sm:$0xff]
      %v1103 = vld [vmem:[%s492 + $0x124] sm:$0xff]
      %v1104 = vld [vmem:[%s492 + $0x154] sm:$0xff]
      %v1105 = vld [vmem:[%s492 + $0x184] sm:$0xff]
      %v1106 = vld [vmem:[%s492 + $0x1b4] sm:$0xff]
      %v1107 = vld [vmem:[%s492 + $0x1e4] sm:$0xff]
      %v1108 = vld [vmem:[%s492 + $0x214] sm:$0xff]
      %v1109 = vld [vmem:[%s492 + $0x244] sm:$0xff]
      %v1110 = vld [vmem:[%s492 + $0x274] sm:$0xff]
      %v1111 = vld [vmem:[%s492 + $0x2a4] sm:$0xff]
      %v1112 = vld [vmem:[%s492 + $0x2d4] sm:$0xff]
      %v1113 = vld [vmem:[%s492 + $0x24] sm:$0xff]
      %v1114 = vld [vmem:[%s492 + $0x54] sm:$0xff]
      %v1115 = vld [vmem:[%s492 + $0x84] sm:$0xff]
      %v1116 = vld [vmem:[%s492 + $0xb4] sm:$0xff]
      %v1117 = vld [vmem:[%s492 + $0xe4] sm:$0xff]
      %v1118 = vld [vmem:[%s492 + $0x114] sm:$0xff]
      %v1119 = vld [vmem:[%s492 + $0x144] sm:$0xff]
      %v1120 = vld [vmem:[%s492 + $0x174] sm:$0xff]
      %v1121 = vld [vmem:[%s492 + $0x1a4] sm:$0xff]
      %v1122 = vld [vmem:[%s492 + $0x1d4] sm:$0xff]
      %v1123 = vld [vmem:[%s492 + $0x204] sm:$0xff]
      %v1124 = vld [vmem:[%s492 + $0x234] sm:$0xff]
      %v1125 = vld [vmem:[%s492 + $0x264] sm:$0xff]
      %v1126 = vld [vmem:[%s492 + $0x294] sm:$0xff]
      %v1127 = vld [vmem:[%s492 + $0x2c4] sm:$0xff]
      %v1128 = vld [vmem:[%s492 + $0x2f4] sm:$0xff]
      %s1129 = scalar_lea.vmem [#allocation2], 1344
      %v1130 = vld [vmem:[%s1129 + $0x4] sm:$0xff]
      %v1131 = vld [vmem:[%s1129 + $0xc] sm:$0xff]
      %v1132 = vld [vmem:[%s1129 + $0x34] sm:$0xff]
      %v1133 = vld [vmem:[%s1129 + $0x3c] sm:$0xff]
      %v1134 = vld [vmem:[%s1129 + $0x64] sm:$0xff]
      %v1135 = vld [vmem:[%s1129 + $0x6c] sm:$0xff]
      %v1136 = vld [vmem:[%s1129 + $0x94] sm:$0xff]
      %v1137 = vld [vmem:[%s1129 + $0x9c] sm:$0xff]
      %v1138 = vld [vmem:[%s1129 + $0xc4] sm:$0xff]
      %v1139 = vld [vmem:[%s1129 + $0xcc] sm:$0xff]
      %v1140 = vld [vmem:[%s1129 + $0xf4] sm:$0xff]
      %v1141 = vld [vmem:[%s1129 + $0xfc] sm:$0xff]
      %v1142 = vld [vmem:[%s1129 + $0x124] sm:$0xff]
      %v1143 = vld [vmem:[%s1129 + $0x12c] sm:$0xff]
      %v1144 = vld [vmem:[%s1129 + $0x154] sm:$0xff]
      %v1145 = vld [vmem:[%s1129 + $0x15c] sm:$0xff]
      %v1146 = vld [vmem:[%s1129 + $0x184] sm:$0xff]
      %v1147 = vld [vmem:[%s1129 + $0x18c] sm:$0xff]
      %v1148 = vld [vmem:[%s1129 + $0x1b4] sm:$0xff]
      %v1149 = vld [vmem:[%s1129 + $0x1bc] sm:$0xff]
      %v1150 = vld [vmem:[%s1129 + $0x1e4] sm:$0xff]
      %v1151 = vld [vmem:[%s1129 + $0x1ec] sm:$0xff]
      %v1152 = vld [vmem:[%s1129 + $0x214] sm:$0xff]
      %v1153 = vld [vmem:[%s1129 + $0x21c] sm:$0xff]
      %v1154 = vld [vmem:[%s1129 + $0x244] sm:$0xff]
      %v1155 = vld [vmem:[%s1129 + $0x24c] sm:$0xff]
      %v1156 = vld [vmem:[%s1129 + $0x274] sm:$0xff]
      %v1157 = vld [vmem:[%s1129 + $0x27c] sm:$0xff]
      %v1158 = vld [vmem:[%s1129 + $0x2a4] sm:$0xff]
      %v1159 = vld [vmem:[%s1129 + $0x2ac] sm:$0xff]
      %v1160 = vld [vmem:[%s1129 + $0x2d4] sm:$0xff]
      %v1161 = vld [vmem:[%s1129 + $0x2dc] sm:$0xff]
      %v1162 = vld [vmem:[%s1129 + $0x10] sm:$0xff]
      %v1163 = vld [vmem:[%s1129 + $0x18] sm:$0xff]
      %v1164 = vld [vmem:[%s1129 + $0x40] sm:$0xff]
      %v1165 = vld [vmem:[%s1129 + $0x48] sm:$0xff]
      %v1166 = vld [vmem:[%s1129 + $0x70] sm:$0xff]
      %v1167 = vld [vmem:[%s1129 + $0x78] sm:$0xff]
      %v1168 = vld [vmem:[%s1129 + $0xa0] sm:$0xff]
      %v1169 = vld [vmem:[%s1129 + $0xa8] sm:$0xff]
      %v1170 = vld [vmem:[%s1129 + $0xd0] sm:$0xff]
      %v1171 = vld [vmem:[%s1129 + $0xd8] sm:$0xff]
      %v1172 = vld [vmem:[%s1129 + $0x100] sm:$0xff]
      %v1173 = vld [vmem:[%s1129 + $0x108] sm:$0xff]
      %v1174 = vld [vmem:[%s1129 + $0x130] sm:$0xff]
      %v1175 = vld [vmem:[%s1129 + $0x138] sm:$0xff]
      %v1176 = vld [vmem:[%s1129 + $0x160] sm:$0xff]
      %v1177 = vld [vmem:[%s1129 + $0x168] sm:$0xff]
      %v1178 = vld [vmem:[%s1129 + $0x190] sm:$0xff]
      %v1179 = vld [vmem:[%s1129 + $0x198] sm:$0xff]
      %v1180 = vld [vmem:[%s1129 + $0x1c0] sm:$0xff]
      %v1181 = vld [vmem:[%s1129 + $0x1c8] sm:$0xff]
      %v1182 = vld [vmem:[%s1129 + $0x1f0] sm:$0xff]
      %v1183 = vld [vmem:[%s1129 + $0x1f8] sm:$0xff]
      %v1184 = vld [vmem:[%s1129 + $0x220] sm:$0xff]
      %v1185 = vld [vmem:[%s1129 + $0x228] sm:$0xff]
      %v1186 = vld [vmem:[%s1129 + $0x250] sm:$0xff]
      %v1187 = vld [vmem:[%s1129 + $0x258] sm:$0xff]
      %v1188 = vld [vmem:[%s1129 + $0x280] sm:$0xff]
      %v1189 = vld [vmem:[%s1129 + $0x288] sm:$0xff]
      %v1190 = vld [vmem:[%s1129 + $0x2b0] sm:$0xff]
      %v1191 = vld [vmem:[%s1129 + $0x2b8] sm:$0xff]
      %v1192 = vld [vmem:[%s1129 + $0x2e0] sm:$0xff]
      %v1193 = vld [vmem:[%s1129 + $0x2e8] sm:$0xff]
      %v1194 = vld [vmem:[%s1129 + $0x1c] sm:$0xff]
      %v1195 = vld [vmem:[%s1129 + $0x24] sm:$0xff]
      %v1196 = vld [vmem:[%s1129 + $0x4c] sm:$0xff]
      %v1197 = vld [vmem:[%s1129 + $0x54] sm:$0xff]
      %v1198 = vld [vmem:[%s1129 + $0x7c] sm:$0xff]
      %v1199 = vld [vmem:[%s1129 + $0x84] sm:$0xff]
      %v1200 = vld [vmem:[%s1129 + $0xac] sm:$0xff]
      %v1201 = vld [vmem:[%s1129 + $0xb4] sm:$0xff]
      %v1202 = vld [vmem:[%s1129 + $0xdc] sm:$0xff]
      %v1203 = vld [vmem:[%s1129 + $0xe4] sm:$0xff]
      %v1204 = vld [vmem:[%s1129 + $0x10c] sm:$0xff]
      %v1205 = vld [vmem:[%s1129 + $0x114] sm:$0xff]
      %v1206 = vld [vmem:[%s1129 + $0x13c] sm:$0xff]
      %v1207 = vld [vmem:[%s1129 + $0x144] sm:$0xff]
      %v1208 = vld [vmem:[%s1129 + $0x16c] sm:$0xff]
      %v1209 = vld [vmem:[%s1129 + $0x174] sm:$0xff]
      %v1210 = vld [vmem:[%s1129 + $0x19c] sm:$0xff]
      %v1211 = vld [vmem:[%s1129 + $0x1a4] sm:$0xff]
      %v1212 = vld [vmem:[%s1129 + $0x1cc] sm:$0xff]
      %v1213 = vld [vmem:[%s1129 + $0x1d4] sm:$0xff]
      %v1214 = vld [vmem:[%s1129 + $0x1fc] sm:$0xff]
      %v1215 = vld [vmem:[%s1129 + $0x204] sm:$0xff]
      %v1216 = vld [vmem:[%s1129 + $0x22c] sm:$0xff]
      %v1217 = vld [vmem:[%s1129 + $0x234] sm:$0xff]
      %v1218 = vld [vmem:[%s1129 + $0x25c] sm:$0xff]
      %v1219 = vld [vmem:[%s1129 + $0x264] sm:$0xff]
      %v1220 = vld [vmem:[%s1129 + $0x28c] sm:$0xff]
      %v1221 = vld [vmem:[%s1129 + $0x294] sm:$0xff]
      %v1222 = vld [vmem:[%s1129 + $0x2bc] sm:$0xff]
      %v1223 = vld [vmem:[%s1129 + $0x2c4] sm:$0xff]
      %v1224 = vld [vmem:[%s1129 + $0x2ec] sm:$0xff]
      %v1225 = vld [vmem:[%s1129 + $0x2f4] sm:$0xff]
      %1258 = vrot.lane.b32.xlu0 %v597, 4
      %v1259 = vpop.permute.xlu0 %1258
      %1260 = vrot.lane.b32.xlu0 %v598, 4
      %v1261 = vpop.permute.xlu0 %1260
      %1262 = vrot.lane.b32.xlu0 %v599, 4
      %v1263 = vpop.permute.xlu0 %1262
      %1264 = vrot.lane.b32.xlu0 %v600, 4
      %v1265 = vpop.permute.xlu0 %1264
      %1266 = vrot.lane.b32.xlu0 %v601, 4
      %v1267 = vpop.permute.xlu0 %1266
      %1268 = vrot.lane.b32.xlu0 %v602, 4
      %v1269 = vpop.permute.xlu0 %1268
      %1270 = vrot.lane.b32.xlu0 %v603, 4
      %v1271 = vpop.permute.xlu0 %1270
      %1272 = vrot.lane.b32.xlu0 %v604, 4
      %v1273 = vpop.permute.xlu0 %1272
      %1274 = vrot.lane.b32.xlu0 %v605, 4
      %v1275 = vpop.permute.xlu0 %1274
      %1276 = vrot.lane.b32.xlu0 %v606, 4
      %v1277 = vpop.permute.xlu0 %1276
      %1278 = vrot.lane.b32.xlu0 %v607, 4
      %v1279 = vpop.permute.xlu0 %1278
      %1280 = vrot.lane.b32.xlu0 %v608, 4
      %v1281 = vpop.permute.xlu0 %1280
      %1282 = vrot.lane.b32.xlu0 %v609, 4
      %v1283 = vpop.permute.xlu0 %1282
      %1284 = vrot.lane.b32.xlu0 %v610, 4
      %v1285 = vpop.permute.xlu0 %1284
      %1286 = vrot.lane.b32.xlu0 %v611, 4
      %v1287 = vpop.permute.xlu0 %1286
      %1288 = vrot.lane.b32.xlu0 %v612, 4
      %v1289 = vpop.permute.xlu0 %1288
      %1290 = vrot.lane.b32.xlu0 %v613, 4
      %v1291 = vpop.permute.xlu0 %1290
      %1292 = vrot.lane.b32.xlu0 %v614, 4
      %v1293 = vpop.permute.xlu0 %1292
      %1294 = vrot.lane.b32.xlu0 %v615, 4
      %v1295 = vpop.permute.xlu0 %1294
      %1296 = vrot.lane.b32.xlu0 %v616, 4
      %v1297 = vpop.permute.xlu0 %1296
      %1298 = vrot.lane.b32.xlu0 %v617, 4
      %v1299 = vpop.permute.xlu0 %1298
      %1300 = vrot.lane.b32.xlu0 %v618, 4
      %v1301 = vpop.permute.xlu0 %1300
      %1302 = vrot.lane.b32.xlu0 %v619, 4
      %v1303 = vpop.permute.xlu0 %1302
      %1304 = vrot.lane.b32.xlu0 %v620, 4
      %v1305 = vpop.permute.xlu0 %1304
      %1306 = vrot.lane.b32.xlu0 %v621, 4
      %v1307 = vpop.permute.xlu0 %1306
      %1308 = vrot.lane.b32.xlu0 %v622, 4
      %v1309 = vpop.permute.xlu0 %1308
      %1310 = vrot.lane.b32.xlu0 %v623, 4
      %v1311 = vpop.permute.xlu0 %1310
      %1312 = vrot.lane.b32.xlu0 %v624, 4
      %v1313 = vpop.permute.xlu0 %1312
      %1314 = vrot.lane.b32.xlu0 %v625, 4
      %v1315 = vpop.permute.xlu0 %1314
      %1316 = vrot.lane.b32.xlu0 %v626, 4
      %v1317 = vpop.permute.xlu0 %1316
      %1318 = vrot.lane.b32.xlu0 %v627, 4
      %v1319 = vpop.permute.xlu0 %1318
      %1320 = vrot.lane.b32.xlu0 %v628, 4
      %v1321 = vpop.permute.xlu0 %1320
      %1386 = vrot.lane.b32.xlu0 %v629, 8
      %v1387 = vpop.permute.xlu0 %1386
      %1388 = vrot.lane.b32.xlu0 %v630, 8
      %v1389 = vpop.permute.xlu0 %1388
      %1390 = vrot.lane.b32.xlu0 %v631, 8
      %v1391 = vpop.permute.xlu0 %1390
      %1392 = vrot.lane.b32.xlu0 %v632, 8
      %v1393 = vpop.permute.xlu0 %1392
      %1394 = vrot.lane.b32.xlu0 %v633, 8
      %v1395 = vpop.permute.xlu0 %1394
      %1396 = vrot.lane.b32.xlu0 %v634, 8
      %v1397 = vpop.permute.xlu0 %1396
      %1398 = vrot.lane.b32.xlu0 %v635, 8
      %v1399 = vpop.permute.xlu0 %1398
      %1400 = vrot.lane.b32.xlu0 %v636, 8
      %v1401 = vpop.permute.xlu0 %1400
      %1402 = vrot.lane.b32.xlu0 %v637, 8
      %v1403 = vpop.permute.xlu0 %1402
      %1404 = vrot.lane.b32.xlu0 %v638, 8
      %v1405 = vpop.permute.xlu0 %1404
      %1406 = vrot.lane.b32.xlu0 %v639, 8
      %v1407 = vpop.permute.xlu0 %1406
      %1408 = vrot.lane.b32.xlu0 %v640, 8
      %v1409 = vpop.permute.xlu0 %1408
      %1410 = vrot.lane.b32.xlu0 %v641, 8
      %v1411 = vpop.permute.xlu0 %1410
      %1412 = vrot.lane.b32.xlu0 %v642, 8
      %v1413 = vpop.permute.xlu0 %1412
      %1414 = vrot.lane.b32.xlu0 %v643, 8
      %v1415 = vpop.permute.xlu0 %1414
      %1416 = vrot.lane.b32.xlu0 %v644, 8
      %v1417 = vpop.permute.xlu0 %1416
      %1418 = vrot.lane.b32.xlu0 %v645, 8
      %v1419 = vpop.permute.xlu0 %1418
      %1420 = vrot.lane.b32.xlu0 %v646, 8
      %v1421 = vpop.permute.xlu0 %1420
      %1422 = vrot.lane.b32.xlu0 %v647, 8
      %v1423 = vpop.permute.xlu0 %1422
      %1424 = vrot.lane.b32.xlu0 %v648, 8
      %v1425 = vpop.permute.xlu0 %1424
      %1426 = vrot.lane.b32.xlu0 %v649, 8
      %v1427 = vpop.permute.xlu0 %1426
      %1428 = vrot.lane.b32.xlu0 %v650, 8
      %v1429 = vpop.permute.xlu0 %1428
      %1430 = vrot.lane.b32.xlu0 %v651, 8
      %v1431 = vpop.permute.xlu0 %1430
      %1432 = vrot.lane.b32.xlu0 %v652, 8
      %v1433 = vpop.permute.xlu0 %1432
      %1434 = vrot.lane.b32.xlu0 %v653, 8
      %v1435 = vpop.permute.xlu0 %1434
      %1436 = vrot.lane.b32.xlu0 %v654, 8
      %v1437 = vpop.permute.xlu0 %1436
      %1438 = vrot.lane.b32.xlu0 %v655, 8
      %v1439 = vpop.permute.xlu0 %1438
      %1440 = vrot.lane.b32.xlu0 %v656, 8
      %v1441 = vpop.permute.xlu0 %1440
      %1442 = vrot.lane.b32.xlu0 %v657, 8
      %v1443 = vpop.permute.xlu0 %1442
      %1444 = vrot.lane.b32.xlu0 %v658, 8
      %v1445 = vpop.permute.xlu0 %1444
      %1446 = vrot.lane.b32.xlu0 %v659, 8
      %v1447 = vpop.permute.xlu0 %1446
      %1448 = vrot.lane.b32.xlu0 %v660, 8
      %v1449 = vpop.permute.xlu0 %1448
      %1498 = vrot.lane.b32.xlu0 %v598, 12
      %v1499 = vpop.permute.xlu0 %1498
      %1500 = vrot.lane.b32.xlu0 %v661, 12
      %v1501 = vpop.permute.xlu0 %1500
      %1502 = vrot.lane.b32.xlu0 %v600, 12
      %v1503 = vpop.permute.xlu0 %1502
      %1504 = vrot.lane.b32.xlu0 %v662, 12
      %v1505 = vpop.permute.xlu0 %1504
      %1506 = vrot.lane.b32.xlu0 %v602, 12
      %v1507 = vpop.permute.xlu0 %1506
      %1508 = vrot.lane.b32.xlu0 %v663, 12
      %v1509 = vpop.permute.xlu0 %1508
      %1510 = vrot.lane.b32.xlu0 %v604, 12
      %v1511 = vpop.permute.xlu0 %1510
      %1512 = vrot.lane.b32.xlu0 %v664, 12
      %v1513 = vpop.permute.xlu0 %1512
      %1514 = vrot.lane.b32.xlu0 %v606, 12
      %v1515 = vpop.permute.xlu0 %1514
      %1516 = vrot.lane.b32.xlu0 %v665, 12
      %v1517 = vpop.permute.xlu0 %1516
      %1518 = vrot.lane.b32.xlu0 %v608, 12
      %v1519 = vpop.permute.xlu0 %1518
      %1520 = vrot.lane.b32.xlu0 %v666, 12
      %v1521 = vpop.permute.xlu0 %1520
      %1522 = vrot.lane.b32.xlu0 %v610, 12
      %v1523 = vpop.permute.xlu0 %1522
      %1524 = vrot.lane.b32.xlu0 %v667, 12
      %v1525 = vpop.permute.xlu0 %1524
      %1526 = vrot.lane.b32.xlu0 %v612, 12
      %v1527 = vpop.permute.xlu0 %1526
      %1528 = vrot.lane.b32.xlu0 %v668, 12
      %v1529 = vpop.permute.xlu0 %1528
      %1530 = vrot.lane.b32.xlu0 %v614, 12
      %v1531 = vpop.permute.xlu0 %1530
      %1532 = vrot.lane.b32.xlu0 %v669, 12
      %v1533 = vpop.permute.xlu0 %1532
      %1534 = vrot.lane.b32.xlu0 %v616, 12
      %v1535 = vpop.permute.xlu0 %1534
      %1536 = vrot.lane.b32.xlu0 %v670, 12
      %v1537 = vpop.permute.xlu0 %1536
      %1538 = vrot.lane.b32.xlu0 %v618, 12
      %v1539 = vpop.permute.xlu0 %1538
      %1540 = vrot.lane.b32.xlu0 %v671, 12
      %v1541 = vpop.permute.xlu0 %1540
      %1542 = vrot.lane.b32.xlu0 %v620, 12
      %v1543 = vpop.permute.xlu0 %1542
      %1544 = vrot.lane.b32.xlu0 %v672, 12
      %v1545 = vpop.permute.xlu0 %1544
      %1546 = vrot.lane.b32.xlu0 %v622, 12
      %v1547 = vpop.permute.xlu0 %1546
      %1548 = vrot.lane.b32.xlu0 %v673, 12
      %v1549 = vpop.permute.xlu0 %1548
      %1550 = vrot.lane.b32.xlu0 %v624, 12
      %v1551 = vpop.permute.xlu0 %1550
      %1552 = vrot.lane.b32.xlu0 %v674, 12
      %v1553 = vpop.permute.xlu0 %1552
      %1554 = vrot.lane.b32.xlu0 %v626, 12
      %v1555 = vpop.permute.xlu0 %1554
      %1556 = vrot.lane.b32.xlu0 %v675, 12
      %v1557 = vpop.permute.xlu0 %1556
      %1558 = vrot.lane.b32.xlu0 %v628, 12
      %v1559 = vpop.permute.xlu0 %1558
      %1560 = vrot.lane.b32.xlu0 %v676, 12
      %v1561 = vpop.permute.xlu0 %1560
      %1626 = vrot.lane.b32.xlu0 %v677, 16
      %v1627 = vpop.permute.xlu0 %1626
      %1628 = vrot.lane.b32.xlu0 %v678, 16
      %v1629 = vpop.permute.xlu0 %1628
      %1630 = vrot.lane.b32.xlu0 %v679, 16
      %v1631 = vpop.permute.xlu0 %1630
      %1632 = vrot.lane.b32.xlu0 %v680, 16
      %v1633 = vpop.permute.xlu0 %1632
      %1634 = vrot.lane.b32.xlu0 %v681, 16
      %v1635 = vpop.permute.xlu0 %1634
      %1636 = vrot.lane.b32.xlu0 %v682, 16
      %v1637 = vpop.permute.xlu0 %1636
      %1638 = vrot.lane.b32.xlu0 %v683, 16
      %v1639 = vpop.permute.xlu0 %1638
      %1640 = vrot.lane.b32.xlu0 %v684, 16
      %v1641 = vpop.permute.xlu0 %1640
      %1642 = vrot.lane.b32.xlu0 %v685, 16
      %v1643 = vpop.permute.xlu0 %1642
      %1644 = vrot.lane.b32.xlu0 %v686, 16
      %v1645 = vpop.permute.xlu0 %1644
      %1646 = vrot.lane.b32.xlu0 %v687, 16
      %v1647 = vpop.permute.xlu0 %1646
      %1648 = vrot.lane.b32.xlu0 %v688, 16
      %v1649 = vpop.permute.xlu0 %1648
      %1650 = vrot.lane.b32.xlu0 %v689, 16
      %v1651 = vpop.permute.xlu0 %1650
      %1652 = vrot.lane.b32.xlu0 %v690, 16
      %v1653 = vpop.permute.xlu0 %1652
      %1654 = vrot.lane.b32.xlu0 %v691, 16
      %v1655 = vpop.permute.xlu0 %1654
      %1656 = vrot.lane.b32.xlu0 %v692, 16
      %v1657 = vpop.permute.xlu0 %1656
      %1658 = vrot.lane.b32.xlu0 %v693, 16
      %v1659 = vpop.permute.xlu0 %1658
      %1660 = vrot.lane.b32.xlu0 %v694, 16
      %v1661 = vpop.permute.xlu0 %1660
      %1662 = vrot.lane.b32.xlu0 %v695, 16
      %v1663 = vpop.permute.xlu0 %1662
      %1664 = vrot.lane.b32.xlu0 %v696, 16
      %v1665 = vpop.permute.xlu0 %1664
      %1666 = vrot.lane.b32.xlu0 %v697, 16
      %v1667 = vpop.permute.xlu0 %1666
      %1668 = vrot.lane.b32.xlu0 %v698, 16
      %v1669 = vpop.permute.xlu0 %1668
      %1670 = vrot.lane.b32.xlu0 %v699, 16
      %v1671 = vpop.permute.xlu0 %1670
      %1672 = vrot.lane.b32.xlu0 %v700, 16
      %v1673 = vpop.permute.xlu0 %1672
      %1674 = vrot.lane.b32.xlu0 %v701, 16
      %v1675 = vpop.permute.xlu0 %1674
      %1676 = vrot.lane.b32.xlu0 %v702, 16
      %v1677 = vpop.permute.xlu0 %1676
      %1678 = vrot.lane.b32.xlu0 %v703, 16
      %v1679 = vpop.permute.xlu0 %1678
      %1680 = vrot.lane.b32.xlu0 %v704, 16
      %v1681 = vpop.permute.xlu0 %1680
      %1682 = vrot.lane.b32.xlu0 %v705, 16
      %v1683 = vpop.permute.xlu0 %1682
      %1684 = vrot.lane.b32.xlu0 %v706, 16
      %v1685 = vpop.permute.xlu0 %1684
      %1686 = vrot.lane.b32.xlu0 %v707, 16
      %v1687 = vpop.permute.xlu0 %1686
      %1688 = vrot.lane.b32.xlu0 %v708, 16
      %v1689 = vpop.permute.xlu0 %1688
      %1754 = vrot.lane.b32.xlu0 %v709, 20
      %v1755 = vpop.permute.xlu0 %1754
      %1756 = vrot.lane.b32.xlu0 %v710, 20
      %v1757 = vpop.permute.xlu0 %1756
      %1758 = vrot.lane.b32.xlu0 %v711, 20
      %v1759 = vpop.permute.xlu0 %1758
      %1760 = vrot.lane.b32.xlu0 %v712, 20
      %v1761 = vpop.permute.xlu0 %1760
      %1762 = vrot.lane.b32.xlu0 %v713, 20
      %v1763 = vpop.permute.xlu0 %1762
      %1764 = vrot.lane.b32.xlu0 %v714, 20
      %v1765 = vpop.permute.xlu0 %1764
      %1766 = vrot.lane.b32.xlu0 %v715, 20
      %v1767 = vpop.permute.xlu0 %1766
      %1768 = vrot.lane.b32.xlu0 %v716, 20
      %v1769 = vpop.permute.xlu0 %1768
      %1770 = vrot.lane.b32.xlu0 %v717, 20
      %v1771 = vpop.permute.xlu0 %1770
      %1772 = vrot.lane.b32.xlu0 %v718, 20
      %v1773 = vpop.permute.xlu0 %1772
      %1774 = vrot.lane.b32.xlu0 %v719, 20
      %v1775 = vpop.permute.xlu0 %1774
      %1776 = vrot.lane.b32.xlu0 %v720, 20
      %v1777 = vpop.permute.xlu0 %1776
      %1778 = vrot.lane.b32.xlu0 %v721, 20
      %v1779 = vpop.permute.xlu0 %1778
      %1780 = vrot.lane.b32.xlu0 %v722, 20
      %v1781 = vpop.permute.xlu0 %1780
      %1782 = vrot.lane.b32.xlu0 %v723, 20
      %v1783 = vpop.permute.xlu0 %1782
      %1784 = vrot.lane.b32.xlu0 %v724, 20
      %v1785 = vpop.permute.xlu0 %1784
      %1786 = vrot.lane.b32.xlu0 %v725, 20
      %v1787 = vpop.permute.xlu0 %1786
      %1788 = vrot.lane.b32.xlu0 %v726, 20
      %v1789 = vpop.permute.xlu0 %1788
      %1790 = vrot.lane.b32.xlu0 %v727, 20
      %v1791 = vpop.permute.xlu0 %1790
      %1792 = vrot.lane.b32.xlu0 %v728, 20
      %v1793 = vpop.permute.xlu0 %1792
      %1794 = vrot.lane.b32.xlu0 %v729, 20
      %v1795 = vpop.permute.xlu0 %1794
      %1796 = vrot.lane.b32.xlu0 %v730, 20
      %v1797 = vpop.permute.xlu0 %1796
      %1798 = vrot.lane.b32.xlu0 %v731, 20
      %v1799 = vpop.permute.xlu0 %1798
      %1800 = vrot.lane.b32.xlu0 %v732, 20
      %v1801 = vpop.permute.xlu0 %1800
      %1802 = vrot.lane.b32.xlu0 %v733, 20
      %v1803 = vpop.permute.xlu0 %1802
      %1804 = vrot.lane.b32.xlu0 %v734, 20
      %v1805 = vpop.permute.xlu0 %1804
      %1806 = vrot.lane.b32.xlu0 %v735, 20
      %v1807 = vpop.permute.xlu0 %1806
      %1808 = vrot.lane.b32.xlu0 %v736, 20
      %v1809 = vpop.permute.xlu0 %1808
      %1810 = vrot.lane.b32.xlu0 %v737, 20
      %v1811 = vpop.permute.xlu0 %1810
      %1812 = vrot.lane.b32.xlu0 %v738, 20
      %v1813 = vpop.permute.xlu0 %1812
      %1814 = vrot.lane.b32.xlu0 %v739, 20
      %v1815 = vpop.permute.xlu0 %1814
      %1816 = vrot.lane.b32.xlu0 %v740, 20
      %v1817 = vpop.permute.xlu0 %1816
      %1866 = vrot.lane.b32.xlu0 %v678, 24
      %v1867 = vpop.permute.xlu0 %1866
      %1868 = vrot.lane.b32.xlu0 %v741, 24
      %v1869 = vpop.permute.xlu0 %1868
      %1870 = vrot.lane.b32.xlu0 %v680, 24
      %v1871 = vpop.permute.xlu0 %1870
      %1872 = vrot.lane.b32.xlu0 %v742, 24
      %v1873 = vpop.permute.xlu0 %1872
      %1874 = vrot.lane.b32.xlu0 %v682, 24
      %v1875 = vpop.permute.xlu0 %1874
      %1876 = vrot.lane.b32.xlu0 %v743, 24
      %v1877 = vpop.permute.xlu0 %1876
      %1878 = vrot.lane.b32.xlu0 %v684, 24
      %v1879 = vpop.permute.xlu0 %1878
      %1880 = vrot.lane.b32.xlu0 %v744, 24
      %v1881 = vpop.permute.xlu0 %1880
      %1882 = vrot.lane.b32.xlu0 %v686, 24
      %v1883 = vpop.permute.xlu0 %1882
      %1884 = vrot.lane.b32.xlu0 %v745, 24
      %v1885 = vpop.permute.xlu0 %1884
      %1886 = vrot.lane.b32.xlu0 %v688, 24
      %v1887 = vpop.permute.xlu0 %1886
      %1888 = vrot.lane.b32.xlu0 %v746, 24
      %v1889 = vpop.permute.xlu0 %1888
      %1890 = vrot.lane.b32.xlu0 %v690, 24
      %v1891 = vpop.permute.xlu0 %1890
      %1892 = vrot.lane.b32.xlu0 %v747, 24
      %v1893 = vpop.permute.xlu0 %1892
      %1894 = vrot.lane.b32.xlu0 %v692, 24
      %v1895 = vpop.permute.xlu0 %1894
      %1896 = vrot.lane.b32.xlu0 %v748, 24
      %v1897 = vpop.permute.xlu0 %1896
      %1898 = vrot.lane.b32.xlu0 %v694, 24
      %v1899 = vpop.permute.xlu0 %1898
      %1900 = vrot.lane.b32.xlu0 %v749, 24
      %v1901 = vpop.permute.xlu0 %1900
      %1902 = vrot.lane.b32.xlu0 %v696, 24
      %v1903 = vpop.permute.xlu0 %1902
      %1904 = vrot.lane.b32.xlu0 %v750, 24
      %v1905 = vpop.permute.xlu0 %1904
      %1906 = vrot.lane.b32.xlu0 %v698, 24
      %v1907 = vpop.permute.xlu0 %1906
      %1908 = vrot.lane.b32.xlu0 %v751, 24
      %v1909 = vpop.permute.xlu0 %1908
      %1910 = vrot.lane.b32.xlu0 %v700, 24
      %v1911 = vpop.permute.xlu0 %1910
      %1912 = vrot.lane.b32.xlu0 %v752, 24
      %v1913 = vpop.permute.xlu0 %1912
      %1914 = vrot.lane.b32.xlu0 %v702, 24
      %v1915 = vpop.permute.xlu0 %1914
      %1916 = vrot.lane.b32.xlu0 %v753, 24
      %v1917 = vpop.permute.xlu0 %1916
      %1918 = vrot.lane.b32.xlu0 %v704, 24
      %v1919 = vpop.permute.xlu0 %1918
      %1920 = vrot.lane.b32.xlu0 %v754, 24
      %v1921 = vpop.permute.xlu0 %1920
      %1922 = vrot.lane.b32.xlu0 %v706, 24
      %v1923 = vpop.permute.xlu0 %1922
      %1924 = vrot.lane.b32.xlu0 %v755, 24
      %v1925 = vpop.permute.xlu0 %1924
      %1926 = vrot.lane.b32.xlu0 %v708, 24
      %v1927 = vpop.permute.xlu0 %1926
      %1928 = vrot.lane.b32.xlu0 %v756, 24
      %v1929 = vpop.permute.xlu0 %1928
      %1994 = vrot.lane.b32.xlu0 %v758, 28
      %v1995 = vpop.permute.xlu0 %1994
      %1996 = vrot.lane.b32.xlu0 %v759, 28
      %v1997 = vpop.permute.xlu0 %1996
      %1998 = vrot.lane.b32.xlu0 %v760, 28
      %v1999 = vpop.permute.xlu0 %1998
      %2000 = vrot.lane.b32.xlu0 %v761, 28
      %v2001 = vpop.permute.xlu0 %2000
      %2002 = vrot.lane.b32.xlu0 %v762, 28
      %v2003 = vpop.permute.xlu0 %2002
      %2004 = vrot.lane.b32.xlu0 %v763, 28
      %v2005 = vpop.permute.xlu0 %2004
      %2006 = vrot.lane.b32.xlu0 %v764, 28
      %v2007 = vpop.permute.xlu0 %2006
      %2008 = vrot.lane.b32.xlu0 %v765, 28
      %v2009 = vpop.permute.xlu0 %2008
      %2010 = vrot.lane.b32.xlu0 %v766, 28
      %v2011 = vpop.permute.xlu0 %2010
      %2012 = vrot.lane.b32.xlu0 %v767, 28
      %v2013 = vpop.permute.xlu0 %2012
      %2014 = vrot.lane.b32.xlu0 %v768, 28
      %v2015 = vpop.permute.xlu0 %2014
      %2016 = vrot.lane.b32.xlu0 %v769, 28
      %v2017 = vpop.permute.xlu0 %2016
      %2018 = vrot.lane.b32.xlu0 %v770, 28
      %v2019 = vpop.permute.xlu0 %2018
      %2020 = vrot.lane.b32.xlu0 %v771, 28
      %v2021 = vpop.permute.xlu0 %2020
      %2022 = vrot.lane.b32.xlu0 %v772, 28
      %v2023 = vpop.permute.xlu0 %2022
      %2024 = vrot.lane.b32.xlu0 %v773, 28
      %v2025 = vpop.permute.xlu0 %2024
      %2026 = vrot.lane.b32.xlu0 %v774, 28
      %v2027 = vpop.permute.xlu0 %2026
      %2028 = vrot.lane.b32.xlu0 %v775, 28
      %v2029 = vpop.permute.xlu0 %2028
      %2030 = vrot.lane.b32.xlu0 %v776, 28
      %v2031 = vpop.permute.xlu0 %2030
      %2032 = vrot.lane.b32.xlu0 %v777, 28
      %v2033 = vpop.permute.xlu0 %2032
      %2034 = vrot.lane.b32.xlu0 %v778, 28
      %v2035 = vpop.permute.xlu0 %2034
      %2036 = vrot.lane.b32.xlu0 %v779, 28
      %v2037 = vpop.permute.xlu0 %2036
      %2038 = vrot.lane.b32.xlu0 %v780, 28
      %v2039 = vpop.permute.xlu0 %2038
      %2040 = vrot.lane.b32.xlu0 %v781, 28
      %v2041 = vpop.permute.xlu0 %2040
      %2042 = vrot.lane.b32.xlu0 %v782, 28
      %v2043 = vpop.permute.xlu0 %2042
      %2044 = vrot.lane.b32.xlu0 %v783, 28
      %v2045 = vpop.permute.xlu0 %2044
      %2046 = vrot.lane.b32.xlu0 %v784, 28
      %v2047 = vpop.permute.xlu0 %2046
      %2048 = vrot.lane.b32.xlu0 %v785, 28
      %v2049 = vpop.permute.xlu0 %2048
      %2050 = vrot.lane.b32.xlu0 %v786, 28
      %v2051 = vpop.permute.xlu0 %2050
      %2052 = vrot.lane.b32.xlu0 %v787, 28
      %v2053 = vpop.permute.xlu0 %2052
      %2054 = vrot.lane.b32.xlu0 %v788, 28
      %v2055 = vpop.permute.xlu0 %2054
      %2056 = vrot.lane.b32.xlu0 %v789, 28
      %v2057 = vpop.permute.xlu0 %2056
      %2122 = vrot.lane.b32.xlu0 %v790, 32
      %v2123 = vpop.permute.xlu0 %2122
      %2124 = vrot.lane.b32.xlu0 %v791, 32
      %v2125 = vpop.permute.xlu0 %2124
      %2126 = vrot.lane.b32.xlu0 %v792, 32
      %v2127 = vpop.permute.xlu0 %2126
      %2128 = vrot.lane.b32.xlu0 %v793, 32
      %v2129 = vpop.permute.xlu0 %2128
      %2130 = vrot.lane.b32.xlu0 %v794, 32
      %v2131 = vpop.permute.xlu0 %2130
      %2132 = vrot.lane.b32.xlu0 %v795, 32
      %v2133 = vpop.permute.xlu0 %2132
      %2134 = vrot.lane.b32.xlu0 %v796, 32
      %v2135 = vpop.permute.xlu0 %2134
      %2136 = vrot.lane.b32.xlu0 %v797, 32
      %v2137 = vpop.permute.xlu0 %2136
      %2138 = vrot.lane.b32.xlu0 %v798, 32
      %v2139 = vpop.permute.xlu0 %2138
      %2140 = vrot.lane.b32.xlu0 %v799, 32
      %v2141 = vpop.permute.xlu0 %2140
      %2142 = vrot.lane.b32.xlu0 %v800, 32
      %v2143 = vpop.permute.xlu0 %2142
      %2144 = vrot.lane.b32.xlu0 %v801, 32
      %v2145 = vpop.permute.xlu0 %2144
      %2146 = vrot.lane.b32.xlu0 %v802, 32
      %v2147 = vpop.permute.xlu0 %2146
      %2148 = vrot.lane.b32.xlu0 %v803, 32
      %v2149 = vpop.permute.xlu0 %2148
      %2150 = vrot.lane.b32.xlu0 %v804, 32
      %v2151 = vpop.permute.xlu0 %2150
      %2152 = vrot.lane.b32.xlu0 %v805, 32
      %v2153 = vpop.permute.xlu0 %2152
      %2154 = vrot.lane.b32.xlu0 %v806, 32
      %v2155 = vpop.permute.xlu0 %2154
      %2156 = vrot.lane.b32.xlu0 %v807, 32
      %v2157 = vpop.permute.xlu0 %2156
      %2158 = vrot.lane.b32.xlu0 %v808, 32
      %v2159 = vpop.permute.xlu0 %2158
      %2160 = vrot.lane.b32.xlu0 %v809, 32
      %v2161 = vpop.permute.xlu0 %2160
      %2162 = vrot.lane.b32.xlu0 %v810, 32
      %v2163 = vpop.permute.xlu0 %2162
      %2164 = vrot.lane.b32.xlu0 %v811, 32
      %v2165 = vpop.permute.xlu0 %2164
      %2166 = vrot.lane.b32.xlu0 %v812, 32
      %v2167 = vpop.permute.xlu0 %2166
      %2168 = vrot.lane.b32.xlu0 %v813, 32
      %v2169 = vpop.permute.xlu0 %2168
      %2170 = vrot.lane.b32.xlu0 %v814, 32
      %v2171 = vpop.permute.xlu0 %2170
      %2172 = vrot.lane.b32.xlu0 %v815, 32
      %v2173 = vpop.permute.xlu0 %2172
      %2174 = vrot.lane.b32.xlu0 %v816, 32
      %v2175 = vpop.permute.xlu0 %2174
      %2176 = vrot.lane.b32.xlu0 %v817, 32
      %v2177 = vpop.permute.xlu0 %2176
      %2178 = vrot.lane.b32.xlu0 %v818, 32
      %v2179 = vpop.permute.xlu0 %2178
      %2180 = vrot.lane.b32.xlu0 %v819, 32
      %v2181 = vpop.permute.xlu0 %2180
      %2182 = vrot.lane.b32.xlu0 %v820, 32
      %v2183 = vpop.permute.xlu0 %2182
      %2184 = vrot.lane.b32.xlu0 %v821, 32
      %v2185 = vpop.permute.xlu0 %2184
      %2234 = vrot.lane.b32.xlu0 %v759, 36
      %v2235 = vpop.permute.xlu0 %2234
      %2236 = vrot.lane.b32.xlu0 %v822, 36
      %v2237 = vpop.permute.xlu0 %2236
      %2238 = vrot.lane.b32.xlu0 %v761, 36
      %v2239 = vpop.permute.xlu0 %2238
      %2240 = vrot.lane.b32.xlu0 %v823, 36
      %v2241 = vpop.permute.xlu0 %2240
      %2242 = vrot.lane.b32.xlu0 %v763, 36
      %v2243 = vpop.permute.xlu0 %2242
      %2244 = vrot.lane.b32.xlu0 %v824, 36
      %v2245 = vpop.permute.xlu0 %2244
      %2246 = vrot.lane.b32.xlu0 %v765, 36
      %v2247 = vpop.permute.xlu0 %2246
      %2248 = vrot.lane.b32.xlu0 %v825, 36
      %v2249 = vpop.permute.xlu0 %2248
      %2250 = vrot.lane.b32.xlu0 %v767, 36
      %v2251 = vpop.permute.xlu0 %2250
      %2252 = vrot.lane.b32.xlu0 %v826, 36
      %v2253 = vpop.permute.xlu0 %2252
      %2254 = vrot.lane.b32.xlu0 %v769, 36
      %v2255 = vpop.permute.xlu0 %2254
      %2256 = vrot.lane.b32.xlu0 %v827, 36
      %v2257 = vpop.permute.xlu0 %2256
      %2258 = vrot.lane.b32.xlu0 %v771, 36
      %v2259 = vpop.permute.xlu0 %2258
      %2260 = vrot.lane.b32.xlu0 %v828, 36
      %v2261 = vpop.permute.xlu0 %2260
      %2262 = vrot.lane.b32.xlu0 %v773, 36
      %v2263 = vpop.permute.xlu0 %2262
      %2264 = vrot.lane.b32.xlu0 %v829, 36
      %v2265 = vpop.permute.xlu0 %2264
      %2266 = vrot.lane.b32.xlu0 %v775, 36
      %v2267 = vpop.permute.xlu0 %2266
      %2268 = vrot.lane.b32.xlu0 %v830, 36
      %v2269 = vpop.permute.xlu0 %2268
      %2270 = vrot.lane.b32.xlu0 %v777, 36
      %v2271 = vpop.permute.xlu0 %2270
      %2272 = vrot.lane.b32.xlu0 %v831, 36
      %v2273 = vpop.permute.xlu0 %2272
      %2274 = vrot.lane.b32.xlu0 %v779, 36
      %v2275 = vpop.permute.xlu0 %2274
      %2276 = vrot.lane.b32.xlu0 %v832, 36
      %v2277 = vpop.permute.xlu0 %2276
      %2278 = vrot.lane.b32.xlu0 %v781, 36
      %v2279 = vpop.permute.xlu0 %2278
      %2280 = vrot.lane.b32.xlu0 %v833, 36
      %v2281 = vpop.permute.xlu0 %2280
      %2282 = vrot.lane.b32.xlu0 %v783, 36
      %v2283 = vpop.permute.xlu0 %2282
      %2284 = vrot.lane.b32.xlu0 %v834, 36
      %v2285 = vpop.permute.xlu0 %2284
      %2286 = vrot.lane.b32.xlu0 %v785, 36
      %v2287 = vpop.permute.xlu0 %2286
      %2288 = vrot.lane.b32.xlu0 %v835, 36
      %v2289 = vpop.permute.xlu0 %2288
      %2290 = vrot.lane.b32.xlu0 %v787, 36
      %v2291 = vpop.permute.xlu0 %2290
      %2292 = vrot.lane.b32.xlu0 %v836, 36
      %v2293 = vpop.permute.xlu0 %2292
      %2294 = vrot.lane.b32.xlu0 %v789, 36
      %v2295 = vpop.permute.xlu0 %2294
      %2296 = vrot.lane.b32.xlu0 %v837, 36
      %v2297 = vpop.permute.xlu0 %2296
      %2362 = vrot.lane.b32.xlu0 %v839, 40
      %v2363 = vpop.permute.xlu0 %2362
      %2364 = vrot.lane.b32.xlu0 %v840, 40
      %v2365 = vpop.permute.xlu0 %2364
      %2366 = vrot.lane.b32.xlu0 %v841, 40
      %v2367 = vpop.permute.xlu0 %2366
      %2368 = vrot.lane.b32.xlu0 %v842, 40
      %v2369 = vpop.permute.xlu0 %2368
      %2370 = vrot.lane.b32.xlu0 %v843, 40
      %v2371 = vpop.permute.xlu0 %2370
      %2372 = vrot.lane.b32.xlu0 %v844, 40
      %v2373 = vpop.permute.xlu0 %2372
      %2374 = vrot.lane.b32.xlu0 %v845, 40
      %v2375 = vpop.permute.xlu0 %2374
      %2376 = vrot.lane.b32.xlu0 %v846, 40
      %v2377 = vpop.permute.xlu0 %2376
      %2378 = vrot.lane.b32.xlu0 %v847, 40
      %v2379 = vpop.permute.xlu0 %2378
      %2380 = vrot.lane.b32.xlu0 %v848, 40
      %v2381 = vpop.permute.xlu0 %2380
      %2382 = vrot.lane.b32.xlu0 %v849, 40
      %v2383 = vpop.permute.xlu0 %2382
      %2384 = vrot.lane.b32.xlu0 %v850, 40
      %v2385 = vpop.permute.xlu0 %2384
      %2386 = vrot.lane.b32.xlu0 %v851, 40
      %v2387 = vpop.permute.xlu0 %2386
      %2388 = vrot.lane.b32.xlu0 %v852, 40
      %v2389 = vpop.permute.xlu0 %2388
      %2390 = vrot.lane.b32.xlu0 %v853, 40
      %v2391 = vpop.permute.xlu0 %2390
      %2392 = vrot.lane.b32.xlu0 %v854, 40
      %v2393 = vpop.permute.xlu0 %2392
      %2394 = vrot.lane.b32.xlu0 %v855, 40
      %v2395 = vpop.permute.xlu0 %2394
      %2396 = vrot.lane.b32.xlu0 %v856, 40
      %v2397 = vpop.permute.xlu0 %2396
      %2398 = vrot.lane.b32.xlu0 %v857, 40
      %v2399 = vpop.permute.xlu0 %2398
      %2400 = vrot.lane.b32.xlu0 %v858, 40
      %v2401 = vpop.permute.xlu0 %2400
      %2402 = vrot.lane.b32.xlu0 %v859, 40
      %v2403 = vpop.permute.xlu0 %2402
      %2404 = vrot.lane.b32.xlu0 %v860, 40
      %v2405 = vpop.permute.xlu0 %2404
      %2406 = vrot.lane.b32.xlu0 %v861, 40
      %v2407 = vpop.permute.xlu0 %2406
      %2408 = vrot.lane.b32.xlu0 %v862, 40
      %v2409 = vpop.permute.xlu0 %2408
      %2410 = vrot.lane.b32.xlu0 %v863, 40
      %v2411 = vpop.permute.xlu0 %2410
      %2412 = vrot.lane.b32.xlu0 %v864, 40
      %v2413 = vpop.permute.xlu0 %2412
      %2414 = vrot.lane.b32.xlu0 %v865, 40
      %v2415 = vpop.permute.xlu0 %2414
      %2416 = vrot.lane.b32.xlu0 %v866, 40
      %v2417 = vpop.permute.xlu0 %2416
      %2418 = vrot.lane.b32.xlu0 %v867, 40
      %v2419 = vpop.permute.xlu0 %2418
      %2420 = vrot.lane.b32.xlu0 %v868, 40
      %v2421 = vpop.permute.xlu0 %2420
      %2422 = vrot.lane.b32.xlu0 %v869, 40
      %v2423 = vpop.permute.xlu0 %2422
      %2424 = vrot.lane.b32.xlu0 %v870, 40
      %v2425 = vpop.permute.xlu0 %2424
      %2474 = vrot.lane.b32.xlu0 %v840, 44
      %v2475 = vpop.permute.xlu0 %2474
      %2476 = vrot.lane.b32.xlu0 %v871, 44
      %v2477 = vpop.permute.xlu0 %2476
      %2478 = vrot.lane.b32.xlu0 %v842, 44
      %v2479 = vpop.permute.xlu0 %2478
      %2480 = vrot.lane.b32.xlu0 %v872, 44
      %v2481 = vpop.permute.xlu0 %2480
      %2482 = vrot.lane.b32.xlu0 %v844, 44
      %v2483 = vpop.permute.xlu0 %2482
      %2484 = vrot.lane.b32.xlu0 %v873, 44
      %v2485 = vpop.permute.xlu0 %2484
      %2486 = vrot.lane.b32.xlu0 %v846, 44
      %v2487 = vpop.permute.xlu0 %2486
      %2488 = vrot.lane.b32.xlu0 %v874, 44
      %v2489 = vpop.permute.xlu0 %2488
      %2490 = vrot.lane.b32.xlu0 %v848, 44
      %v2491 = vpop.permute.xlu0 %2490
      %2492 = vrot.lane.b32.xlu0 %v875, 44
      %v2493 = vpop.permute.xlu0 %2492
      %2494 = vrot.lane.b32.xlu0 %v850, 44
      %v2495 = vpop.permute.xlu0 %2494
      %2496 = vrot.lane.b32.xlu0 %v876, 44
      %v2497 = vpop.permute.xlu0 %2496
      %2498 = vrot.lane.b32.xlu0 %v852, 44
      %v2499 = vpop.permute.xlu0 %2498
      %2500 = vrot.lane.b32.xlu0 %v877, 44
      %v2501 = vpop.permute.xlu0 %2500
      %2502 = vrot.lane.b32.xlu0 %v854, 44
      %v2503 = vpop.permute.xlu0 %2502
      %2504 = vrot.lane.b32.xlu0 %v878, 44
      %v2505 = vpop.permute.xlu0 %2504
      %2506 = vrot.lane.b32.xlu0 %v856, 44
      %v2507 = vpop.permute.xlu0 %2506
      %2508 = vrot.lane.b32.xlu0 %v879, 44
      %v2509 = vpop.permute.xlu0 %2508
      %2510 = vrot.lane.b32.xlu0 %v858, 44
      %v2511 = vpop.permute.xlu0 %2510
      %2512 = vrot.lane.b32.xlu0 %v880, 44
      %v2513 = vpop.permute.xlu0 %2512
      %2514 = vrot.lane.b32.xlu0 %v860, 44
      %v2515 = vpop.permute.xlu0 %2514
      %2516 = vrot.lane.b32.xlu0 %v881, 44
      %v2517 = vpop.permute.xlu0 %2516
      %2518 = vrot.lane.b32.xlu0 %v862, 44
      %v2519 = vpop.permute.xlu0 %2518
      %2520 = vrot.lane.b32.xlu0 %v882, 44
      %v2521 = vpop.permute.xlu0 %2520
      %2522 = vrot.lane.b32.xlu0 %v864, 44
      %v2523 = vpop.permute.xlu0 %2522
      %2524 = vrot.lane.b32.xlu0 %v883, 44
      %v2525 = vpop.permute.xlu0 %2524
      %2526 = vrot.lane.b32.xlu0 %v866, 44
      %v2527 = vpop.permute.xlu0 %2526
      %2528 = vrot.lane.b32.xlu0 %v884, 44
      %v2529 = vpop.permute.xlu0 %2528
      %2530 = vrot.lane.b32.xlu0 %v868, 44
      %v2531 = vpop.permute.xlu0 %2530
      %2532 = vrot.lane.b32.xlu0 %v885, 44
      %v2533 = vpop.permute.xlu0 %2532
      %2534 = vrot.lane.b32.xlu0 %v870, 44
      %v2535 = vpop.permute.xlu0 %2534
      %2536 = vrot.lane.b32.xlu0 %v886, 44
      %v2537 = vpop.permute.xlu0 %2536
      %2586 = vrot.lane.b32.xlu0 %v871, 48
      %v2587 = vpop.permute.xlu0 %2586
      %2588 = vrot.lane.b32.xlu0 %v887, 48
      %v2589 = vpop.permute.xlu0 %2588
      %2590 = vrot.lane.b32.xlu0 %v872, 48
      %v2591 = vpop.permute.xlu0 %2590
      %2592 = vrot.lane.b32.xlu0 %v888, 48
      %v2593 = vpop.permute.xlu0 %2592
      %2594 = vrot.lane.b32.xlu0 %v873, 48
      %v2595 = vpop.permute.xlu0 %2594
      %2596 = vrot.lane.b32.xlu0 %v889, 48
      %v2597 = vpop.permute.xlu0 %2596
      %2598 = vrot.lane.b32.xlu0 %v874, 48
      %v2599 = vpop.permute.xlu0 %2598
      %2600 = vrot.lane.b32.xlu0 %v890, 48
      %v2601 = vpop.permute.xlu0 %2600
      %2602 = vrot.lane.b32.xlu0 %v875, 48
      %v2603 = vpop.permute.xlu0 %2602
      %2604 = vrot.lane.b32.xlu0 %v891, 48
      %v2605 = vpop.permute.xlu0 %2604
      %2606 = vrot.lane.b32.xlu0 %v876, 48
      %v2607 = vpop.permute.xlu0 %2606
      %2608 = vrot.lane.b32.xlu0 %v892, 48
      %v2609 = vpop.permute.xlu0 %2608
      %2610 = vrot.lane.b32.xlu0 %v877, 48
      %v2611 = vpop.permute.xlu0 %2610
      %2612 = vrot.lane.b32.xlu0 %v893, 48
      %v2613 = vpop.permute.xlu0 %2612
      %2614 = vrot.lane.b32.xlu0 %v878, 48
      %v2615 = vpop.permute.xlu0 %2614
      %2616 = vrot.lane.b32.xlu0 %v894, 48
      %v2617 = vpop.permute.xlu0 %2616
      %2618 = vrot.lane.b32.xlu0 %v879, 48
      %v2619 = vpop.permute.xlu0 %2618
      %2620 = vrot.lane.b32.xlu0 %v895, 48
      %v2621 = vpop.permute.xlu0 %2620
      %2622 = vrot.lane.b32.xlu0 %v880, 48
      %v2623 = vpop.permute.xlu0 %2622
      %2624 = vrot.lane.b32.xlu0 %v896, 48
      %v2625 = vpop.permute.xlu0 %2624
      %2626 = vrot.lane.b32.xlu0 %v881, 48
      %v2627 = vpop.permute.xlu0 %2626
      %2628 = vrot.lane.b32.xlu0 %v897, 48
      %v2629 = vpop.permute.xlu0 %2628
      %2630 = vrot.lane.b32.xlu0 %v882, 48
      %v2631 = vpop.permute.xlu0 %2630
      %2632 = vrot.lane.b32.xlu0 %v898, 48
      %v2633 = vpop.permute.xlu0 %2632
      %2634 = vrot.lane.b32.xlu0 %v883, 48
      %v2635 = vpop.permute.xlu0 %2634
      %2636 = vrot.lane.b32.xlu0 %v899, 48
      %v2637 = vpop.permute.xlu0 %2636
      %2638 = vrot.lane.b32.xlu0 %v884, 48
      %v2639 = vpop.permute.xlu0 %2638
      %2640 = vrot.lane.b32.xlu0 %v900, 48
      %v2641 = vpop.permute.xlu0 %2640
      %2642 = vrot.lane.b32.xlu0 %v885, 48
      %v2643 = vpop.permute.xlu0 %2642
      %2644 = vrot.lane.b32.xlu0 %v901, 48
      %v2645 = vpop.permute.xlu0 %2644
      %2646 = vrot.lane.b32.xlu0 %v886, 48
      %v2647 = vpop.permute.xlu0 %2646
      %2648 = vrot.lane.b32.xlu0 %v902, 48
      %v2649 = vpop.permute.xlu0 %2648
      %2698 = vrot.lane.b32.xlu0 %v903, 52
      %v2699 = vpop.permute.xlu0 %2698
      %2700 = vrot.lane.b32.xlu0 %v709, 52
      %v2701 = vpop.permute.xlu0 %2700
      %2702 = vrot.lane.b32.xlu0 %v904, 52
      %v2703 = vpop.permute.xlu0 %2702
      %2704 = vrot.lane.b32.xlu0 %v711, 52
      %v2705 = vpop.permute.xlu0 %2704
      %2706 = vrot.lane.b32.xlu0 %v905, 52
      %v2707 = vpop.permute.xlu0 %2706
      %2708 = vrot.lane.b32.xlu0 %v713, 52
      %v2709 = vpop.permute.xlu0 %2708
      %2710 = vrot.lane.b32.xlu0 %v906, 52
      %v2711 = vpop.permute.xlu0 %2710
      %2712 = vrot.lane.b32.xlu0 %v715, 52
      %v2713 = vpop.permute.xlu0 %2712
      %2714 = vrot.lane.b32.xlu0 %v907, 52
      %v2715 = vpop.permute.xlu0 %2714
      %2716 = vrot.lane.b32.xlu0 %v717, 52
      %v2717 = vpop.permute.xlu0 %2716
      %2718 = vrot.lane.b32.xlu0 %v908, 52
      %v2719 = vpop.permute.xlu0 %2718
      %2720 = vrot.lane.b32.xlu0 %v719, 52
      %v2721 = vpop.permute.xlu0 %2720
      %2722 = vrot.lane.b32.xlu0 %v909, 52
      %v2723 = vpop.permute.xlu0 %2722
      %2724 = vrot.lane.b32.xlu0 %v721, 52
      %v2725 = vpop.permute.xlu0 %2724
      %2726 = vrot.lane.b32.xlu0 %v910, 52
      %v2727 = vpop.permute.xlu0 %2726
      %2728 = vrot.lane.b32.xlu0 %v723, 52
      %v2729 = vpop.permute.xlu0 %2728
      %2730 = vrot.lane.b32.xlu0 %v911, 52
      %v2731 = vpop.permute.xlu0 %2730
      %2732 = vrot.lane.b32.xlu0 %v725, 52
      %v2733 = vpop.permute.xlu0 %2732
      %2734 = vrot.lane.b32.xlu0 %v912, 52
      %v2735 = vpop.permute.xlu0 %2734
      %2736 = vrot.lane.b32.xlu0 %v727, 52
      %v2737 = vpop.permute.xlu0 %2736
      %2738 = vrot.lane.b32.xlu0 %v913, 52
      %v2739 = vpop.permute.xlu0 %2738
      %2740 = vrot.lane.b32.xlu0 %v729, 52
      %v2741 = vpop.permute.xlu0 %2740
      %2742 = vrot.lane.b32.xlu0 %v914, 52
      %v2743 = vpop.permute.xlu0 %2742
      %2744 = vrot.lane.b32.xlu0 %v731, 52
      %v2745 = vpop.permute.xlu0 %2744
      %2746 = vrot.lane.b32.xlu0 %v915, 52
      %v2747 = vpop.permute.xlu0 %2746
      %2748 = vrot.lane.b32.xlu0 %v733, 52
      %v2749 = vpop.permute.xlu0 %2748
      %2750 = vrot.lane.b32.xlu0 %v916, 52
      %v2751 = vpop.permute.xlu0 %2750
      %2752 = vrot.lane.b32.xlu0 %v735, 52
      %v2753 = vpop.permute.xlu0 %2752
      %2754 = vrot.lane.b32.xlu0 %v917, 52
      %v2755 = vpop.permute.xlu0 %2754
      %2756 = vrot.lane.b32.xlu0 %v737, 52
      %v2757 = vpop.permute.xlu0 %2756
      %2758 = vrot.lane.b32.xlu0 %v918, 52
      %v2759 = vpop.permute.xlu0 %2758
      %2760 = vrot.lane.b32.xlu0 %v739, 52
      %v2761 = vpop.permute.xlu0 %2760
      %2794 = vrot.lane.b32.xlu0 %v709, 56
      %v2795 = vpop.permute.xlu0 %2794
      %2796 = vrot.lane.b32.xlu0 %v710, 56
      %v2797 = vpop.permute.xlu0 %2796
      %2798 = vrot.lane.b32.xlu0 %v711, 56
      %v2799 = vpop.permute.xlu0 %2798
      %2800 = vrot.lane.b32.xlu0 %v712, 56
      %v2801 = vpop.permute.xlu0 %2800
      %2802 = vrot.lane.b32.xlu0 %v713, 56
      %v2803 = vpop.permute.xlu0 %2802
      %2804 = vrot.lane.b32.xlu0 %v714, 56
      %v2805 = vpop.permute.xlu0 %2804
      %2806 = vrot.lane.b32.xlu0 %v715, 56
      %v2807 = vpop.permute.xlu0 %2806
      %2808 = vrot.lane.b32.xlu0 %v716, 56
      %v2809 = vpop.permute.xlu0 %2808
      %2810 = vrot.lane.b32.xlu0 %v717, 56
      %v2811 = vpop.permute.xlu0 %2810
      %2812 = vrot.lane.b32.xlu0 %v718, 56
      %v2813 = vpop.permute.xlu0 %2812
      %2814 = vrot.lane.b32.xlu0 %v719, 56
      %v2815 = vpop.permute.xlu0 %2814
      %2816 = vrot.lane.b32.xlu0 %v720, 56
      %v2817 = vpop.permute.xlu0 %2816
      %2818 = vrot.lane.b32.xlu0 %v721, 56
      %v2819 = vpop.permute.xlu0 %2818
      %2820 = vrot.lane.b32.xlu0 %v722, 56
      %v2821 = vpop.permute.xlu0 %2820
      %2822 = vrot.lane.b32.xlu0 %v723, 56
      %v2823 = vpop.permute.xlu0 %2822
      %2824 = vrot.lane.b32.xlu0 %v724, 56
      %v2825 = vpop.permute.xlu0 %2824
      %2826 = vrot.lane.b32.xlu0 %v725, 56
      %v2827 = vpop.permute.xlu0 %2826
      %2828 = vrot.lane.b32.xlu0 %v726, 56
      %v2829 = vpop.permute.xlu0 %2828
      %2830 = vrot.lane.b32.xlu0 %v727, 56
      %v2831 = vpop.permute.xlu0 %2830
      %2832 = vrot.lane.b32.xlu0 %v728, 56
      %v2833 = vpop.permute.xlu0 %2832
      %2834 = vrot.lane.b32.xlu0 %v729, 56
      %v2835 = vpop.permute.xlu0 %2834
      %2836 = vrot.lane.b32.xlu0 %v730, 56
      %v2837 = vpop.permute.xlu0 %2836
      %2838 = vrot.lane.b32.xlu0 %v731, 56
      %v2839 = vpop.permute.xlu0 %2838
      %2840 = vrot.lane.b32.xlu0 %v732, 56
      %v2841 = vpop.permute.xlu0 %2840
      %2842 = vrot.lane.b32.xlu0 %v733, 56
      %v2843 = vpop.permute.xlu0 %2842
      %2844 = vrot.lane.b32.xlu0 %v734, 56
      %v2845 = vpop.permute.xlu0 %2844
      %2846 = vrot.lane.b32.xlu0 %v735, 56
      %v2847 = vpop.permute.xlu0 %2846
      %2848 = vrot.lane.b32.xlu0 %v736, 56
      %v2849 = vpop.permute.xlu0 %2848
      %2850 = vrot.lane.b32.xlu0 %v737, 56
      %v2851 = vpop.permute.xlu0 %2850
      %2852 = vrot.lane.b32.xlu0 %v738, 56
      %v2853 = vpop.permute.xlu0 %2852
      %2854 = vrot.lane.b32.xlu0 %v739, 56
      %v2855 = vpop.permute.xlu0 %2854
      %2856 = vrot.lane.b32.xlu0 %v740, 56
      %v2857 = vpop.permute.xlu0 %2856
      %2906 = vrot.lane.b32.xlu0 %v710, 60
      %v2907 = vpop.permute.xlu0 %2906
      %2908 = vrot.lane.b32.xlu0 %v919, 60
      %v2909 = vpop.permute.xlu0 %2908
      %2910 = vrot.lane.b32.xlu0 %v712, 60
      %v2911 = vpop.permute.xlu0 %2910
      %2912 = vrot.lane.b32.xlu0 %v920, 60
      %v2913 = vpop.permute.xlu0 %2912
      %2914 = vrot.lane.b32.xlu0 %v714, 60
      %v2915 = vpop.permute.xlu0 %2914
      %2916 = vrot.lane.b32.xlu0 %v921, 60
      %v2917 = vpop.permute.xlu0 %2916
      %2918 = vrot.lane.b32.xlu0 %v716, 60
      %v2919 = vpop.permute.xlu0 %2918
      %2920 = vrot.lane.b32.xlu0 %v922, 60
      %v2921 = vpop.permute.xlu0 %2920
      %2922 = vrot.lane.b32.xlu0 %v718, 60
      %v2923 = vpop.permute.xlu0 %2922
      %2924 = vrot.lane.b32.xlu0 %v923, 60
      %v2925 = vpop.permute.xlu0 %2924
      %2926 = vrot.lane.b32.xlu0 %v720, 60
      %v2927 = vpop.permute.xlu0 %2926
      %2928 = vrot.lane.b32.xlu0 %v924, 60
      %v2929 = vpop.permute.xlu0 %2928
      %2930 = vrot.lane.b32.xlu0 %v722, 60
      %v2931 = vpop.permute.xlu0 %2930
      %2932 = vrot.lane.b32.xlu0 %v925, 60
      %v2933 = vpop.permute.xlu0 %2932
      %2934 = vrot.lane.b32.xlu0 %v724, 60
      %v2935 = vpop.permute.xlu0 %2934
      %2936 = vrot.lane.b32.xlu0 %v926, 60
      %v2937 = vpop.permute.xlu0 %2936
      %2938 = vrot.lane.b32.xlu0 %v726, 60
      %v2939 = vpop.permute.xlu0 %2938
      %2940 = vrot.lane.b32.xlu0 %v927, 60
      %v2941 = vpop.permute.xlu0 %2940
      %2942 = vrot.lane.b32.xlu0 %v728, 60
      %v2943 = vpop.permute.xlu0 %2942
      %2944 = vrot.lane.b32.xlu0 %v928, 60
      %v2945 = vpop.permute.xlu0 %2944
      %2946 = vrot.lane.b32.xlu0 %v730, 60
      %v2947 = vpop.permute.xlu0 %2946
      %2948 = vrot.lane.b32.xlu0 %v929, 60
      %v2949 = vpop.permute.xlu0 %2948
      %2950 = vrot.lane.b32.xlu0 %v732, 60
      %v2951 = vpop.permute.xlu0 %2950
      %2952 = vrot.lane.b32.xlu0 %v930, 60
      %v2953 = vpop.permute.xlu0 %2952
      %2954 = vrot.lane.b32.xlu0 %v734, 60
      %v2955 = vpop.permute.xlu0 %2954
      %2956 = vrot.lane.b32.xlu0 %v931, 60
      %v2957 = vpop.permute.xlu0 %2956
      %2958 = vrot.lane.b32.xlu0 %v736, 60
      %v2959 = vpop.permute.xlu0 %2958
      %2960 = vrot.lane.b32.xlu0 %v932, 60
      %v2961 = vpop.permute.xlu0 %2960
      %2962 = vrot.lane.b32.xlu0 %v738, 60
      %v2963 = vpop.permute.xlu0 %2962
      %2964 = vrot.lane.b32.xlu0 %v933, 60
      %v2965 = vpop.permute.xlu0 %2964
      %2966 = vrot.lane.b32.xlu0 %v740, 60
      %v2967 = vpop.permute.xlu0 %2966
      %2968 = vrot.lane.b32.xlu0 %v934, 60
      %v2969 = vpop.permute.xlu0 %2968
      %v3002 = vsel %vm203, %v171, %v1259
      %v3003 = vsel %vm203, %v172, %v1261
      %v3004 = vsel %vm203, %v173, %v1263
      %v3005 = vsel %vm203, %v174, %v1265
      %v3006 = vsel %vm203, %v175, %v1267
      %v3007 = vsel %vm203, %v176, %v1269
      %v3008 = vsel %vm203, %v177, %v1271
      %v3009 = vsel %vm203, %v178, %v1273
      %v3010 = vsel %vm203, %v179, %v1275
      %v3011 = vsel %vm203, %v180, %v1277
      %v3012 = vsel %vm203, %v181, %v1279
      %v3013 = vsel %vm203, %v182, %v1281
      %v3014 = vsel %vm203, %v183, %v1283
      %v3015 = vsel %vm203, %v184, %v1285
      %v3016 = vsel %vm203, %v185, %v1287
      %v3017 = vsel %vm203, %v186, %v1289
      %v3018 = vsel %vm203, %v187, %v1291
      %v3019 = vsel %vm203, %v188, %v1293
      %v3020 = vsel %vm203, %v189, %v1295
      %v3021 = vsel %vm203, %v190, %v1297
      %v3022 = vsel %vm203, %v191, %v1299
      %v3023 = vsel %vm203, %v192, %v1301
      %v3024 = vsel %vm203, %v193, %v1303
      %v3025 = vsel %vm203, %v194, %v1305
      %v3026 = vsel %vm203, %v195, %v1307
      %v3027 = vsel %vm203, %v196, %v1309
      %v3028 = vsel %vm203, %v197, %v1311
      %v3029 = vsel %vm203, %v198, %v1313
      %v3030 = vsel %vm203, %v199, %v1315
      %v3031 = vsel %vm203, %v200, %v1317
      %v3032 = vsel %vm203, %v201, %v1319
      %v3033 = vsel %vm203, %v202, %v1321
      %vm3034 = vcmask 64512
      %v3035 = vsel %vm3034, %v3002, %v1387
      %v3036 = vsel %vm3034, %v3003, %v1389
      %v3037 = vsel %vm3034, %v3004, %v1391
      %v3038 = vsel %vm3034, %v3005, %v1393
      %v3039 = vsel %vm3034, %v3006, %v1395
      %v3040 = vsel %vm3034, %v3007, %v1397
      %v3041 = vsel %vm3034, %v3008, %v1399
      %v3042 = vsel %vm3034, %v3009, %v1401
      %v3043 = vsel %vm3034, %v3010, %v1403
      %v3044 = vsel %vm3034, %v3011, %v1405
      %v3045 = vsel %vm3034, %v3012, %v1407
      %v3046 = vsel %vm3034, %v3013, %v1409
      %v3047 = vsel %vm3034, %v3014, %v1411
      %v3048 = vsel %vm3034, %v3015, %v1413
      %v3049 = vsel %vm3034, %v3016, %v1415
      %v3050 = vsel %vm3034, %v3017, %v1417
      %v3051 = vsel %vm3034, %v3018, %v1419
      %v3052 = vsel %vm3034, %v3019, %v1421
      %v3053 = vsel %vm3034, %v3020, %v1423
      %v3054 = vsel %vm3034, %v3021, %v1425
      %v3055 = vsel %vm3034, %v3022, %v1427
      %v3056 = vsel %vm3034, %v3023, %v1429
      %v3057 = vsel %vm3034, %v3024, %v1431
      %v3058 = vsel %vm3034, %v3025, %v1433
      %v3059 = vsel %vm3034, %v3026, %v1435
      %v3060 = vsel %vm3034, %v3027, %v1437
      %v3061 = vsel %vm3034, %v3028, %v1439
      %v3062 = vsel %vm3034, %v3029, %v1441
      %v3063 = vsel %vm3034, %v3030, %v1443
      %v3064 = vsel %vm3034, %v3031, %v1445
      %v3065 = vsel %vm3034, %v3032, %v1447
      %v3066 = vsel %vm3034, %v3033, %v1449
      %vm3067 = vcmask 97280
      %v3068 = vsel %vm3067, %v3035, %v1499
      %v3069 = vsel %vm3067, %v3036, %v1501
      %v3070 = vsel %vm3067, %v3037, %v1503
      %v3071 = vsel %vm3067, %v3038, %v1505
      %v3072 = vsel %vm3067, %v3039, %v1507
      %v3073 = vsel %vm3067, %v3040, %v1509
      %v3074 = vsel %vm3067, %v3041, %v1511
      %v3075 = vsel %vm3067, %v3042, %v1513
      %v3076 = vsel %vm3067, %v3043, %v1515
      %v3077 = vsel %vm3067, %v3044, %v1517
      %v3078 = vsel %vm3067, %v3045, %v1519
      %v3079 = vsel %vm3067, %v3046, %v1521
      %v3080 = vsel %vm3067, %v3047, %v1523
      %v3081 = vsel %vm3067, %v3048, %v1525
      %v3082 = vsel %vm3067, %v3049, %v1527
      %v3083 = vsel %vm3067, %v3050, %v1529
      %v3084 = vsel %vm3067, %v3051, %v1531
      %v3085 = vsel %vm3067, %v3052, %v1533
      %v3086 = vsel %vm3067, %v3053, %v1535
      %v3087 = vsel %vm3067, %v3054, %v1537
      %v3088 = vsel %vm3067, %v3055, %v1539
      %v3089 = vsel %vm3067, %v3056, %v1541
      %v3090 = vsel %vm3067, %v3057, %v1543
      %v3091 = vsel %vm3067, %v3058, %v1545
      %v3092 = vsel %vm3067, %v3059, %v1547
      %v3093 = vsel %vm3067, %v3060, %v1549
      %v3094 = vsel %vm3067, %v3061, %v1551
      %v3095 = vsel %vm3067, %v3062, %v1553
      %v3096 = vsel %vm3067, %v3063, %v1555
      %v3097 = vsel %vm3067, %v3064, %v1557
      %v3098 = vsel %vm3067, %v3065, %v1559
      %v3099 = vsel %vm3067, %v3066, %v1561
      %vm3100 = vcmask 130048
      %v3101 = vsel %vm3100, %v3068, %v1627
      %v3102 = vsel %vm3100, %v3069, %v1629
      %v3103 = vsel %vm3100, %v3070, %v1631
      %v3104 = vsel %vm3100, %v3071, %v1633
      %v3105 = vsel %vm3100, %v3072, %v1635
      %v3106 = vsel %vm3100, %v3073, %v1637
      %v3107 = vsel %vm3100, %v3074, %v1639
      %v3108 = vsel %vm3100, %v3075, %v1641
      %v3109 = vsel %vm3100, %v3076, %v1643
      %v3110 = vsel %vm3100, %v3077, %v1645
      %v3111 = vsel %vm3100, %v3078, %v1647
      %v3112 = vsel %vm3100, %v3079, %v1649
      %v3113 = vsel %vm3100, %v3080, %v1651
      %v3114 = vsel %vm3100, %v3081, %v1653
      %v3115 = vsel %vm3100, %v3082, %v1655
      %v3116 = vsel %vm3100, %v3083, %v1657
      %v3117 = vsel %vm3100, %v3084, %v1659
      %v3118 = vsel %vm3100, %v3085, %v1661
      %v3119 = vsel %vm3100, %v3086, %v1663
      %v3120 = vsel %vm3100, %v3087, %v1665
      %v3121 = vsel %vm3100, %v3088, %v1667
      %v3122 = vsel %vm3100, %v3089, %v1669
      %v3123 = vsel %vm3100, %v3090, %v1671
      %v3124 = vsel %vm3100, %v3091, %v1673
      %v3125 = vsel %vm3100, %v3092, %v1675
      %v3126 = vsel %vm3100, %v3093, %v1677
      %v3127 = vsel %vm3100, %v3094, %v1679
      %v3128 = vsel %vm3100, %v3095, %v1681
      %v3129 = vsel %vm3100, %v3096, %v1683
      %v3130 = vsel %vm3100, %v3097, %v1685
      %v3131 = vsel %vm3100, %v3098, %v1687
      %v3132 = vsel %vm3100, %v3099, %v1689
      %vm3133 = vcmask 162816
      %v3134 = vsel %vm3133, %v3101, %v1755
      %v3135 = vsel %vm3133, %v3102, %v1757
      %v3136 = vsel %vm3133, %v3103, %v1759
      %v3137 = vsel %vm3133, %v3104, %v1761
      %v3138 = vsel %vm3133, %v3105, %v1763
      %v3139 = vsel %vm3133, %v3106, %v1765
      %v3140 = vsel %vm3133, %v3107, %v1767
      %v3141 = vsel %vm3133, %v3108, %v1769
      %v3142 = vsel %vm3133, %v3109, %v1771
      %v3143 = vsel %vm3133, %v3110, %v1773
      %v3144 = vsel %vm3133, %v3111, %v1775
      %v3145 = vsel %vm3133, %v3112, %v1777
      %v3146 = vsel %vm3133, %v3113, %v1779
      %v3147 = vsel %vm3133, %v3114, %v1781
      %v3148 = vsel %vm3133, %v3115, %v1783
      %v3149 = vsel %vm3133, %v3116, %v1785
      %v3150 = vsel %vm3133, %v3117, %v1787
      %v3151 = vsel %vm3133, %v3118, %v1789
      %v3152 = vsel %vm3133, %v3119, %v1791
      %v3153 = vsel %vm3133, %v3120, %v1793
      %v3154 = vsel %vm3133, %v3121, %v1795
      %v3155 = vsel %vm3133, %v3122, %v1797
      %v3156 = vsel %vm3133, %v3123, %v1799
      %v3157 = vsel %vm3133, %v3124, %v1801
      %v3158 = vsel %vm3133, %v3125, %v1803
      %v3159 = vsel %vm3133, %v3126, %v1805
      %v3160 = vsel %vm3133, %v3127, %v1807
      %v3161 = vsel %vm3133, %v3128, %v1809
      %v3162 = vsel %vm3133, %v3129, %v1811
      %v3163 = vsel %vm3133, %v3130, %v1813
      %v3164 = vsel %vm3133, %v3131, %v1815
      %v3165 = vsel %vm3133, %v3132, %v1817
      %vm3166 = vcmask 195584
      %v3167 = vsel %vm3166, %v3134, %v1867
      %v3168 = vsel %vm3166, %v3135, %v1869
      %v3169 = vsel %vm3166, %v3136, %v1871
      %v3170 = vsel %vm3166, %v3137, %v1873
      %v3171 = vsel %vm3166, %v3138, %v1875
      %v3172 = vsel %vm3166, %v3139, %v1877
      %v3173 = vsel %vm3166, %v3140, %v1879
      %v3174 = vsel %vm3166, %v3141, %v1881
      %v3175 = vsel %vm3166, %v3142, %v1883
      %v3176 = vsel %vm3166, %v3143, %v1885
      %v3177 = vsel %vm3166, %v3144, %v1887
      %v3178 = vsel %vm3166, %v3145, %v1889
      %v3179 = vsel %vm3166, %v3146, %v1891
      %v3180 = vsel %vm3166, %v3147, %v1893
      %v3181 = vsel %vm3166, %v3148, %v1895
      %v3182 = vsel %vm3166, %v3149, %v1897
      %v3183 = vsel %vm3166, %v3150, %v1899
      %v3184 = vsel %vm3166, %v3151, %v1901
      %v3185 = vsel %vm3166, %v3152, %v1903
      %v3186 = vsel %vm3166, %v3153, %v1905
      %v3187 = vsel %vm3166, %v3154, %v1907
      %v3188 = vsel %vm3166, %v3155, %v1909
      %v3189 = vsel %vm3166, %v3156, %v1911
      %v3190 = vsel %vm3166, %v3157, %v1913
      %v3191 = vsel %vm3166, %v3158, %v1915
      %v3192 = vsel %vm3166, %v3159, %v1917
      %v3193 = vsel %vm3166, %v3160, %v1919
      %v3194 = vsel %vm3166, %v3161, %v1921
      %v3195 = vsel %vm3166, %v3162, %v1923
      %v3196 = vsel %vm3166, %v3163, %v1925
      %v3197 = vsel %vm3166, %v3164, %v1927
      %v3198 = vsel %vm3166, %v3165, %v1929
      %vm3199 = vcmask 228352
      %v3200 = vsel %vm3199, %v3167, %v1995
      %v3201 = vsel %vm3199, %v3168, %v1997
      %v3202 = vsel %vm3199, %v3169, %v1999
      %v3203 = vsel %vm3199, %v3170, %v2001
      %v3204 = vsel %vm3199, %v3171, %v2003
      %v3205 = vsel %vm3199, %v3172, %v2005
      %v3206 = vsel %vm3199, %v3173, %v2007
      %v3207 = vsel %vm3199, %v3174, %v2009
      %v3208 = vsel %vm3199, %v3175, %v2011
      %v3209 = vsel %vm3199, %v3176, %v2013
      %v3210 = vsel %vm3199, %v3177, %v2015
      %v3211 = vsel %vm3199, %v3178, %v2017
      %v3212 = vsel %vm3199, %v3179, %v2019
      %v3213 = vsel %vm3199, %v3180, %v2021
      %v3214 = vsel %vm3199, %v3181, %v2023
      %v3215 = vsel %vm3199, %v3182, %v2025
      %v3216 = vsel %vm3199, %v3183, %v2027
      %v3217 = vsel %vm3199, %v3184, %v2029
      %v3218 = vsel %vm3199, %v3185, %v2031
      %v3219 = vsel %vm3199, %v3186, %v2033
      %v3220 = vsel %vm3199, %v3187, %v2035
      %v3221 = vsel %vm3199, %v3188, %v2037
      %v3222 = vsel %vm3199, %v3189, %v2039
      %v3223 = vsel %vm3199, %v3190, %v2041
      %v3224 = vsel %vm3199, %v3191, %v2043
      %v3225 = vsel %vm3199, %v3192, %v2045
      %v3226 = vsel %vm3199, %v3193, %v2047
      %v3227 = vsel %vm3199, %v3194, %v2049
      %v3228 = vsel %vm3199, %v3195, %v2051
      %v3229 = vsel %vm3199, %v3196, %v2053
      %v3230 = vsel %vm3199, %v3197, %v2055
      %v3231 = vsel %vm3199, %v3198, %v2057
      %vm3232 = vcmask 261120
      %v3233 = vsel %vm3232, %v3200, %v2123
      %v3234 = vsel %vm3232, %v3201, %v2125
      %v3235 = vsel %vm3232, %v3202, %v2127
      %v3236 = vsel %vm3232, %v3203, %v2129
      %v3237 = vsel %vm3232, %v3204, %v2131
      %v3238 = vsel %vm3232, %v3205, %v2133
      %v3239 = vsel %vm3232, %v3206, %v2135
      %v3240 = vsel %vm3232, %v3207, %v2137
      %v3241 = vsel %vm3232, %v3208, %v2139
      %v3242 = vsel %vm3232, %v3209, %v2141
      %v3243 = vsel %vm3232, %v3210, %v2143
      %v3244 = vsel %vm3232, %v3211, %v2145
      %v3245 = vsel %vm3232, %v3212, %v2147
      %v3246 = vsel %vm3232, %v3213, %v2149
      %v3247 = vsel %vm3232, %v3214, %v2151
      %v3248 = vsel %vm3232, %v3215, %v2153
      %v3249 = vsel %vm3232, %v3216, %v2155
      %v3250 = vsel %vm3232, %v3217, %v2157
      %v3251 = vsel %vm3232, %v3218, %v2159
      %v3252 = vsel %vm3232, %v3219, %v2161
      %v3253 = vsel %vm3232, %v3220, %v2163
      %v3254 = vsel %vm3232, %v3221, %v2165
      %v3255 = vsel %vm3232, %v3222, %v2167
      %v3256 = vsel %vm3232, %v3223, %v2169
      %v3257 = vsel %vm3232, %v3224, %v2171
      %v3258 = vsel %vm3232, %v3225, %v2173
      %v3259 = vsel %vm3232, %v3226, %v2175
      %v3260 = vsel %vm3232, %v3227, %v2177
      %v3261 = vsel %vm3232, %v3228, %v2179
      %v3262 = vsel %vm3232, %v3229, %v2181
      %v3263 = vsel %vm3232, %v3230, %v2183
      %v3264 = vsel %vm3232, %v3231, %v2185
      %vm3265 = vcmask 293888
      %v3266 = vsel %vm3265, %v3233, %v2235
      %v3267 = vsel %vm3265, %v3234, %v2237
      %v3268 = vsel %vm3265, %v3235, %v2239
      %v3269 = vsel %vm3265, %v3236, %v2241
      %v3270 = vsel %vm3265, %v3237, %v2243
      %v3271 = vsel %vm3265, %v3238, %v2245
      %v3272 = vsel %vm3265, %v3239, %v2247
      %v3273 = vsel %vm3265, %v3240, %v2249
      %v3274 = vsel %vm3265, %v3241, %v2251
      %v3275 = vsel %vm3265, %v3242, %v2253
      %v3276 = vsel %vm3265, %v3243, %v2255
      %v3277 = vsel %vm3265, %v3244, %v2257
      %v3278 = vsel %vm3265, %v3245, %v2259
      %v3279 = vsel %vm3265, %v3246, %v2261
      %v3280 = vsel %vm3265, %v3247, %v2263
      %v3281 = vsel %vm3265, %v3248, %v2265
      %v3282 = vsel %vm3265, %v3249, %v2267
      %v3283 = vsel %vm3265, %v3250, %v2269
      %v3284 = vsel %vm3265, %v3251, %v2271
      %v3285 = vsel %vm3265, %v3252, %v2273
      %v3286 = vsel %vm3265, %v3253, %v2275
      %v3287 = vsel %vm3265, %v3254, %v2277
      %v3288 = vsel %vm3265, %v3255, %v2279
      %v3289 = vsel %vm3265, %v3256, %v2281
      %v3290 = vsel %vm3265, %v3257, %v2283
      %v3291 = vsel %vm3265, %v3258, %v2285
      %v3292 = vsel %vm3265, %v3259, %v2287
      %v3293 = vsel %vm3265, %v3260, %v2289
      %v3294 = vsel %vm3265, %v3261, %v2291
      %v3295 = vsel %vm3265, %v3262, %v2293
      %v3296 = vsel %vm3265, %v3263, %v2295
      %v3297 = vsel %vm3265, %v3264, %v2297
      %vm3298 = vcmask 326656
      %v3299 = vsel %vm3298, %v3266, %v2363
      %v3300 = vsel %vm3298, %v3267, %v2365
      %v3301 = vsel %vm3298, %v3268, %v2367
      %v3302 = vsel %vm3298, %v3269, %v2369
      %v3303 = vsel %vm3298, %v3270, %v2371
      %v3304 = vsel %vm3298, %v3271, %v2373
      %v3305 = vsel %vm3298, %v3272, %v2375
      %v3306 = vsel %vm3298, %v3273, %v2377
      %v3307 = vsel %vm3298, %v3274, %v2379
      %v3308 = vsel %vm3298, %v3275, %v2381
      %v3309 = vsel %vm3298, %v3276, %v2383
      %v3310 = vsel %vm3298, %v3277, %v2385
      %v3311 = vsel %vm3298, %v3278, %v2387
      %v3312 = vsel %vm3298, %v3279, %v2389
      %v3313 = vsel %vm3298, %v3280, %v2391
      %v3314 = vsel %vm3298, %v3281, %v2393
      %v3315 = vsel %vm3298, %v3282, %v2395
      %v3316 = vsel %vm3298, %v3283, %v2397
      %v3317 = vsel %vm3298, %v3284, %v2399
      %v3318 = vsel %vm3298, %v3285, %v2401
      %v3319 = vsel %vm3298, %v3286, %v2403
      %v3320 = vsel %vm3298, %v3287, %v2405
      %v3321 = vsel %vm3298, %v3288, %v2407
      %v3322 = vsel %vm3298, %v3289, %v2409
      %v3323 = vsel %vm3298, %v3290, %v2411
      %v3324 = vsel %vm3298, %v3291, %v2413
      %v3325 = vsel %vm3298, %v3292, %v2415
      %v3326 = vsel %vm3298, %v3293, %v2417
      %v3327 = vsel %vm3298, %v3294, %v2419
      %v3328 = vsel %vm3298, %v3295, %v2421
      %v3329 = vsel %vm3298, %v3296, %v2423
      %v3330 = vsel %vm3298, %v3297, %v2425
      %vm3331 = vcmask 359424
      %v3332 = vsel %vm3331, %v3299, %v2475
      %v3333 = vsel %vm3331, %v3300, %v2477
      %v3334 = vsel %vm3331, %v3301, %v2479
      %v3335 = vsel %vm3331, %v3302, %v2481
      %v3336 = vsel %vm3331, %v3303, %v2483
      %v3337 = vsel %vm3331, %v3304, %v2485
      %v3338 = vsel %vm3331, %v3305, %v2487
      %v3339 = vsel %vm3331, %v3306, %v2489
      %v3340 = vsel %vm3331, %v3307, %v2491
      %v3341 = vsel %vm3331, %v3308, %v2493
      %v3342 = vsel %vm3331, %v3309, %v2495
      %v3343 = vsel %vm3331, %v3310, %v2497
      %v3344 = vsel %vm3331, %v3311, %v2499
      %v3345 = vsel %vm3331, %v3312, %v2501
      %v3346 = vsel %vm3331, %v3313, %v2503
      %v3347 = vsel %vm3331, %v3314, %v2505
      %v3348 = vsel %vm3331, %v3315, %v2507
      %v3349 = vsel %vm3331, %v3316, %v2509
      %v3350 = vsel %vm3331, %v3317, %v2511
      %v3351 = vsel %vm3331, %v3318, %v2513
      %v3352 = vsel %vm3331, %v3319, %v2515
      %v3353 = vsel %vm3331, %v3320, %v2517
      %v3354 = vsel %vm3331, %v3321, %v2519
      %v3355 = vsel %vm3331, %v3322, %v2521
      %v3356 = vsel %vm3331, %v3323, %v2523
      %v3357 = vsel %vm3331, %v3324, %v2525
      %v3358 = vsel %vm3331, %v3325, %v2527
      %v3359 = vsel %vm3331, %v3326, %v2529
      %v3360 = vsel %vm3331, %v3327, %v2531
      %v3361 = vsel %vm3331, %v3328, %v2533
      %v3362 = vsel %vm3331, %v3329, %v2535
      %v3363 = vsel %vm3331, %v3330, %v2537
      %vm3364 = vcmask 392192
      %v3365 = vsel %vm3364, %v3332, %v2587
      %v3366 = vsel %vm3364, %v3333, %v2589
      %v3367 = vsel %vm3364, %v3334, %v2591
      %v3368 = vsel %vm3364, %v3335, %v2593
      %v3369 = vsel %vm3364, %v3336, %v2595
      %v3370 = vsel %vm3364, %v3337, %v2597
      %v3371 = vsel %vm3364, %v3338, %v2599
      %v3372 = vsel %vm3364, %v3339, %v2601
      %v3373 = vsel %vm3364, %v3340, %v2603
      %v3374 = vsel %vm3364, %v3341, %v2605
      %v3375 = vsel %vm3364, %v3342, %v2607
      %v3376 = vsel %vm3364, %v3343, %v2609
      %v3377 = vsel %vm3364, %v3344, %v2611
      %v3378 = vsel %vm3364, %v3345, %v2613
      %v3379 = vsel %vm3364, %v3346, %v2615
      %v3380 = vsel %vm3364, %v3347, %v2617
      %v3381 = vsel %vm3364, %v3348, %v2619
      %v3382 = vsel %vm3364, %v3349, %v2621
      %v3383 = vsel %vm3364, %v3350, %v2623
      %v3384 = vsel %vm3364, %v3351, %v2625
      %v3385 = vsel %vm3364, %v3352, %v2627
      %v3386 = vsel %vm3364, %v3353, %v2629
      %v3387 = vsel %vm3364, %v3354, %v2631
      %v3388 = vsel %vm3364, %v3355, %v2633
      %v3389 = vsel %vm3364, %v3356, %v2635
      %v3390 = vsel %vm3364, %v3357, %v2637
      %v3391 = vsel %vm3364, %v3358, %v2639
      %v3392 = vsel %vm3364, %v3359, %v2641
      %v3393 = vsel %vm3364, %v3360, %v2643
      %v3394 = vsel %vm3364, %v3361, %v2645
      %v3395 = vsel %vm3364, %v3362, %v2647
      %v3396 = vsel %vm3364, %v3363, %v2649
      %vm3397 = vcmask 424960
      %v3398 = vsel %vm3397, %v3365, %v2699
      %v3399 = vsel %vm3397, %v3366, %v2701
      %v3400 = vsel %vm3397, %v3367, %v2703
      %v3401 = vsel %vm3397, %v3368, %v2705
      %v3402 = vsel %vm3397, %v3369, %v2707
      %v3403 = vsel %vm3397, %v3370, %v2709
      %v3404 = vsel %vm3397, %v3371, %v2711
      %v3405 = vsel %vm3397, %v3372, %v2713
      %v3406 = vsel %vm3397, %v3373, %v2715
      %v3407 = vsel %vm3397, %v3374, %v2717
      %v3408 = vsel %vm3397, %v3375, %v2719
      %v3409 = vsel %vm3397, %v3376, %v2721
      %v3410 = vsel %vm3397, %v3377, %v2723
      %v3411 = vsel %vm3397, %v3378, %v2725
      %v3412 = vsel %vm3397, %v3379, %v2727
      %v3413 = vsel %vm3397, %v3380, %v2729
      %v3414 = vsel %vm3397, %v3381, %v2731
      %v3415 = vsel %vm3397, %v3382, %v2733
      %v3416 = vsel %vm3397, %v3383, %v2735
      %v3417 = vsel %vm3397, %v3384, %v2737
      %v3418 = vsel %vm3397, %v3385, %v2739
      %v3419 = vsel %vm3397, %v3386, %v2741
      %v3420 = vsel %vm3397, %v3387, %v2743
      %v3421 = vsel %vm3397, %v3388, %v2745
      %v3422 = vsel %vm3397, %v3389, %v2747
      %v3423 = vsel %vm3397, %v3390, %v2749
      %v3424 = vsel %vm3397, %v3391, %v2751
      %v3425 = vsel %vm3397, %v3392, %v2753
      %v3426 = vsel %vm3397, %v3393, %v2755
      %v3427 = vsel %vm3397, %v3394, %v2757
      %v3428 = vsel %vm3397, %v3395, %v2759
      %v3429 = vsel %vm3397, %v3396, %v2761
      %vm3430 = vcmask 457728
      %v3431 = vsel %vm3430, %v3398, %v2795
      %v3432 = vsel %vm3430, %v3399, %v2797
      %v3433 = vsel %vm3430, %v3400, %v2799
      %v3434 = vsel %vm3430, %v3401, %v2801
      %v3435 = vsel %vm3430, %v3402, %v2803
      %v3436 = vsel %vm3430, %v3403, %v2805
      %v3437 = vsel %vm3430, %v3404, %v2807
      %v3438 = vsel %vm3430, %v3405, %v2809
      %v3439 = vsel %vm3430, %v3406, %v2811
      %v3440 = vsel %vm3430, %v3407, %v2813
      %v3441 = vsel %vm3430, %v3408, %v2815
      %v3442 = vsel %vm3430, %v3409, %v2817
      %v3443 = vsel %vm3430, %v3410, %v2819
      %v3444 = vsel %vm3430, %v3411, %v2821
      %v3445 = vsel %vm3430, %v3412, %v2823
      %v3446 = vsel %vm3430, %v3413, %v2825
      %v3447 = vsel %vm3430, %v3414, %v2827
      %v3448 = vsel %vm3430, %v3415, %v2829
      %v3449 = vsel %vm3430, %v3416, %v2831
      %v3450 = vsel %vm3430, %v3417, %v2833
      %v3451 = vsel %vm3430, %v3418, %v2835
      %v3452 = vsel %vm3430, %v3419, %v2837
      %v3453 = vsel %vm3430, %v3420, %v2839
      %v3454 = vsel %vm3430, %v3421, %v2841
      %v3455 = vsel %vm3430, %v3422, %v2843
      %v3456 = vsel %vm3430, %v3423, %v2845
      %v3457 = vsel %vm3430, %v3424, %v2847
      %v3458 = vsel %vm3430, %v3425, %v2849
      %v3459 = vsel %vm3430, %v3426, %v2851
      %v3460 = vsel %vm3430, %v3427, %v2853
      %v3461 = vsel %vm3430, %v3428, %v2855
      %v3462 = vsel %vm3430, %v3429, %v2857
      %vm3463 = vcmask 490496
      %v3464 = vsel %vm3463, %v3431, %v2907
      %v3465 = vsel %vm3463, %v3432, %v2909
      %v3466 = vsel %vm3463, %v3433, %v2911
      %v3467 = vsel %vm3463, %v3434, %v2913
      %v3468 = vsel %vm3463, %v3435, %v2915
      %v3469 = vsel %vm3463, %v3436, %v2917
      %v3470 = vsel %vm3463, %v3437, %v2919
      %v3471 = vsel %vm3463, %v3438, %v2921
      %v3472 = vsel %vm3463, %v3439, %v2923
      %v3473 = vsel %vm3463, %v3440, %v2925
      %v3474 = vsel %vm3463, %v3441, %v2927
      %v3475 = vsel %vm3463, %v3442, %v2929
      %v3476 = vsel %vm3463, %v3443, %v2931
      %v3477 = vsel %vm3463, %v3444, %v2933
      %v3478 = vsel %vm3463, %v3445, %v2935
      %v3479 = vsel %vm3463, %v3446, %v2937
      %v3480 = vsel %vm3463, %v3447, %v2939
      %v3481 = vsel %vm3463, %v3448, %v2941
      %v3482 = vsel %vm3463, %v3449, %v2943
      %v3483 = vsel %vm3463, %v3450, %v2945
      %v3484 = vsel %vm3463, %v3451, %v2947
      %v3485 = vsel %vm3463, %v3452, %v2949
      %v3486 = vsel %vm3463, %v3453, %v2951
      %v3487 = vsel %vm3463, %v3454, %v2953
      %v3488 = vsel %vm3463, %v3455, %v2955
      %v3489 = vsel %vm3463, %v3456, %v2957
      %v3490 = vsel %vm3463, %v3457, %v2959
      %v3491 = vsel %vm3463, %v3458, %v2961
      %v3492 = vsel %vm3463, %v3459, %v2963
      %v3493 = vsel %vm3463, %v3460, %v2965
      %v3494 = vsel %vm3463, %v3461, %v2967
      %v3495 = vsel %vm3463, %v3462, %v2969
      %3528 = vrot.lane.b32.xlu0 %v937, 4
      %v3529 = vpop.permute.xlu0 %3528
      %3530 = vrot.lane.b32.xlu0 %v968, 4
      %v3531 = vpop.permute.xlu0 %3530
      %3532 = vrot.lane.b32.xlu0 %v939, 4
      %v3533 = vpop.permute.xlu0 %3532
      %3534 = vrot.lane.b32.xlu0 %v969, 4
      %v3535 = vpop.permute.xlu0 %3534
      %3536 = vrot.lane.b32.xlu0 %v941, 4
      %v3537 = vpop.permute.xlu0 %3536
      %3538 = vrot.lane.b32.xlu0 %v970, 4
      %v3539 = vpop.permute.xlu0 %3538
      %3540 = vrot.lane.b32.xlu0 %v943, 4
      %v3541 = vpop.permute.xlu0 %3540
      %3542 = vrot.lane.b32.xlu0 %v971, 4
      %v3543 = vpop.permute.xlu0 %3542
      %3544 = vrot.lane.b32.xlu0 %v945, 4
      %v3545 = vpop.permute.xlu0 %3544
      %3546 = vrot.lane.b32.xlu0 %v972, 4
      %v3547 = vpop.permute.xlu0 %3546
      %3548 = vrot.lane.b32.xlu0 %v947, 4
      %v3549 = vpop.permute.xlu0 %3548
      %3550 = vrot.lane.b32.xlu0 %v973, 4
      %v3551 = vpop.permute.xlu0 %3550
      %3552 = vrot.lane.b32.xlu0 %v949, 4
      %v3553 = vpop.permute.xlu0 %3552
      %3554 = vrot.lane.b32.xlu0 %v974, 4
      %v3555 = vpop.permute.xlu0 %3554
      %3556 = vrot.lane.b32.xlu0 %v951, 4
      %v3557 = vpop.permute.xlu0 %3556
      %3558 = vrot.lane.b32.xlu0 %v975, 4
      %v3559 = vpop.permute.xlu0 %3558
      %3560 = vrot.lane.b32.xlu0 %v953, 4
      %v3561 = vpop.permute.xlu0 %3560
      %3562 = vrot.lane.b32.xlu0 %v976, 4
      %v3563 = vpop.permute.xlu0 %3562
      %3564 = vrot.lane.b32.xlu0 %v955, 4
      %v3565 = vpop.permute.xlu0 %3564
      %3566 = vrot.lane.b32.xlu0 %v977, 4
      %v3567 = vpop.permute.xlu0 %3566
      %3568 = vrot.lane.b32.xlu0 %v957, 4
      %v3569 = vpop.permute.xlu0 %3568
      %3570 = vrot.lane.b32.xlu0 %v978, 4
      %v3571 = vpop.permute.xlu0 %3570
      %3572 = vrot.lane.b32.xlu0 %v959, 4
      %v3573 = vpop.permute.xlu0 %3572
      %3574 = vrot.lane.b32.xlu0 %v979, 4
      %v3575 = vpop.permute.xlu0 %3574
      %3576 = vrot.lane.b32.xlu0 %v961, 4
      %v3577 = vpop.permute.xlu0 %3576
      %3578 = vrot.lane.b32.xlu0 %v980, 4
      %v3579 = vpop.permute.xlu0 %3578
      %3580 = vrot.lane.b32.xlu0 %v963, 4
      %v3581 = vpop.permute.xlu0 %3580
      %3582 = vrot.lane.b32.xlu0 %v981, 4
      %v3583 = vpop.permute.xlu0 %3582
      %3584 = vrot.lane.b32.xlu0 %v965, 4
      %v3585 = vpop.permute.xlu0 %3584
      %3586 = vrot.lane.b32.xlu0 %v982, 4
      %v3587 = vpop.permute.xlu0 %3586
      %3588 = vrot.lane.b32.xlu0 %v967, 4
      %v3589 = vpop.permute.xlu0 %3588
      %3590 = vrot.lane.b32.xlu0 %v983, 4
      %v3591 = vpop.permute.xlu0 %3590
      %3640 = vrot.lane.b32.xlu0 %v968, 8
      %v3641 = vpop.permute.xlu0 %3640
      %3642 = vrot.lane.b32.xlu0 %v984, 8
      %v3643 = vpop.permute.xlu0 %3642
      %3644 = vrot.lane.b32.xlu0 %v969, 8
      %v3645 = vpop.permute.xlu0 %3644
      %3646 = vrot.lane.b32.xlu0 %v985, 8
      %v3647 = vpop.permute.xlu0 %3646
      %3648 = vrot.lane.b32.xlu0 %v970, 8
      %v3649 = vpop.permute.xlu0 %3648
      %3650 = vrot.lane.b32.xlu0 %v986, 8
      %v3651 = vpop.permute.xlu0 %3650
      %3652 = vrot.lane.b32.xlu0 %v971, 8
      %v3653 = vpop.permute.xlu0 %3652
      %3654 = vrot.lane.b32.xlu0 %v987, 8
      %v3655 = vpop.permute.xlu0 %3654
      %3656 = vrot.lane.b32.xlu0 %v972, 8
      %v3657 = vpop.permute.xlu0 %3656
      %3658 = vrot.lane.b32.xlu0 %v988, 8
      %v3659 = vpop.permute.xlu0 %3658
      %3660 = vrot.lane.b32.xlu0 %v973, 8
      %v3661 = vpop.permute.xlu0 %3660
      %3662 = vrot.lane.b32.xlu0 %v989, 8
      %v3663 = vpop.permute.xlu0 %3662
      %3664 = vrot.lane.b32.xlu0 %v974, 8
      %v3665 = vpop.permute.xlu0 %3664
      %3666 = vrot.lane.b32.xlu0 %v990, 8
      %v3667 = vpop.permute.xlu0 %3666
      %3668 = vrot.lane.b32.xlu0 %v975, 8
      %v3669 = vpop.permute.xlu0 %3668
      %3670 = vrot.lane.b32.xlu0 %v991, 8
      %v3671 = vpop.permute.xlu0 %3670
      %3672 = vrot.lane.b32.xlu0 %v976, 8
      %v3673 = vpop.permute.xlu0 %3672
      %3674 = vrot.lane.b32.xlu0 %v992, 8
      %v3675 = vpop.permute.xlu0 %3674
      %3676 = vrot.lane.b32.xlu0 %v977, 8
      %v3677 = vpop.permute.xlu0 %3676
      %3678 = vrot.lane.b32.xlu0 %v993, 8
      %v3679 = vpop.permute.xlu0 %3678
      %3680 = vrot.lane.b32.xlu0 %v978, 8
      %v3681 = vpop.permute.xlu0 %3680
      %3682 = vrot.lane.b32.xlu0 %v994, 8
      %v3683 = vpop.permute.xlu0 %3682
      %3684 = vrot.lane.b32.xlu0 %v979, 8
      %v3685 = vpop.permute.xlu0 %3684
      %3686 = vrot.lane.b32.xlu0 %v995, 8
      %v3687 = vpop.permute.xlu0 %3686
      %3688 = vrot.lane.b32.xlu0 %v980, 8
      %v3689 = vpop.permute.xlu0 %3688
      %3690 = vrot.lane.b32.xlu0 %v996, 8
      %v3691 = vpop.permute.xlu0 %3690
      %3692 = vrot.lane.b32.xlu0 %v981, 8
      %v3693 = vpop.permute.xlu0 %3692
      %3694 = vrot.lane.b32.xlu0 %v997, 8
      %v3695 = vpop.permute.xlu0 %3694
      %3696 = vrot.lane.b32.xlu0 %v982, 8
      %v3697 = vpop.permute.xlu0 %3696
      %3698 = vrot.lane.b32.xlu0 %v998, 8
      %v3699 = vpop.permute.xlu0 %3698
      %3700 = vrot.lane.b32.xlu0 %v983, 8
      %v3701 = vpop.permute.xlu0 %3700
      %3702 = vrot.lane.b32.xlu0 %v999, 8
      %v3703 = vpop.permute.xlu0 %3702
      %3768 = vrot.lane.b32.xlu0 %v1001, 12
      %v3769 = vpop.permute.xlu0 %3768
      %3770 = vrot.lane.b32.xlu0 %v1002, 12
      %v3771 = vpop.permute.xlu0 %3770
      %3772 = vrot.lane.b32.xlu0 %v1003, 12
      %v3773 = vpop.permute.xlu0 %3772
      %3774 = vrot.lane.b32.xlu0 %v1004, 12
      %v3775 = vpop.permute.xlu0 %3774
      %3776 = vrot.lane.b32.xlu0 %v1005, 12
      %v3777 = vpop.permute.xlu0 %3776
      %3778 = vrot.lane.b32.xlu0 %v1006, 12
      %v3779 = vpop.permute.xlu0 %3778
      %3780 = vrot.lane.b32.xlu0 %v1007, 12
      %v3781 = vpop.permute.xlu0 %3780
      %3782 = vrot.lane.b32.xlu0 %v1008, 12
      %v3783 = vpop.permute.xlu0 %3782
      %3784 = vrot.lane.b32.xlu0 %v1009, 12
      %v3785 = vpop.permute.xlu0 %3784
      %3786 = vrot.lane.b32.xlu0 %v1010, 12
      %v3787 = vpop.permute.xlu0 %3786
      %3788 = vrot.lane.b32.xlu0 %v1011, 12
      %v3789 = vpop.permute.xlu0 %3788
      %3790 = vrot.lane.b32.xlu0 %v1012, 12
      %v3791 = vpop.permute.xlu0 %3790
      %3792 = vrot.lane.b32.xlu0 %v1013, 12
      %v3793 = vpop.permute.xlu0 %3792
      %3794 = vrot.lane.b32.xlu0 %v1014, 12
      %v3795 = vpop.permute.xlu0 %3794
      %3796 = vrot.lane.b32.xlu0 %v1015, 12
      %v3797 = vpop.permute.xlu0 %3796
      %3798 = vrot.lane.b32.xlu0 %v1016, 12
      %v3799 = vpop.permute.xlu0 %3798
      %3800 = vrot.lane.b32.xlu0 %v1017, 12
      %v3801 = vpop.permute.xlu0 %3800
      %3802 = vrot.lane.b32.xlu0 %v1018, 12
      %v3803 = vpop.permute.xlu0 %3802
      %3804 = vrot.lane.b32.xlu0 %v1019, 12
      %v3805 = vpop.permute.xlu0 %3804
      %3806 = vrot.lane.b32.xlu0 %v1020, 12
      %v3807 = vpop.permute.xlu0 %3806
      %3808 = vrot.lane.b32.xlu0 %v1021, 12
      %v3809 = vpop.permute.xlu0 %3808
      %3810 = vrot.lane.b32.xlu0 %v1022, 12
      %v3811 = vpop.permute.xlu0 %3810
      %3812 = vrot.lane.b32.xlu0 %v1023, 12
      %v3813 = vpop.permute.xlu0 %3812
      %3814 = vrot.lane.b32.xlu0 %v1024, 12
      %v3815 = vpop.permute.xlu0 %3814
      %3816 = vrot.lane.b32.xlu0 %v1025, 12
      %v3817 = vpop.permute.xlu0 %3816
      %3818 = vrot.lane.b32.xlu0 %v1026, 12
      %v3819 = vpop.permute.xlu0 %3818
      %3820 = vrot.lane.b32.xlu0 %v1027, 12
      %v3821 = vpop.permute.xlu0 %3820
      %3822 = vrot.lane.b32.xlu0 %v1028, 12
      %v3823 = vpop.permute.xlu0 %3822
      %3824 = vrot.lane.b32.xlu0 %v1029, 12
      %v3825 = vpop.permute.xlu0 %3824
      %3826 = vrot.lane.b32.xlu0 %v1030, 12
      %v3827 = vpop.permute.xlu0 %3826
      %3828 = vrot.lane.b32.xlu0 %v1031, 12
      %v3829 = vpop.permute.xlu0 %3828
      %3830 = vrot.lane.b32.xlu0 %v1032, 12
      %v3831 = vpop.permute.xlu0 %3830
      %3896 = vrot.lane.b32.xlu0 %v1033, 16
      %v3897 = vpop.permute.xlu0 %3896
      %3898 = vrot.lane.b32.xlu0 %v1034, 16
      %v3899 = vpop.permute.xlu0 %3898
      %3900 = vrot.lane.b32.xlu0 %v1035, 16
      %v3901 = vpop.permute.xlu0 %3900
      %3902 = vrot.lane.b32.xlu0 %v1036, 16
      %v3903 = vpop.permute.xlu0 %3902
      %3904 = vrot.lane.b32.xlu0 %v1037, 16
      %v3905 = vpop.permute.xlu0 %3904
      %3906 = vrot.lane.b32.xlu0 %v1038, 16
      %v3907 = vpop.permute.xlu0 %3906
      %3908 = vrot.lane.b32.xlu0 %v1039, 16
      %v3909 = vpop.permute.xlu0 %3908
      %3910 = vrot.lane.b32.xlu0 %v1040, 16
      %v3911 = vpop.permute.xlu0 %3910
      %3912 = vrot.lane.b32.xlu0 %v1041, 16
      %v3913 = vpop.permute.xlu0 %3912
      %3914 = vrot.lane.b32.xlu0 %v1042, 16
      %v3915 = vpop.permute.xlu0 %3914
      %3916 = vrot.lane.b32.xlu0 %v1043, 16
      %v3917 = vpop.permute.xlu0 %3916
      %3918 = vrot.lane.b32.xlu0 %v1044, 16
      %v3919 = vpop.permute.xlu0 %3918
      %3920 = vrot.lane.b32.xlu0 %v1045, 16
      %v3921 = vpop.permute.xlu0 %3920
      %3922 = vrot.lane.b32.xlu0 %v1046, 16
      %v3923 = vpop.permute.xlu0 %3922
      %3924 = vrot.lane.b32.xlu0 %v1047, 16
      %v3925 = vpop.permute.xlu0 %3924
      %3926 = vrot.lane.b32.xlu0 %v1048, 16
      %v3927 = vpop.permute.xlu0 %3926
      %3928 = vrot.lane.b32.xlu0 %v1049, 16
      %v3929 = vpop.permute.xlu0 %3928
      %3930 = vrot.lane.b32.xlu0 %v1050, 16
      %v3931 = vpop.permute.xlu0 %3930
      %3932 = vrot.lane.b32.xlu0 %v1051, 16
      %v3933 = vpop.permute.xlu0 %3932
      %3934 = vrot.lane.b32.xlu0 %v1052, 16
      %v3935 = vpop.permute.xlu0 %3934
      %3936 = vrot.lane.b32.xlu0 %v1053, 16
      %v3937 = vpop.permute.xlu0 %3936
      %3938 = vrot.lane.b32.xlu0 %v1054, 16
      %v3939 = vpop.permute.xlu0 %3938
      %3940 = vrot.lane.b32.xlu0 %v1055, 16
      %v3941 = vpop.permute.xlu0 %3940
      %3942 = vrot.lane.b32.xlu0 %v1056, 16
      %v3943 = vpop.permute.xlu0 %3942
      %3944 = vrot.lane.b32.xlu0 %v1057, 16
      %v3945 = vpop.permute.xlu0 %3944
      %3946 = vrot.lane.b32.xlu0 %v1058, 16
      %v3947 = vpop.permute.xlu0 %3946
      %3948 = vrot.lane.b32.xlu0 %v1059, 16
      %v3949 = vpop.permute.xlu0 %3948
      %3950 = vrot.lane.b32.xlu0 %v1060, 16
      %v3951 = vpop.permute.xlu0 %3950
      %3952 = vrot.lane.b32.xlu0 %v1061, 16
      %v3953 = vpop.permute.xlu0 %3952
      %3954 = vrot.lane.b32.xlu0 %v1062, 16
      %v3955 = vpop.permute.xlu0 %3954
      %3956 = vrot.lane.b32.xlu0 %v1063, 16
      %v3957 = vpop.permute.xlu0 %3956
      %3958 = vrot.lane.b32.xlu0 %v1064, 16
      %v3959 = vpop.permute.xlu0 %3958
      %4024 = vrot.lane.b32.xlu0 %v1065, 20
      %v4025 = vpop.permute.xlu0 %4024
      %4026 = vrot.lane.b32.xlu0 %v1066, 20
      %v4027 = vpop.permute.xlu0 %4026
      %4028 = vrot.lane.b32.xlu0 %v1067, 20
      %v4029 = vpop.permute.xlu0 %4028
      %4030 = vrot.lane.b32.xlu0 %v1068, 20
      %v4031 = vpop.permute.xlu0 %4030
      %4032 = vrot.lane.b32.xlu0 %v1069, 20
      %v4033 = vpop.permute.xlu0 %4032
      %4034 = vrot.lane.b32.xlu0 %v1070, 20
      %v4035 = vpop.permute.xlu0 %4034
      %4036 = vrot.lane.b32.xlu0 %v1071, 20
      %v4037 = vpop.permute.xlu0 %4036
      %4038 = vrot.lane.b32.xlu0 %v1072, 20
      %v4039 = vpop.permute.xlu0 %4038
      %4040 = vrot.lane.b32.xlu0 %v1073, 20
      %v4041 = vpop.permute.xlu0 %4040
      %4042 = vrot.lane.b32.xlu0 %v1074, 20
      %v4043 = vpop.permute.xlu0 %4042
      %4044 = vrot.lane.b32.xlu0 %v1075, 20
      %v4045 = vpop.permute.xlu0 %4044
      %4046 = vrot.lane.b32.xlu0 %v1076, 20
      %v4047 = vpop.permute.xlu0 %4046
      %4048 = vrot.lane.b32.xlu0 %v1077, 20
      %v4049 = vpop.permute.xlu0 %4048
      %4050 = vrot.lane.b32.xlu0 %v1078, 20
      %v4051 = vpop.permute.xlu0 %4050
      %4052 = vrot.lane.b32.xlu0 %v1079, 20
      %v4053 = vpop.permute.xlu0 %4052
      %4054 = vrot.lane.b32.xlu0 %v1080, 20
      %v4055 = vpop.permute.xlu0 %4054
      %4056 = vrot.lane.b32.xlu0 %v1081, 20
      %v4057 = vpop.permute.xlu0 %4056
      %4058 = vrot.lane.b32.xlu0 %v1082, 20
      %v4059 = vpop.permute.xlu0 %4058
      %4060 = vrot.lane.b32.xlu0 %v1083, 20
      %v4061 = vpop.permute.xlu0 %4060
      %4062 = vrot.lane.b32.xlu0 %v1084, 20
      %v4063 = vpop.permute.xlu0 %4062
      %4064 = vrot.lane.b32.xlu0 %v1085, 20
      %v4065 = vpop.permute.xlu0 %4064
      %4066 = vrot.lane.b32.xlu0 %v1086, 20
      %v4067 = vpop.permute.xlu0 %4066
      %4068 = vrot.lane.b32.xlu0 %v1087, 20
      %v4069 = vpop.permute.xlu0 %4068
      %4070 = vrot.lane.b32.xlu0 %v1088, 20
      %v4071 = vpop.permute.xlu0 %4070
      %4072 = vrot.lane.b32.xlu0 %v1089, 20
      %v4073 = vpop.permute.xlu0 %4072
      %4074 = vrot.lane.b32.xlu0 %v1090, 20
      %v4075 = vpop.permute.xlu0 %4074
      %4076 = vrot.lane.b32.xlu0 %v1091, 20
      %v4077 = vpop.permute.xlu0 %4076
      %4078 = vrot.lane.b32.xlu0 %v1092, 20
      %v4079 = vpop.permute.xlu0 %4078
      %4080 = vrot.lane.b32.xlu0 %v1093, 20
      %v4081 = vpop.permute.xlu0 %4080
      %4082 = vrot.lane.b32.xlu0 %v1094, 20
      %v4083 = vpop.permute.xlu0 %4082
      %4084 = vrot.lane.b32.xlu0 %v1095, 20
      %v4085 = vpop.permute.xlu0 %4084
      %4086 = vrot.lane.b32.xlu0 %v1096, 20
      %v4087 = vpop.permute.xlu0 %4086
      %4136 = vrot.lane.b32.xlu0 %v1097, 24
      %v4137 = vpop.permute.xlu0 %4136
      %4138 = vrot.lane.b32.xlu0 %v677, 24
      %v4139 = vpop.permute.xlu0 %4138
      %4140 = vrot.lane.b32.xlu0 %v1098, 24
      %v4141 = vpop.permute.xlu0 %4140
      %4142 = vrot.lane.b32.xlu0 %v679, 24
      %v4143 = vpop.permute.xlu0 %4142
      %4144 = vrot.lane.b32.xlu0 %v1099, 24
      %v4145 = vpop.permute.xlu0 %4144
      %4146 = vrot.lane.b32.xlu0 %v681, 24
      %v4147 = vpop.permute.xlu0 %4146
      %4148 = vrot.lane.b32.xlu0 %v1100, 24
      %v4149 = vpop.permute.xlu0 %4148
      %4150 = vrot.lane.b32.xlu0 %v683, 24
      %v4151 = vpop.permute.xlu0 %4150
      %4152 = vrot.lane.b32.xlu0 %v1101, 24
      %v4153 = vpop.permute.xlu0 %4152
      %4154 = vrot.lane.b32.xlu0 %v685, 24
      %v4155 = vpop.permute.xlu0 %4154
      %4156 = vrot.lane.b32.xlu0 %v1102, 24
      %v4157 = vpop.permute.xlu0 %4156
      %4158 = vrot.lane.b32.xlu0 %v687, 24
      %v4159 = vpop.permute.xlu0 %4158
      %4160 = vrot.lane.b32.xlu0 %v1103, 24
      %v4161 = vpop.permute.xlu0 %4160
      %4162 = vrot.lane.b32.xlu0 %v689, 24
      %v4163 = vpop.permute.xlu0 %4162
      %4164 = vrot.lane.b32.xlu0 %v1104, 24
      %v4165 = vpop.permute.xlu0 %4164
      %4166 = vrot.lane.b32.xlu0 %v691, 24
      %v4167 = vpop.permute.xlu0 %4166
      %4168 = vrot.lane.b32.xlu0 %v1105, 24
      %v4169 = vpop.permute.xlu0 %4168
      %4170 = vrot.lane.b32.xlu0 %v693, 24
      %v4171 = vpop.permute.xlu0 %4170
      %4172 = vrot.lane.b32.xlu0 %v1106, 24
      %v4173 = vpop.permute.xlu0 %4172
      %4174 = vrot.lane.b32.xlu0 %v695, 24
      %v4175 = vpop.permute.xlu0 %4174
      %4176 = vrot.lane.b32.xlu0 %v1107, 24
      %v4177 = vpop.permute.xlu0 %4176
      %4178 = vrot.lane.b32.xlu0 %v697, 24
      %v4179 = vpop.permute.xlu0 %4178
      %4180 = vrot.lane.b32.xlu0 %v1108, 24
      %v4181 = vpop.permute.xlu0 %4180
      %4182 = vrot.lane.b32.xlu0 %v699, 24
      %v4183 = vpop.permute.xlu0 %4182
      %4184 = vrot.lane.b32.xlu0 %v1109, 24
      %v4185 = vpop.permute.xlu0 %4184
      %4186 = vrot.lane.b32.xlu0 %v701, 24
      %v4187 = vpop.permute.xlu0 %4186
      %4188 = vrot.lane.b32.xlu0 %v1110, 24
      %v4189 = vpop.permute.xlu0 %4188
      %4190 = vrot.lane.b32.xlu0 %v703, 24
      %v4191 = vpop.permute.xlu0 %4190
      %4192 = vrot.lane.b32.xlu0 %v1111, 24
      %v4193 = vpop.permute.xlu0 %4192
      %4194 = vrot.lane.b32.xlu0 %v705, 24
      %v4195 = vpop.permute.xlu0 %4194
      %4196 = vrot.lane.b32.xlu0 %v1112, 24
      %v4197 = vpop.permute.xlu0 %4196
      %4198 = vrot.lane.b32.xlu0 %v707, 24
      %v4199 = vpop.permute.xlu0 %4198
      %4232 = vrot.lane.b32.xlu0 %v709, 28
      %v4233 = vpop.permute.xlu0 %4232
      %4234 = vrot.lane.b32.xlu0 %v710, 28
      %v4235 = vpop.permute.xlu0 %4234
      %4236 = vrot.lane.b32.xlu0 %v711, 28
      %v4237 = vpop.permute.xlu0 %4236
      %4238 = vrot.lane.b32.xlu0 %v712, 28
      %v4239 = vpop.permute.xlu0 %4238
      %4240 = vrot.lane.b32.xlu0 %v713, 28
      %v4241 = vpop.permute.xlu0 %4240
      %4242 = vrot.lane.b32.xlu0 %v714, 28
      %v4243 = vpop.permute.xlu0 %4242
      %4244 = vrot.lane.b32.xlu0 %v715, 28
      %v4245 = vpop.permute.xlu0 %4244
      %4246 = vrot.lane.b32.xlu0 %v716, 28
      %v4247 = vpop.permute.xlu0 %4246
      %4248 = vrot.lane.b32.xlu0 %v717, 28
      %v4249 = vpop.permute.xlu0 %4248
      %4250 = vrot.lane.b32.xlu0 %v718, 28
      %v4251 = vpop.permute.xlu0 %4250
      %4252 = vrot.lane.b32.xlu0 %v719, 28
      %v4253 = vpop.permute.xlu0 %4252
      %4254 = vrot.lane.b32.xlu0 %v720, 28
      %v4255 = vpop.permute.xlu0 %4254
      %4256 = vrot.lane.b32.xlu0 %v721, 28
      %v4257 = vpop.permute.xlu0 %4256
      %4258 = vrot.lane.b32.xlu0 %v722, 28
      %v4259 = vpop.permute.xlu0 %4258
      %4260 = vrot.lane.b32.xlu0 %v723, 28
      %v4261 = vpop.permute.xlu0 %4260
      %4262 = vrot.lane.b32.xlu0 %v724, 28
      %v4263 = vpop.permute.xlu0 %4262
      %4264 = vrot.lane.b32.xlu0 %v725, 28
      %v4265 = vpop.permute.xlu0 %4264
      %4266 = vrot.lane.b32.xlu0 %v726, 28
      %v4267 = vpop.permute.xlu0 %4266
      %4268 = vrot.lane.b32.xlu0 %v727, 28
      %v4269 = vpop.permute.xlu0 %4268
      %4270 = vrot.lane.b32.xlu0 %v728, 28
      %v4271 = vpop.permute.xlu0 %4270
      %4272 = vrot.lane.b32.xlu0 %v729, 28
      %v4273 = vpop.permute.xlu0 %4272
      %4274 = vrot.lane.b32.xlu0 %v730, 28
      %v4275 = vpop.permute.xlu0 %4274
      %4276 = vrot.lane.b32.xlu0 %v731, 28
      %v4277 = vpop.permute.xlu0 %4276
      %4278 = vrot.lane.b32.xlu0 %v732, 28
      %v4279 = vpop.permute.xlu0 %4278
      %4280 = vrot.lane.b32.xlu0 %v733, 28
      %v4281 = vpop.permute.xlu0 %4280
      %4282 = vrot.lane.b32.xlu0 %v734, 28
      %v4283 = vpop.permute.xlu0 %4282
      %4284 = vrot.lane.b32.xlu0 %v735, 28
      %v4285 = vpop.permute.xlu0 %4284
      %4286 = vrot.lane.b32.xlu0 %v736, 28
      %v4287 = vpop.permute.xlu0 %4286
      %4288 = vrot.lane.b32.xlu0 %v737, 28
      %v4289 = vpop.permute.xlu0 %4288
      %4290 = vrot.lane.b32.xlu0 %v738, 28
      %v4291 = vpop.permute.xlu0 %4290
      %4292 = vrot.lane.b32.xlu0 %v739, 28
      %v4293 = vpop.permute.xlu0 %4292
      %4294 = vrot.lane.b32.xlu0 %v740, 28
      %v4295 = vpop.permute.xlu0 %4294
      %4344 = vrot.lane.b32.xlu0 %v741, 32
      %v4345 = vpop.permute.xlu0 %4344
      %4346 = vrot.lane.b32.xlu0 %v1113, 32
      %v4347 = vpop.permute.xlu0 %4346
      %4348 = vrot.lane.b32.xlu0 %v742, 32
      %v4349 = vpop.permute.xlu0 %4348
      %4350 = vrot.lane.b32.xlu0 %v1114, 32
      %v4351 = vpop.permute.xlu0 %4350
      %4352 = vrot.lane.b32.xlu0 %v743, 32
      %v4353 = vpop.permute.xlu0 %4352
      %4354 = vrot.lane.b32.xlu0 %v1115, 32
      %v4355 = vpop.permute.xlu0 %4354
      %4356 = vrot.lane.b32.xlu0 %v744, 32
      %v4357 = vpop.permute.xlu0 %4356
      %4358 = vrot.lane.b32.xlu0 %v1116, 32
      %v4359 = vpop.permute.xlu0 %4358
      %4360 = vrot.lane.b32.xlu0 %v745, 32
      %v4361 = vpop.permute.xlu0 %4360
      %4362 = vrot.lane.b32.xlu0 %v1117, 32
      %v4363 = vpop.permute.xlu0 %4362
      %4364 = vrot.lane.b32.xlu0 %v746, 32
      %v4365 = vpop.permute.xlu0 %4364
      %4366 = vrot.lane.b32.xlu0 %v1118, 32
      %v4367 = vpop.permute.xlu0 %4366
      %4368 = vrot.lane.b32.xlu0 %v747, 32
      %v4369 = vpop.permute.xlu0 %4368
      %4370 = vrot.lane.b32.xlu0 %v1119, 32
      %v4371 = vpop.permute.xlu0 %4370
      %4372 = vrot.lane.b32.xlu0 %v748, 32
      %v4373 = vpop.permute.xlu0 %4372
      %4374 = vrot.lane.b32.xlu0 %v1120, 32
      %v4375 = vpop.permute.xlu0 %4374
      %4376 = vrot.lane.b32.xlu0 %v749, 32
      %v4377 = vpop.permute.xlu0 %4376
      %4378 = vrot.lane.b32.xlu0 %v1121, 32
      %v4379 = vpop.permute.xlu0 %4378
      %4380 = vrot.lane.b32.xlu0 %v750, 32
      %v4381 = vpop.permute.xlu0 %4380
      %4382 = vrot.lane.b32.xlu0 %v1122, 32
      %v4383 = vpop.permute.xlu0 %4382
      %4384 = vrot.lane.b32.xlu0 %v751, 32
      %v4385 = vpop.permute.xlu0 %4384
      %4386 = vrot.lane.b32.xlu0 %v1123, 32
      %v4387 = vpop.permute.xlu0 %4386
      %4388 = vrot.lane.b32.xlu0 %v752, 32
      %v4389 = vpop.permute.xlu0 %4388
      %4390 = vrot.lane.b32.xlu0 %v1124, 32
      %v4391 = vpop.permute.xlu0 %4390
      %4392 = vrot.lane.b32.xlu0 %v753, 32
      %v4393 = vpop.permute.xlu0 %4392
      %4394 = vrot.lane.b32.xlu0 %v1125, 32
      %v4395 = vpop.permute.xlu0 %4394
      %4396 = vrot.lane.b32.xlu0 %v754, 32
      %v4397 = vpop.permute.xlu0 %4396
      %4398 = vrot.lane.b32.xlu0 %v1126, 32
      %v4399 = vpop.permute.xlu0 %4398
      %4400 = vrot.lane.b32.xlu0 %v755, 32
      %v4401 = vpop.permute.xlu0 %4400
      %4402 = vrot.lane.b32.xlu0 %v1127, 32
      %v4403 = vpop.permute.xlu0 %4402
      %4404 = vrot.lane.b32.xlu0 %v756, 32
      %v4405 = vpop.permute.xlu0 %4404
      %4406 = vrot.lane.b32.xlu0 %v1128, 32
      %v4407 = vpop.permute.xlu0 %4406
      %4472 = vrot.lane.b32.xlu0 %v1130, 36
      %v4473 = vpop.permute.xlu0 %4472
      %4474 = vrot.lane.b32.xlu0 %v1131, 36
      %v4475 = vpop.permute.xlu0 %4474
      %4476 = vrot.lane.b32.xlu0 %v1132, 36
      %v4477 = vpop.permute.xlu0 %4476
      %4478 = vrot.lane.b32.xlu0 %v1133, 36
      %v4479 = vpop.permute.xlu0 %4478
      %4480 = vrot.lane.b32.xlu0 %v1134, 36
      %v4481 = vpop.permute.xlu0 %4480
      %4482 = vrot.lane.b32.xlu0 %v1135, 36
      %v4483 = vpop.permute.xlu0 %4482
      %4484 = vrot.lane.b32.xlu0 %v1136, 36
      %v4485 = vpop.permute.xlu0 %4484
      %4486 = vrot.lane.b32.xlu0 %v1137, 36
      %v4487 = vpop.permute.xlu0 %4486
      %4488 = vrot.lane.b32.xlu0 %v1138, 36
      %v4489 = vpop.permute.xlu0 %4488
      %4490 = vrot.lane.b32.xlu0 %v1139, 36
      %v4491 = vpop.permute.xlu0 %4490
      %4492 = vrot.lane.b32.xlu0 %v1140, 36
      %v4493 = vpop.permute.xlu0 %4492
      %4494 = vrot.lane.b32.xlu0 %v1141, 36
      %v4495 = vpop.permute.xlu0 %4494
      %4496 = vrot.lane.b32.xlu0 %v1142, 36
      %v4497 = vpop.permute.xlu0 %4496
      %4498 = vrot.lane.b32.xlu0 %v1143, 36
      %v4499 = vpop.permute.xlu0 %4498
      %4500 = vrot.lane.b32.xlu0 %v1144, 36
      %v4501 = vpop.permute.xlu0 %4500
      %4502 = vrot.lane.b32.xlu0 %v1145, 36
      %v4503 = vpop.permute.xlu0 %4502
      %4504 = vrot.lane.b32.xlu0 %v1146, 36
      %v4505 = vpop.permute.xlu0 %4504
      %4506 = vrot.lane.b32.xlu0 %v1147, 36
      %v4507 = vpop.permute.xlu0 %4506
      %4508 = vrot.lane.b32.xlu0 %v1148, 36
      %v4509 = vpop.permute.xlu0 %4508
      %4510 = vrot.lane.b32.xlu0 %v1149, 36
      %v4511 = vpop.permute.xlu0 %4510
      %4512 = vrot.lane.b32.xlu0 %v1150, 36
      %v4513 = vpop.permute.xlu0 %4512
      %4514 = vrot.lane.b32.xlu0 %v1151, 36
      %v4515 = vpop.permute.xlu0 %4514
      %4516 = vrot.lane.b32.xlu0 %v1152, 36
      %v4517 = vpop.permute.xlu0 %4516
      %4518 = vrot.lane.b32.xlu0 %v1153, 36
      %v4519 = vpop.permute.xlu0 %4518
      %4520 = vrot.lane.b32.xlu0 %v1154, 36
      %v4521 = vpop.permute.xlu0 %4520
      %4522 = vrot.lane.b32.xlu0 %v1155, 36
      %v4523 = vpop.permute.xlu0 %4522
      %4524 = vrot.lane.b32.xlu0 %v1156, 36
      %v4525 = vpop.permute.xlu0 %4524
      %4526 = vrot.lane.b32.xlu0 %v1157, 36
      %v4527 = vpop.permute.xlu0 %4526
      %4528 = vrot.lane.b32.xlu0 %v1158, 36
      %v4529 = vpop.permute.xlu0 %4528
      %4530 = vrot.lane.b32.xlu0 %v1159, 36
      %v4531 = vpop.permute.xlu0 %4530
      %4532 = vrot.lane.b32.xlu0 %v1160, 36
      %v4533 = vpop.permute.xlu0 %4532
      %4534 = vrot.lane.b32.xlu0 %v1161, 36
      %v4535 = vpop.permute.xlu0 %4534
      %4600 = vrot.lane.b32.xlu0 %v1162, 40
      %v4601 = vpop.permute.xlu0 %4600
      %4602 = vrot.lane.b32.xlu0 %v1163, 40
      %v4603 = vpop.permute.xlu0 %4602
      %4604 = vrot.lane.b32.xlu0 %v1164, 40
      %v4605 = vpop.permute.xlu0 %4604
      %4606 = vrot.lane.b32.xlu0 %v1165, 40
      %v4607 = vpop.permute.xlu0 %4606
      %4608 = vrot.lane.b32.xlu0 %v1166, 40
      %v4609 = vpop.permute.xlu0 %4608
      %4610 = vrot.lane.b32.xlu0 %v1167, 40
      %v4611 = vpop.permute.xlu0 %4610
      %4612 = vrot.lane.b32.xlu0 %v1168, 40
      %v4613 = vpop.permute.xlu0 %4612
      %4614 = vrot.lane.b32.xlu0 %v1169, 40
      %v4615 = vpop.permute.xlu0 %4614
      %4616 = vrot.lane.b32.xlu0 %v1170, 40
      %v4617 = vpop.permute.xlu0 %4616
      %4618 = vrot.lane.b32.xlu0 %v1171, 40
      %v4619 = vpop.permute.xlu0 %4618
      %4620 = vrot.lane.b32.xlu0 %v1172, 40
      %v4621 = vpop.permute.xlu0 %4620
      %4622 = vrot.lane.b32.xlu0 %v1173, 40
      %v4623 = vpop.permute.xlu0 %4622
      %4624 = vrot.lane.b32.xlu0 %v1174, 40
      %v4625 = vpop.permute.xlu0 %4624
      %4626 = vrot.lane.b32.xlu0 %v1175, 40
      %v4627 = vpop.permute.xlu0 %4626
      %4628 = vrot.lane.b32.xlu0 %v1176, 40
      %v4629 = vpop.permute.xlu0 %4628
      %4630 = vrot.lane.b32.xlu0 %v1177, 40
      %v4631 = vpop.permute.xlu0 %4630
      %4632 = vrot.lane.b32.xlu0 %v1178, 40
      %v4633 = vpop.permute.xlu0 %4632
      %4634 = vrot.lane.b32.xlu0 %v1179, 40
      %v4635 = vpop.permute.xlu0 %4634
      %4636 = vrot.lane.b32.xlu0 %v1180, 40
      %v4637 = vpop.permute.xlu0 %4636
      %4638 = vrot.lane.b32.xlu0 %v1181, 40
      %v4639 = vpop.permute.xlu0 %4638
      %4640 = vrot.lane.b32.xlu0 %v1182, 40
      %v4641 = vpop.permute.xlu0 %4640
      %4642 = vrot.lane.b32.xlu0 %v1183, 40
      %v4643 = vpop.permute.xlu0 %4642
      %4644 = vrot.lane.b32.xlu0 %v1184, 40
      %v4645 = vpop.permute.xlu0 %4644
      %4646 = vrot.lane.b32.xlu0 %v1185, 40
      %v4647 = vpop.permute.xlu0 %4646
      %4648 = vrot.lane.b32.xlu0 %v1186, 40
      %v4649 = vpop.permute.xlu0 %4648
      %4650 = vrot.lane.b32.xlu0 %v1187, 40
      %v4651 = vpop.permute.xlu0 %4650
      %4652 = vrot.lane.b32.xlu0 %v1188, 40
      %v4653 = vpop.permute.xlu0 %4652
      %4654 = vrot.lane.b32.xlu0 %v1189, 40
      %v4655 = vpop.permute.xlu0 %4654
      %4656 = vrot.lane.b32.xlu0 %v1190, 40
      %v4657 = vpop.permute.xlu0 %4656
      %4658 = vrot.lane.b32.xlu0 %v1191, 40
      %v4659 = vpop.permute.xlu0 %4658
      %4660 = vrot.lane.b32.xlu0 %v1192, 40
      %v4661 = vpop.permute.xlu0 %4660
      %4662 = vrot.lane.b32.xlu0 %v1193, 40
      %v4663 = vpop.permute.xlu0 %4662
      %4728 = vrot.lane.b32.xlu0 %v1194, 44
      %v4729 = vpop.permute.xlu0 %4728
      %4730 = vrot.lane.b32.xlu0 %v1195, 44
      %v4731 = vpop.permute.xlu0 %4730
      %4732 = vrot.lane.b32.xlu0 %v1196, 44
      %v4733 = vpop.permute.xlu0 %4732
      %4734 = vrot.lane.b32.xlu0 %v1197, 44
      %v4735 = vpop.permute.xlu0 %4734
      %4736 = vrot.lane.b32.xlu0 %v1198, 44
      %v4737 = vpop.permute.xlu0 %4736
      %4738 = vrot.lane.b32.xlu0 %v1199, 44
      %v4739 = vpop.permute.xlu0 %4738
      %4740 = vrot.lane.b32.xlu0 %v1200, 44
      %v4741 = vpop.permute.xlu0 %4740
      %4742 = vrot.lane.b32.xlu0 %v1201, 44
      %v4743 = vpop.permute.xlu0 %4742
      %4744 = vrot.lane.b32.xlu0 %v1202, 44
      %v4745 = vpop.permute.xlu0 %4744
      %4746 = vrot.lane.b32.xlu0 %v1203, 44
      %v4747 = vpop.permute.xlu0 %4746
      %4748 = vrot.lane.b32.xlu0 %v1204, 44
      %v4749 = vpop.permute.xlu0 %4748
      %4750 = vrot.lane.b32.xlu0 %v1205, 44
      %v4751 = vpop.permute.xlu0 %4750
      %4752 = vrot.lane.b32.xlu0 %v1206, 44
      %v4753 = vpop.permute.xlu0 %4752
      %4754 = vrot.lane.b32.xlu0 %v1207, 44
      %v4755 = vpop.permute.xlu0 %4754
      %4756 = vrot.lane.b32.xlu0 %v1208, 44
      %v4757 = vpop.permute.xlu0 %4756
      %4758 = vrot.lane.b32.xlu0 %v1209, 44
      %v4759 = vpop.permute.xlu0 %4758
      %4760 = vrot.lane.b32.xlu0 %v1210, 44
      %v4761 = vpop.permute.xlu0 %4760
      %4762 = vrot.lane.b32.xlu0 %v1211, 44
      %v4763 = vpop.permute.xlu0 %4762
      %4764 = vrot.lane.b32.xlu0 %v1212, 44
      %v4765 = vpop.permute.xlu0 %4764
      %4766 = vrot.lane.b32.xlu0 %v1213, 44
      %v4767 = vpop.permute.xlu0 %4766
      %4768 = vrot.lane.b32.xlu0 %v1214, 44
      %v4769 = vpop.permute.xlu0 %4768
      %4770 = vrot.lane.b32.xlu0 %v1215, 44
      %v4771 = vpop.permute.xlu0 %4770
      %4772 = vrot.lane.b32.xlu0 %v1216, 44
      %v4773 = vpop.permute.xlu0 %4772
      %4774 = vrot.lane.b32.xlu0 %v1217, 44
      %v4775 = vpop.permute.xlu0 %4774
      %4776 = vrot.lane.b32.xlu0 %v1218, 44
      %v4777 = vpop.permute.xlu0 %4776
      %4778 = vrot.lane.b32.xlu0 %v1219, 44
      %v4779 = vpop.permute.xlu0 %4778
      %4780 = vrot.lane.b32.xlu0 %v1220, 44
      %v4781 = vpop.permute.xlu0 %4780
      %4782 = vrot.lane.b32.xlu0 %v1221, 44
      %v4783 = vpop.permute.xlu0 %4782
      %4784 = vrot.lane.b32.xlu0 %v1222, 44
      %v4785 = vpop.permute.xlu0 %4784
      %4786 = vrot.lane.b32.xlu0 %v1223, 44
      %v4787 = vpop.permute.xlu0 %4786
      %4788 = vrot.lane.b32.xlu0 %v1224, 44
      %v4789 = vpop.permute.xlu0 %4788
      %4790 = vrot.lane.b32.xlu0 %v1225, 44
      %v4791 = vpop.permute.xlu0 %4790
      %4825 = vrot.lane.b32.xlu0 %v595, 48
      %v4826 = vpop.permute.xlu0 %4825
      %v4828 = vsel %vm203, %v936, %v3529
      %v4829 = vsel %vm203, %v937, %v3531
      %v4830 = vsel %vm203, %v938, %v3533
      %v4831 = vsel %vm203, %v939, %v3535
      %v4832 = vsel %vm203, %v940, %v3537
      %v4833 = vsel %vm203, %v941, %v3539
      %v4834 = vsel %vm203, %v942, %v3541
      %v4835 = vsel %vm203, %v943, %v3543
      %v4836 = vsel %vm203, %v944, %v3545
      %v4837 = vsel %vm203, %v945, %v3547
      %v4838 = vsel %vm203, %v946, %v3549
      %v4839 = vsel %vm203, %v947, %v3551
      %v4840 = vsel %vm203, %v948, %v3553
      %v4841 = vsel %vm203, %v949, %v3555
      %v4842 = vsel %vm203, %v950, %v3557
      %v4843 = vsel %vm203, %v951, %v3559
      %v4844 = vsel %vm203, %v952, %v3561
      %v4845 = vsel %vm203, %v953, %v3563
      %v4846 = vsel %vm203, %v954, %v3565
      %v4847 = vsel %vm203, %v955, %v3567
      %v4848 = vsel %vm203, %v956, %v3569
      %v4849 = vsel %vm203, %v957, %v3571
      %v4850 = vsel %vm203, %v958, %v3573
      %v4851 = vsel %vm203, %v959, %v3575
      %v4852 = vsel %vm203, %v960, %v3577
      %v4853 = vsel %vm203, %v961, %v3579
      %v4854 = vsel %vm203, %v962, %v3581
      %v4855 = vsel %vm203, %v963, %v3583
      %v4856 = vsel %vm203, %v964, %v3585
      %v4857 = vsel %vm203, %v965, %v3587
      %v4858 = vsel %vm203, %v966, %v3589
      %v4859 = vsel %vm203, %v967, %v3591
      %v4860 = vsel %vm3034, %v4828, %v3641
      %v4861 = vsel %vm3034, %v4829, %v3643
      %v4862 = vsel %vm3034, %v4830, %v3645
      %v4863 = vsel %vm3034, %v4831, %v3647
      %v4864 = vsel %vm3034, %v4832, %v3649
      %v4865 = vsel %vm3034, %v4833, %v3651
      %v4866 = vsel %vm3034, %v4834, %v3653
      %v4867 = vsel %vm3034, %v4835, %v3655
      %v4868 = vsel %vm3034, %v4836, %v3657
      %v4869 = vsel %vm3034, %v4837, %v3659
      %v4870 = vsel %vm3034, %v4838, %v3661
      %v4871 = vsel %vm3034, %v4839, %v3663
      %v4872 = vsel %vm3034, %v4840, %v3665
      %v4873 = vsel %vm3034, %v4841, %v3667
      %v4874 = vsel %vm3034, %v4842, %v3669
      %v4875 = vsel %vm3034, %v4843, %v3671
      %v4876 = vsel %vm3034, %v4844, %v3673
      %v4877 = vsel %vm3034, %v4845, %v3675
      %v4878 = vsel %vm3034, %v4846, %v3677
      %v4879 = vsel %vm3034, %v4847, %v3679
      %v4880 = vsel %vm3034, %v4848, %v3681
      %v4881 = vsel %vm3034, %v4849, %v3683
      %v4882 = vsel %vm3034, %v4850, %v3685
      %v4883 = vsel %vm3034, %v4851, %v3687
      %v4884 = vsel %vm3034, %v4852, %v3689
      %v4885 = vsel %vm3034, %v4853, %v3691
      %v4886 = vsel %vm3034, %v4854, %v3693
      %v4887 = vsel %vm3034, %v4855, %v3695
      %v4888 = vsel %vm3034, %v4856, %v3697
      %v4889 = vsel %vm3034, %v4857, %v3699
      %v4890 = vsel %vm3034, %v4858, %v3701
      %v4891 = vsel %vm3034, %v4859, %v3703
      %v4892 = vsel %vm3067, %v4860, %v3769
      %v4893 = vsel %vm3067, %v4861, %v3771
      %v4894 = vsel %vm3067, %v4862, %v3773
      %v4895 = vsel %vm3067, %v4863, %v3775
      %v4896 = vsel %vm3067, %v4864, %v3777
      %v4897 = vsel %vm3067, %v4865, %v3779
      %v4898 = vsel %vm3067, %v4866, %v3781
      %v4899 = vsel %vm3067, %v4867, %v3783
      %v4900 = vsel %vm3067, %v4868, %v3785
      %v4901 = vsel %vm3067, %v4869, %v3787
      %v4902 = vsel %vm3067, %v4870, %v3789
      %v4903 = vsel %vm3067, %v4871, %v3791
      %v4904 = vsel %vm3067, %v4872, %v3793
      %v4905 = vsel %vm3067, %v4873, %v3795
      %v4906 = vsel %vm3067, %v4874, %v3797
      %v4907 = vsel %vm3067, %v4875, %v3799
      %v4908 = vsel %vm3067, %v4876, %v3801
      %v4909 = vsel %vm3067, %v4877, %v3803
      %v4910 = vsel %vm3067, %v4878, %v3805
      %v4911 = vsel %vm3067, %v4879, %v3807
      %v4912 = vsel %vm3067, %v4880, %v3809
      %v4913 = vsel %vm3067, %v4881, %v3811
      %v4914 = vsel %vm3067, %v4882, %v3813
      %v4915 = vsel %vm3067, %v4883, %v3815
      %v4916 = vsel %vm3067, %v4884, %v3817
      %v4917 = vsel %vm3067, %v4885, %v3819
      %v4918 = vsel %vm3067, %v4886, %v3821
      %v4919 = vsel %vm3067, %v4887, %v3823
      %v4920 = vsel %vm3067, %v4888, %v3825
      %v4921 = vsel %vm3067, %v4889, %v3827
      %v4922 = vsel %vm3067, %v4890, %v3829
      %v4923 = vsel %vm3067, %v4891, %v3831
      %v4924 = vsel %vm3100, %v4892, %v3897
      %v4925 = vsel %vm3100, %v4893, %v3899
      %v4926 = vsel %vm3100, %v4894, %v3901
      %v4927 = vsel %vm3100, %v4895, %v3903
      %v4928 = vsel %vm3100, %v4896, %v3905
      %v4929 = vsel %vm3100, %v4897, %v3907
      %v4930 = vsel %vm3100, %v4898, %v3909
      %v4931 = vsel %vm3100, %v4899, %v3911
      %v4932 = vsel %vm3100, %v4900, %v3913
      %v4933 = vsel %vm3100, %v4901, %v3915
      %v4934 = vsel %vm3100, %v4902, %v3917
      %v4935 = vsel %vm3100, %v4903, %v3919
      %v4936 = vsel %vm3100, %v4904, %v3921
      %v4937 = vsel %vm3100, %v4905, %v3923
      %v4938 = vsel %vm3100, %v4906, %v3925
      %v4939 = vsel %vm3100, %v4907, %v3927
      %v4940 = vsel %vm3100, %v4908, %v3929
      %v4941 = vsel %vm3100, %v4909, %v3931
      %v4942 = vsel %vm3100, %v4910, %v3933
      %v4943 = vsel %vm3100, %v4911, %v3935
      %v4944 = vsel %vm3100, %v4912, %v3937
      %v4945 = vsel %vm3100, %v4913, %v3939
      %v4946 = vsel %vm3100, %v4914, %v3941
      %v4947 = vsel %vm3100, %v4915, %v3943
      %v4948 = vsel %vm3100, %v4916, %v3945
      %v4949 = vsel %vm3100, %v4917, %v3947
      %v4950 = vsel %vm3100, %v4918, %v3949
      %v4951 = vsel %vm3100, %v4919, %v3951
      %v4952 = vsel %vm3100, %v4920, %v3953
      %v4953 = vsel %vm3100, %v4921, %v3955
      %v4954 = vsel %vm3100, %v4922, %v3957
      %v4955 = vsel %vm3100, %v4923, %v3959
      %v4956 = vsel %vm3133, %v4924, %v4025
      %v4957 = vsel %vm3133, %v4925, %v4027
      %v4958 = vsel %vm3133, %v4926, %v4029
      %v4959 = vsel %vm3133, %v4927, %v4031
      %v4960 = vsel %vm3133, %v4928, %v4033
      %v4961 = vsel %vm3133, %v4929, %v4035
      %v4962 = vsel %vm3133, %v4930, %v4037
      %v4963 = vsel %vm3133, %v4931, %v4039
      %v4964 = vsel %vm3133, %v4932, %v4041
      %v4965 = vsel %vm3133, %v4933, %v4043
      %v4966 = vsel %vm3133, %v4934, %v4045
      %v4967 = vsel %vm3133, %v4935, %v4047
      %v4968 = vsel %vm3133, %v4936, %v4049
      %v4969 = vsel %vm3133, %v4937, %v4051
      %v4970 = vsel %vm3133, %v4938, %v4053
      %v4971 = vsel %vm3133, %v4939, %v4055
      %v4972 = vsel %vm3133, %v4940, %v4057
      %v4973 = vsel %vm3133, %v4941, %v4059
      %v4974 = vsel %vm3133, %v4942, %v4061
      %v4975 = vsel %vm3133, %v4943, %v4063
      %v4976 = vsel %vm3133, %v4944, %v4065
      %v4977 = vsel %vm3133, %v4945, %v4067
      %v4978 = vsel %vm3133, %v4946, %v4069
      %v4979 = vsel %vm3133, %v4947, %v4071
      %v4980 = vsel %vm3133, %v4948, %v4073
      %v4981 = vsel %vm3133, %v4949, %v4075
      %v4982 = vsel %vm3133, %v4950, %v4077
      %v4983 = vsel %vm3133, %v4951, %v4079
      %v4984 = vsel %vm3133, %v4952, %v4081
      %v4985 = vsel %vm3133, %v4953, %v4083
      %v4986 = vsel %vm3133, %v4954, %v4085
      %v4987 = vsel %vm3133, %v4955, %v4087
      %v4988 = vsel %vm3166, %v4956, %v4137
      %v4989 = vsel %vm3166, %v4957, %v4139
      %v4990 = vsel %vm3166, %v4958, %v4141
      %v4991 = vsel %vm3166, %v4959, %v4143
      %v4992 = vsel %vm3166, %v4960, %v4145
      %v4993 = vsel %vm3166, %v4961, %v4147
      %v4994 = vsel %vm3166, %v4962, %v4149
      %v4995 = vsel %vm3166, %v4963, %v4151
      %v4996 = vsel %vm3166, %v4964, %v4153
      %v4997 = vsel %vm3166, %v4965, %v4155
      %v4998 = vsel %vm3166, %v4966, %v4157
      %v4999 = vsel %vm3166, %v4967, %v4159
      %v5000 = vsel %vm3166, %v4968, %v4161
      %v5001 = vsel %vm3166, %v4969, %v4163
      %v5002 = vsel %vm3166, %v4970, %v4165
      %v5003 = vsel %vm3166, %v4971, %v4167
      %v5004 = vsel %vm3166, %v4972, %v4169
      %v5005 = vsel %vm3166, %v4973, %v4171
      %v5006 = vsel %vm3166, %v4974, %v4173
      %v5007 = vsel %vm3166, %v4975, %v4175
      %v5008 = vsel %vm3166, %v4976, %v4177
      %v5009 = vsel %vm3166, %v4977, %v4179
      %v5010 = vsel %vm3166, %v4978, %v4181
      %v5011 = vsel %vm3166, %v4979, %v4183
      %v5012 = vsel %vm3166, %v4980, %v4185
      %v5013 = vsel %vm3166, %v4981, %v4187
      %v5014 = vsel %vm3166, %v4982, %v4189
      %v5015 = vsel %vm3166, %v4983, %v4191
      %v5016 = vsel %vm3166, %v4984, %v4193
      %v5017 = vsel %vm3166, %v4985, %v4195
      %v5018 = vsel %vm3166, %v4986, %v4197
      %v5019 = vsel %vm3166, %v4987, %v4199
      %v5020 = vsel %vm3199, %v4988, %v4233
      %v5021 = vsel %vm3199, %v4989, %v4235
      %v5022 = vsel %vm3199, %v4990, %v4237
      %v5023 = vsel %vm3199, %v4991, %v4239
      %v5024 = vsel %vm3199, %v4992, %v4241
      %v5025 = vsel %vm3199, %v4993, %v4243
      %v5026 = vsel %vm3199, %v4994, %v4245
      %v5027 = vsel %vm3199, %v4995, %v4247
      %v5028 = vsel %vm3199, %v4996, %v4249
      %v5029 = vsel %vm3199, %v4997, %v4251
      %v5030 = vsel %vm3199, %v4998, %v4253
      %v5031 = vsel %vm3199, %v4999, %v4255
      %v5032 = vsel %vm3199, %v5000, %v4257
      %v5033 = vsel %vm3199, %v5001, %v4259
      %v5034 = vsel %vm3199, %v5002, %v4261
      %v5035 = vsel %vm3199, %v5003, %v4263
      %v5036 = vsel %vm3199, %v5004, %v4265
      %v5037 = vsel %vm3199, %v5005, %v4267
      %v5038 = vsel %vm3199, %v5006, %v4269
      %v5039 = vsel %vm3199, %v5007, %v4271
      %v5040 = vsel %vm3199, %v5008, %v4273
      %v5041 = vsel %vm3199, %v5009, %v4275
      %v5042 = vsel %vm3199, %v5010, %v4277
      %v5043 = vsel %vm3199, %v5011, %v4279
      %v5044 = vsel %vm3199, %v5012, %v4281
      %v5045 = vsel %vm3199, %v5013, %v4283
      %v5046 = vsel %vm3199, %v5014, %v4285
      %v5047 = vsel %vm3199, %v5015, %v4287
      %v5048 = vsel %vm3199, %v5016, %v4289
      %v5049 = vsel %vm3199, %v5017, %v4291
      %v5050 = vsel %vm3199, %v5018, %v4293
      %v5051 = vsel %vm3199, %v5019, %v4295
      %v5052 = vsel %vm3232, %v5020, %v4345
      %v5053 = vsel %vm3232, %v5021, %v4347
      %v5054 = vsel %vm3232, %v5022, %v4349
      %v5055 = vsel %vm3232, %v5023, %v4351
      %v5056 = vsel %vm3232, %v5024, %v4353
      %v5057 = vsel %vm3232, %v5025, %v4355
      %v5058 = vsel %vm3232, %v5026, %v4357
      %v5059 = vsel %vm3232, %v5027, %v4359
      %v5060 = vsel %vm3232, %v5028, %v4361
      %v5061 = vsel %vm3232, %v5029, %v4363
      %v5062 = vsel %vm3232, %v5030, %v4365
      %v5063 = vsel %vm3232, %v5031, %v4367
      %v5064 = vsel %vm3232, %v5032, %v4369
      %v5065 = vsel %vm3232, %v5033, %v4371
      %v5066 = vsel %vm3232, %v5034, %v4373
      %v5067 = vsel %vm3232, %v5035, %v4375
      %v5068 = vsel %vm3232, %v5036, %v4377
      %v5069 = vsel %vm3232, %v5037, %v4379
      %v5070 = vsel %vm3232, %v5038, %v4381
      %v5071 = vsel %vm3232, %v5039, %v4383
      %v5072 = vsel %vm3232, %v5040, %v4385
      %v5073 = vsel %vm3232, %v5041, %v4387
      %v5074 = vsel %vm3232, %v5042, %v4389
      %v5075 = vsel %vm3232, %v5043, %v4391
      %v5076 = vsel %vm3232, %v5044, %v4393
      %v5077 = vsel %vm3232, %v5045, %v4395
      %v5078 = vsel %vm3232, %v5046, %v4397
      %v5079 = vsel %vm3232, %v5047, %v4399
      %v5080 = vsel %vm3232, %v5048, %v4401
      %v5081 = vsel %vm3232, %v5049, %v4403
      %v5082 = vsel %vm3232, %v5050, %v4405
      %v5083 = vsel %vm3232, %v5051, %v4407
      %v5084 = vsel %vm3265, %v5052, %v4473
      %v5085 = vsel %vm3265, %v5053, %v4475
      %v5086 = vsel %vm3265, %v5054, %v4477
      %v5087 = vsel %vm3265, %v5055, %v4479
      %v5088 = vsel %vm3265, %v5056, %v4481
      %v5089 = vsel %vm3265, %v5057, %v4483
      %v5090 = vsel %vm3265, %v5058, %v4485
      %v5091 = vsel %vm3265, %v5059, %v4487
      %v5092 = vsel %vm3265, %v5060, %v4489
      %v5093 = vsel %vm3265, %v5061, %v4491
      %v5094 = vsel %vm3265, %v5062, %v4493
      %v5095 = vsel %vm3265, %v5063, %v4495
      %v5096 = vsel %vm3265, %v5064, %v4497
      %v5097 = vsel %vm3265, %v5065, %v4499
      %v5098 = vsel %vm3265, %v5066, %v4501
      %v5099 = vsel %vm3265, %v5067, %v4503
      %v5100 = vsel %vm3265, %v5068, %v4505
      %v5101 = vsel %vm3265, %v5069, %v4507
      %v5102 = vsel %vm3265, %v5070, %v4509
      %v5103 = vsel %vm3265, %v5071, %v4511
      %v5104 = vsel %vm3265, %v5072, %v4513
      %v5105 = vsel %vm3265, %v5073, %v4515
      %v5106 = vsel %vm3265, %v5074, %v4517
      %v5107 = vsel %vm3265, %v5075, %v4519
      %v5108 = vsel %vm3265, %v5076, %v4521
      %v5109 = vsel %vm3265, %v5077, %v4523
      %v5110 = vsel %vm3265, %v5078, %v4525
      %v5111 = vsel %vm3265, %v5079, %v4527
      %v5112 = vsel %vm3265, %v5080, %v4529
      %v5113 = vsel %vm3265, %v5081, %v4531
      %v5114 = vsel %vm3265, %v5082, %v4533
      %v5115 = vsel %vm3265, %v5083, %v4535
      %v5116 = vsel %vm3298, %v5084, %v4601
      %v5117 = vsel %vm3298, %v5085, %v4603
      %v5118 = vsel %vm3298, %v5086, %v4605
      %v5119 = vsel %vm3298, %v5087, %v4607
      %v5120 = vsel %vm3298, %v5088, %v4609
      %v5121 = vsel %vm3298, %v5089, %v4611
      %v5122 = vsel %vm3298, %v5090, %v4613
      %v5123 = vsel %vm3298, %v5091, %v4615
      %v5124 = vsel %vm3298, %v5092, %v4617
      %v5125 = vsel %vm3298, %v5093, %v4619
      %v5126 = vsel %vm3298, %v5094, %v4621
      %v5127 = vsel %vm3298, %v5095, %v4623
      %v5128 = vsel %vm3298, %v5096, %v4625
      %v5129 = vsel %vm3298, %v5097, %v4627
      %v5130 = vsel %vm3298, %v5098, %v4629
      %v5131 = vsel %vm3298, %v5099, %v4631
      %v5132 = vsel %vm3298, %v5100, %v4633
      %v5133 = vsel %vm3298, %v5101, %v4635
      %v5134 = vsel %vm3298, %v5102, %v4637
      %v5135 = vsel %vm3298, %v5103, %v4639
      %v5136 = vsel %vm3298, %v5104, %v4641
      %v5137 = vsel %vm3298, %v5105, %v4643
      %v5138 = vsel %vm3298, %v5106, %v4645
      %v5139 = vsel %vm3298, %v5107, %v4647
      %v5140 = vsel %vm3298, %v5108, %v4649
      %v5141 = vsel %vm3298, %v5109, %v4651
      %v5142 = vsel %vm3298, %v5110, %v4653
      %v5143 = vsel %vm3298, %v5111, %v4655
      %v5144 = vsel %vm3298, %v5112, %v4657
      %v5145 = vsel %vm3298, %v5113, %v4659
      %v5146 = vsel %vm3298, %v5114, %v4661
      %v5147 = vsel %vm3298, %v5115, %v4663
      %v5148 = vsel %vm3331, %v5116, %v4729
      %v5149 = vsel %vm3331, %v5117, %v4731
      %v5150 = vsel %vm3331, %v5118, %v4733
      %v5151 = vsel %vm3331, %v5119, %v4735
      %v5152 = vsel %vm3331, %v5120, %v4737
      %v5153 = vsel %vm3331, %v5121, %v4739
      %v5154 = vsel %vm3331, %v5122, %v4741
      %v5155 = vsel %vm3331, %v5123, %v4743
      %v5156 = vsel %vm3331, %v5124, %v4745
      %v5157 = vsel %vm3331, %v5125, %v4747
      %v5158 = vsel %vm3331, %v5126, %v4749
      %v5159 = vsel %vm3331, %v5127, %v4751
      %v5160 = vsel %vm3331, %v5128, %v4753
      %v5161 = vsel %vm3331, %v5129, %v4755
      %v5162 = vsel %vm3331, %v5130, %v4757
      %v5163 = vsel %vm3331, %v5131, %v4759
      %v5164 = vsel %vm3331, %v5132, %v4761
      %v5165 = vsel %vm3331, %v5133, %v4763
      %v5166 = vsel %vm3331, %v5134, %v4765
      %v5167 = vsel %vm3331, %v5135, %v4767
      %v5168 = vsel %vm3331, %v5136, %v4769
      %v5169 = vsel %vm3331, %v5137, %v4771
      %v5170 = vsel %vm3331, %v5138, %v4773
      %v5171 = vsel %vm3331, %v5139, %v4775
      %v5172 = vsel %vm3331, %v5140, %v4777
      %v5173 = vsel %vm3331, %v5141, %v4779
      %v5174 = vsel %vm3331, %v5142, %v4781
      %v5175 = vsel %vm3331, %v5143, %v4783
      %v5176 = vsel %vm3331, %v5144, %v4785
      %v5177 = vsel %vm3331, %v5145, %v4787
      %v5178 = vsel %vm3331, %v5146, %v4789
      %v5179 = vsel %vm3331, %v5147, %v4791
      %v5180 = vsel %vm3364, %v5148, %v4826
      %v5181 = vsel %vm3364, %v5149, %v4826
      %v5182 = vsel %vm3364, %v5150, %v4826
      %v5183 = vsel %vm3364, %v5151, %v4826
      %v5184 = vsel %vm3364, %v5152, %v4826
      %v5185 = vsel %vm3364, %v5153, %v4826
      %v5186 = vsel %vm3364, %v5154, %v4826
      %v5187 = vsel %vm3364, %v5155, %v4826
      %v5188 = vsel %vm3364, %v5156, %v4826
      %v5189 = vsel %vm3364, %v5157, %v4826
      %v5190 = vsel %vm3364, %v5158, %v4826
      %v5191 = vsel %vm3364, %v5159, %v4826
      %v5192 = vsel %vm3364, %v5160, %v4826
      %v5193 = vsel %vm3364, %v5161, %v4826
      %v5194 = vsel %vm3364, %v5162, %v4826
      %v5195 = vsel %vm3364, %v5163, %v4826
      %v5196 = vsel %vm3364, %v5164, %v4826
      %v5197 = vsel %vm3364, %v5165, %v4826
      %v5198 = vsel %vm3364, %v5166, %v4826
      %v5199 = vsel %vm3364, %v5167, %v4826
      %v5200 = vsel %vm3364, %v5168, %v4826
      %v5201 = vsel %vm3364, %v5169, %v4826
      %v5202 = vsel %vm3364, %v5170, %v4826
      %v5203 = vsel %vm3364, %v5171, %v4826
      %v5204 = vsel %vm3364, %v5172, %v4826
      %v5205 = vsel %vm3364, %v5173, %v4826
      %v5206 = vsel %vm3364, %v5174, %v4826
      %v5207 = vsel %vm3364, %v5175, %v4826
      %v5208 = vsel %vm3364, %v5176, %v4826
      %v5209 = vsel %vm3364, %v5177, %v4826
      %v5210 = vsel %vm3364, %v5178, %v4826
      %v5211 = vsel %vm3364, %v5179, %v4826
      %5244 = vrot.lane.b32.xlu0 %v5180, 64
      %v5245 = vpop.permute.xlu0 %5244
      %5246 = vrot.lane.b32.xlu0 %v5181, 64
      %v5247 = vpop.permute.xlu0 %5246
      %5248 = vrot.lane.b32.xlu0 %v5182, 64
      %v5249 = vpop.permute.xlu0 %5248
      %5250 = vrot.lane.b32.xlu0 %v5183, 64
      %v5251 = vpop.permute.xlu0 %5250
      %5252 = vrot.lane.b32.xlu0 %v5184, 64
      %v5253 = vpop.permute.xlu0 %5252
      %5254 = vrot.lane.b32.xlu0 %v5185, 64
      %v5255 = vpop.permute.xlu0 %5254
      %5256 = vrot.lane.b32.xlu0 %v5186, 64
      %v5257 = vpop.permute.xlu0 %5256
      %5258 = vrot.lane.b32.xlu0 %v5187, 64
      %v5259 = vpop.permute.xlu0 %5258
      %5260 = vrot.lane.b32.xlu0 %v5188, 64
      %v5261 = vpop.permute.xlu0 %5260
      %5262 = vrot.lane.b32.xlu0 %v5189, 64
      %v5263 = vpop.permute.xlu0 %5262
      %5264 = vrot.lane.b32.xlu0 %v5190, 64
      %v5265 = vpop.permute.xlu0 %5264
      %5266 = vrot.lane.b32.xlu0 %v5191, 64
      %v5267 = vpop.permute.xlu0 %5266
      %5268 = vrot.lane.b32.xlu0 %v5192, 64
      %v5269 = vpop.permute.xlu0 %5268
      %5270 = vrot.lane.b32.xlu0 %v5193, 64
      %v5271 = vpop.permute.xlu0 %5270
      %5272 = vrot.lane.b32.xlu0 %v5194, 64
      %v5273 = vpop.permute.xlu0 %5272
      %5274 = vrot.lane.b32.xlu0 %v5195, 64
      %v5275 = vpop.permute.xlu0 %5274
      %5276 = vrot.lane.b32.xlu0 %v5196, 64
      %v5277 = vpop.permute.xlu0 %5276
      %5278 = vrot.lane.b32.xlu0 %v5197, 64
      %v5279 = vpop.permute.xlu0 %5278
      %5280 = vrot.lane.b32.xlu0 %v5198, 64
      %v5281 = vpop.permute.xlu0 %5280
      %5282 = vrot.lane.b32.xlu0 %v5199, 64
      %v5283 = vpop.permute.xlu0 %5282
      %5284 = vrot.lane.b32.xlu0 %v5200, 64
      %v5285 = vpop.permute.xlu0 %5284
      %5286 = vrot.lane.b32.xlu0 %v5201, 64
      %v5287 = vpop.permute.xlu0 %5286
      %5288 = vrot.lane.b32.xlu0 %v5202, 64
      %v5289 = vpop.permute.xlu0 %5288
      %5290 = vrot.lane.b32.xlu0 %v5203, 64
      %v5291 = vpop.permute.xlu0 %5290
      %5292 = vrot.lane.b32.xlu0 %v5204, 64
      %v5293 = vpop.permute.xlu0 %5292
      %5294 = vrot.lane.b32.xlu0 %v5205, 64
      %v5295 = vpop.permute.xlu0 %5294
      %5296 = vrot.lane.b32.xlu0 %v5206, 64
      %v5297 = vpop.permute.xlu0 %5296
      %5298 = vrot.lane.b32.xlu0 %v5207, 64
      %v5299 = vpop.permute.xlu0 %5298
      %5300 = vrot.lane.b32.xlu0 %v5208, 64
      %v5301 = vpop.permute.xlu0 %5300
      %5302 = vrot.lane.b32.xlu0 %v5209, 64
      %v5303 = vpop.permute.xlu0 %5302
      %5304 = vrot.lane.b32.xlu0 %v5210, 64
      %v5305 = vpop.permute.xlu0 %5304
      %5306 = vrot.lane.b32.xlu0 %v5211, 64
      %v5307 = vpop.permute.xlu0 %5306
      %vm5340 = vcmask 523264
      %v5341 = vsel %vm5340, %v3464, %v5245
      %v5342 = vsel %vm5340, %v3465, %v5247
      %v5343 = vsel %vm5340, %v3466, %v5249
      %v5344 = vsel %vm5340, %v3467, %v5251
      %v5345 = vsel %vm5340, %v3468, %v5253
      %v5346 = vsel %vm5340, %v3469, %v5255
      %v5347 = vsel %vm5340, %v3470, %v5257
      %v5348 = vsel %vm5340, %v3471, %v5259
      %v5349 = vsel %vm5340, %v3472, %v5261
      %v5350 = vsel %vm5340, %v3473, %v5263
      %v5351 = vsel %vm5340, %v3474, %v5265
      %v5352 = vsel %vm5340, %v3475, %v5267
      %v5353 = vsel %vm5340, %v3476, %v5269
      %v5354 = vsel %vm5340, %v3477, %v5271
      %v5355 = vsel %vm5340, %v3478, %v5273
      %v5356 = vsel %vm5340, %v3479, %v5275
      %v5357 = vsel %vm5340, %v3480, %v5277
      %v5358 = vsel %vm5340, %v3481, %v5279
      %v5359 = vsel %vm5340, %v3482, %v5281
      %v5360 = vsel %vm5340, %v3483, %v5283
      %v5361 = vsel %vm5340, %v3484, %v5285
      %v5362 = vsel %vm5340, %v3485, %v5287
      %v5363 = vsel %vm5340, %v3486, %v5289
      %v5364 = vsel %vm5340, %v3487, %v5291
      %v5365 = vsel %vm5340, %v3488, %v5293
      %v5366 = vsel %vm5340, %v3489, %v5295
      %v5367 = vsel %vm5340, %v3490, %v5297
      %v5368 = vsel %vm5340, %v3491, %v5299
      %v5369 = vsel %vm5340, %v3492, %v5301
      %v5370 = vsel %vm5340, %v3493, %v5303
      %v5371 = vsel %vm5340, %v3494, %v5305
      %v5372 = vsel %vm5340, %v3495, %v5307
      %v5373 = vld [vmem:[%s1] sm:$0xff]
      %v5374 = vld [vmem:[%s1 + $0x8] sm:$0xff]
      %v5375 = vld [vmem:[%s1 + $0x10] sm:$0xff]
      %v5376 = vld [vmem:[%s1 + $0x18] sm:$0xff]
      %v5377 = vld [vmem:[%s1 + $0x20] sm:$0xff]
      %v5378 = vld [vmem:[%s1 + $0x28] sm:$0xff]
      %v5379 = vld [vmem:[%s1 + $0x30] sm:$0xff]
      %v5380 = vld [vmem:[%s1 + $0x38] sm:$0xff]
      %v5381 = vld [vmem:[%s1 + $0x40] sm:$0xff]
      %v5382 = vld [vmem:[%s1 + $0x48] sm:$0xff]
      %v5383 = vld [vmem:[%s1 + $0x50] sm:$0xff]
      %v5384 = vld [vmem:[%s1 + $0x58] sm:$0xff]
      %v5385 = vld [vmem:[%s1 + $0x60] sm:$0xff]
      %v5386 = vld [vmem:[%s1 + $0x68] sm:$0xff]
      %v5387 = vld [vmem:[%s1 + $0x70] sm:$0xf]
      %v5388 = vld [vmem:[%s2] sm:$0x1]
      %v5390 = vperm.slane %v5388, 0
      %vm5392 = vcmask 949248
      %v5394 = vsel %vm5392, %v5341, 0
      %v5397 = vsel %vm5392, %v5342, 0
      %v5400 = vsel %vm5392, %v5343, 0
      %v5403 = vsel %vm5392, %v5344, 0
      %v5406 = vsel %vm5392, %v5345, 0
      %v5409 = vsel %vm5392, %v5346, 0
      %v5412 = vsel %vm5392, %v5347, 0
      %v5415 = vsel %vm5392, %v5348, 0
      %v5418 = vsel %vm5392, %v5349, 0
      %v5421 = vsel %vm5392, %v5350, 0
      %v5424 = vsel %vm5392, %v5351, 0
      %v5427 = vsel %vm5392, %v5352, 0
      %v5430 = vsel %vm5392, %v5353, 0
      %v5433 = vsel %vm5392, %v5354, 0
      %v5436 = vsel %vm5392, %v5355, 0
      %v5439 = vsel %vm5392, %v5356, 0
      %v5442 = vsel %vm5392, %v5357, 0
      %v5445 = vsel %vm5392, %v5358, 0
      %v5448 = vsel %vm5392, %v5359, 0
      %v5451 = vsel %vm5392, %v5360, 0
      %v5454 = vsel %vm5392, %v5361, 0
      %v5457 = vsel %vm5392, %v5362, 0
      %v5460 = vsel %vm5392, %v5363, 0
      %v5463 = vsel %vm5392, %v5364, 0
      %v5466 = vsel %vm5392, %v5365, 0
      %v5469 = vsel %vm5392, %v5366, 0
      %v5472 = vsel %vm5392, %v5367, 0
      %v5475 = vsel %vm5392, %v5368, 0
      %v5478 = vsel %vm5392, %v5369, 0
      %v5481 = vsel %vm5392, %v5370, 0
      %v5484 = vsel %vm5392, %v5371, 0
      %v5487 = vsel %vm5392, %v5372, 0
      %vm5489 = vcmask 1043456
      %v5491 = vsel %vm5489, %v5387, 0
      %5493 = vmatpush.msra.mxu0 0.0
      %5494 = vmatpush.msra.mxu0 %v5491
      %5495 = vmatpush.msra.mxu0 %v5386
      %5496 = vmatpush.msra.mxu0 %v5385
      %5497 = vmatpush.msra.mxu0 %v5384
      %5498 = vmatpush.msra.mxu0 %v5383
      %5499 = vmatpush.msra.mxu0 %v5382
      %5500 = vmatpush.msra.mxu0 %v5381
      %5501 = vmatpush.msra.mxu0 %v5380
      %5502 = vmatpush.msra.mxu0 %v5379
      %5503 = vmatpush.msra.mxu0 %v5378
      %5504 = vmatpush.msra.mxu0 %v5377
      %5505 = vmatpush.msra.mxu0 %v5376
      %5506 = vmatpush.msra.mxu0 %v5375
      %5507 = vmatpush.msra.mxu0 %v5374
      %5508 = vmatpush.msra.mxu0 %v5373
      %5509 = vmatmul.f32.gmra.mxu0 %v5394
      %v5510 = vpop.f32.mrf.mxu0
      %v5511 = vadd.f32 %v5390, %v5510
      %5512 = vmatmul.f32.gmra.mxu0 %v5397
      %v5513 = vpop.f32.mrf.mxu0
      %v5514 = vadd.f32 %v5390, %v5513
      %5515 = vmatmul.f32.gmra.mxu0 %v5400
      %v5516 = vpop.f32.mrf.mxu0
      %v5517 = vadd.f32 %v5390, %v5516
      %5518 = vmatmul.f32.gmra.mxu0 %v5403
      %v5519 = vpop.f32.mrf.mxu0
      %v5520 = vadd.f32 %v5390, %v5519
      %5521 = vmatmul.f32.gmra.mxu0 %v5406
      %v5522 = vpop.f32.mrf.mxu0
      %v5523 = vadd.f32 %v5390, %v5522
      %5524 = vmatmul.f32.gmra.mxu0 %v5409
      %v5525 = vpop.f32.mrf.mxu0
      %v5526 = vadd.f32 %v5390, %v5525
      %5527 = vmatmul.f32.gmra.mxu0 %v5412
      %v5528 = vpop.f32.mrf.mxu0
      %v5529 = vadd.f32 %v5390, %v5528
      %5530 = vmatmul.f32.gmra.mxu0 %v5415
      %v5531 = vpop.f32.mrf.mxu0
      %v5532 = vadd.f32 %v5390, %v5531
      %5533 = vmatmul.f32.gmra.mxu0 %v5418
      %v5534 = vpop.f32.mrf.mxu0
      %v5535 = vadd.f32 %v5390, %v5534
      %5536 = vmatmul.f32.gmra.mxu0 %v5421
      %v5537 = vpop.f32.mrf.mxu0
      %v5538 = vadd.f32 %v5390, %v5537
      %5539 = vmatmul.f32.gmra.mxu0 %v5424
      %v5540 = vpop.f32.mrf.mxu0
      %v5541 = vadd.f32 %v5390, %v5540
      %5542 = vmatmul.f32.gmra.mxu0 %v5427
      %v5543 = vpop.f32.mrf.mxu0
      %v5544 = vadd.f32 %v5390, %v5543
      %5545 = vmatmul.f32.gmra.mxu0 %v5430
      %v5546 = vpop.f32.mrf.mxu0
      %v5547 = vadd.f32 %v5390, %v5546
      %5548 = vmatmul.f32.gmra.mxu0 %v5433
      %v5549 = vpop.f32.mrf.mxu0
      %v5550 = vadd.f32 %v5390, %v5549
      %5551 = vmatmul.f32.gmra.mxu0 %v5436
      %v5552 = vpop.f32.mrf.mxu0
      %v5553 = vadd.f32 %v5390, %v5552
      %5554 = vmatmul.f32.gmra.mxu0 %v5439
      %v5555 = vpop.f32.mrf.mxu0
      %v5556 = vadd.f32 %v5390, %v5555
      %5557 = vmatmul.f32.gmra.mxu0 %v5442
      %v5558 = vpop.f32.mrf.mxu0
      %v5559 = vadd.f32 %v5390, %v5558
      %5560 = vmatmul.f32.gmra.mxu0 %v5445
      %v5561 = vpop.f32.mrf.mxu0
      %v5562 = vadd.f32 %v5390, %v5561
      %5563 = vmatmul.f32.gmra.mxu0 %v5448
      %v5564 = vpop.f32.mrf.mxu0
      %v5565 = vadd.f32 %v5390, %v5564
      %5566 = vmatmul.f32.gmra.mxu0 %v5451
      %v5567 = vpop.f32.mrf.mxu0
      %v5568 = vadd.f32 %v5390, %v5567
      %5569 = vmatmul.f32.gmra.mxu0 %v5454
      %v5570 = vpop.f32.mrf.mxu0
      %v5571 = vadd.f32 %v5390, %v5570
      %5572 = vmatmul.f32.gmra.mxu0 %v5457
      %v5573 = vpop.f32.mrf.mxu0
      %v5574 = vadd.f32 %v5390, %v5573
      %5575 = vmatmul.f32.gmra.mxu0 %v5460
      %v5576 = vpop.f32.mrf.mxu0
      %v5577 = vadd.f32 %v5390, %v5576
      %5578 = vmatmul.f32.gmra.mxu0 %v5463
      %v5579 = vpop.f32.mrf.mxu0
      %v5580 = vadd.f32 %v5390, %v5579
      %5581 = vmatmul.f32.gmra.mxu0 %v5466
      %v5582 = vpop.f32.mrf.mxu0
      %v5583 = vadd.f32 %v5390, %v5582
      %5584 = vmatmul.f32.gmra.mxu0 %v5469
      %v5585 = vpop.f32.mrf.mxu0
      %v5586 = vadd.f32 %v5390, %v5585
      %5587 = vmatmul.f32.gmra.mxu0 %v5472
      %v5588 = vpop.f32.mrf.mxu0
      %v5589 = vadd.f32 %v5390, %v5588
      %5590 = vmatmul.f32.gmra.mxu0 %v5475
      %v5591 = vpop.f32.mrf.mxu0
      %v5592 = vadd.f32 %v5390, %v5591
      %5593 = vmatmul.f32.gmra.mxu0 %v5478
      %v5594 = vpop.f32.mrf.mxu0
      %v5595 = vadd.f32 %v5390, %v5594
      %5596 = vmatmul.f32.gmra.mxu0 %v5481
      %v5597 = vpop.f32.mrf.mxu0
      %v5598 = vadd.f32 %v5390, %v5597
      %5599 = vmatmul.f32.gmra.mxu0 %v5484
      %v5600 = vpop.f32.mrf.mxu0
      %v5601 = vadd.f32 %v5390, %v5600
      %5602 = vmatmul.f32.gmra.mxu0 %v5487
      %v5603 = vpop.f32.mrf.mxu0
      %v5604 = vadd.f32 %v5390, %v5603
      %5605 = vdwg.mxu0
      %5606 = vst.msk [vmem:[%s170] sm:$0xff] %vm3034, %v5511
      %5607 = vst.msk [vmem:[%s170 + $0x8] sm:$0xff] %vm3034, %v5514
      %5608 = vst.msk [vmem:[%s170 + $0x10] sm:$0xff] %vm3034, %v5517
      %5609 = vst.msk [vmem:[%s170 + $0x18] sm:$0xff] %vm3034, %v5520
      %5610 = vst.msk [vmem:[%s170 + $0x20] sm:$0xff] %vm3034, %v5523
      %5611 = vst.msk [vmem:[%s170 + $0x28] sm:$0xff] %vm3034, %v5526
      %5612 = vst.msk [vmem:[%s170 + $0x30] sm:$0xff] %vm3034, %v5529
      %5613 = vst.msk [vmem:[%s170 + $0x38] sm:$0xff] %vm3034, %v5532
      %5614 = vst.msk [vmem:[%s170 + $0x40] sm:$0xff] %vm3034, %v5535
      %5615 = vst.msk [vmem:[%s170 + $0x48] sm:$0xff] %vm3034, %v5538
      %5616 = vst.msk [vmem:[%s170 + $0x50] sm:$0xff] %vm3034, %v5541
      %5617 = vst.msk [vmem:[%s170 + $0x58] sm:$0xff] %vm3034, %v5544
      %5618 = vst.msk [vmem:[%s170 + $0x60] sm:$0xff] %vm3034, %v5547
      %5619 = vst.msk [vmem:[%s170 + $0x68] sm:$0xff] %vm3034, %v5550
      %5620 = vst.msk [vmem:[%s170 + $0x70] sm:$0xff] %vm3034, %v5553
      %5621 = vst.msk [vmem:[%s170 + $0x78] sm:$0xff] %vm3034, %v5556
      %5622 = vst.msk [vmem:[%s170 + $0x80] sm:$0xff] %vm3034, %v5559
      %5623 = vst.msk [vmem:[%s170 + $0x88] sm:$0xff] %vm3034, %v5562
      %5624 = vst.msk [vmem:[%s170 + $0x90] sm:$0xff] %vm3034, %v5565
      %5625 = vst.msk [vmem:[%s170 + $0x98] sm:$0xff] %vm3034, %v5568
      %5626 = vst.msk [vmem:[%s170 + $0xa0] sm:$0xff] %vm3034, %v5571
      %5627 = vst.msk [vmem:[%s170 + $0xa8] sm:$0xff] %vm3034, %v5574
      %5628 = vst.msk [vmem:[%s170 + $0xb0] sm:$0xff] %vm3034, %v5577
      %5629 = vst.msk [vmem:[%s170 + $0xb8] sm:$0xff] %vm3034, %v5580
      %5630 = vst.msk [vmem:[%s170 + $0xc0] sm:$0xff] %vm3034, %v5583
      %5631 = vst.msk [vmem:[%s170 + $0xc8] sm:$0xff] %vm3034, %v5586
      %5632 = vst.msk [vmem:[%s170 + $0xd0] sm:$0xff] %vm3034, %v5589
      %5633 = vst.msk [vmem:[%s170 + $0xd8] sm:$0xff] %vm3034, %v5592
      %5634 = vst.msk [vmem:[%s170 + $0xe0] sm:$0xff] %vm3034, %v5595
      %5635 = vst.msk [vmem:[%s170 + $0xe8] sm:$0xff] %vm3034, %v5598
      %5636 = vst.msk [vmem:[%s170 + $0xf0] sm:$0xff] %vm3034, %v5601
      %5637 = vst.msk [vmem:[%s170 + $0xf8] sm:$0xff] %vm3034, %v5604
      %p5638 = scmp.lt.s32.totalorder %s14, 1
      %s5639 = scalar_select %p5638, %s14, 1
      %s5640 = smul.addr %s5639, 32
      %s5641 = smul.addr %s5640, 8
      %s5642 = scalar_lea.vmem %s3, %s5641
      // Predicated region
      $region33: #{aspp_forward.1} parent=31 // pred_check
        %p5643 = pneg %p100
      $region34: #{aspp_forward.1} parent=31 // pred_check_branch
        %5645 = sbr.rel (%p5643) target = $region36
      $region35: #{aspp_forward.1} parent=31 // pred_region
        _
      $region36: #{aspp_forward.1} parent=31 // pred_fallthru
        _
    $region32: #{aspp_forward.1} parent=5 // pred_fallthru
      _
    %p5646 = scmp.le.s32.totalorder 2, %s9
    // Predicated region
    $region37: #{aspp_forward.1} parent=5 // pred_check
      %p5647 = pneg %p5646
    $region38: #{aspp_forward.1} parent=5 // pred_check_branch
      %5649 = sbr.rel (%p5647) target = $region40
    $region39: #{aspp_forward.1} parent=5 // pred_region
      %s5650 = ssub.s32 %s9, 2
      // Predicated region
      $region41: #{aspp_forward.1} parent=39 // pred_check
        %p5651 = pneg %p106
      $region42: #{aspp_forward.1} parent=39 // pred_check_branch
        %5653 = sbr.rel (%p5651) target = $region44
      $region43: #{aspp_forward.1} parent=39 // pred_region
        %p5654 = scmp.lt.s32.totalorder %s15, 1
        %s5655 = scalar_select %p5654, %s15, 1
        %s5656 = smul.addr %s5655, 32
        %s5657 = smul.addr %s5656, 8
        %s5658 = scalar_lea.vmem %s3, %s5657
      $region44: #{aspp_forward.1} parent=39 // pred_fallthru
        _
    $region40: #{aspp_forward.1} parent=5 // pred_fallthru
      _
  $region6: #{aspp_forward.1} parent=0 // loop_footer
    %s13 = sadd.s32 1, %s9
  $region7: #{aspp_forward.1} parent=0 // loop_footer_branch
    %8 = sbr.rel target = $region3
  $region8: #{aspp_forward.1} parent=0 // loop_exit
    _

</llo_original>
